<compile_context>
chip_gen: v7x
topology: tpu7x:2x2x1
jax: 0.10.0
libtpu: 0.0.40
codegen_flags: <defaults>
</compile_context>

<pallas_src>
import functools
import math

import jax
import jax.numpy as jnp
from jax import lax
from jax.experimental import pallas as pl
from jax.experimental.pallas import tpu as pltpu

# ----------------------------------------------------------------------------
# Architecture config (from the PyTorch module): (out_ch, k, pad, stride)
# ----------------------------------------------------------------------------
CORE_CFG = {
    'layer1': [(64, 7, 3, 2)],
    'layer2': [(192, 3, 1, 1)],
    'layer3': [(128, 1, 0, 1), (256, 3, 1, 1), (256, 1, 0, 1), (512, 3, 1, 1)],
    'layer4': [(256, 1, 0, 1), (512, 3, 1, 1)] * 4
              + [(512, 1, 0, 1), (1024, 3, 1, 1)],
    'layer5': [(512, 1, 0, 1), (1024, 3, 1, 1)] * 2
              + [(1024, 3, 1, 1), (1024, 3, 1, 2)]
              + [(1024, 3, 1, 1)] * 2,
}
LAYER_ORDER = ['layer1', 'layer2', 'layer3', 'layer4', 'layer5']

# Conservative VMEM budget: fits scoped VMEM on v5e/v6e and stays well under
# v7x's 64 MiB physical VMEM per TensorCore.
VMEM_LIMIT = 32 * 1024 * 1024


def _round_up(x, m):
    return ((x + m - 1) // m) * m


def _pick_tile(dim, cap, unit):
    """Pick a tile size (multiple of `unit`, <= cap) that adds no padding
    beyond the unavoidable `unit` alignment.  Returns (tile, padded_dim)."""
    dp_min = _round_up(dim, unit)
    if dp_min <= cap:
        return dp_min, dp_min
    t = cap
    while t > unit and _round_up(dim, t) > dp_min:
        t //= 2
    return t, _round_up(dim, t)


# ----------------------------------------------------------------------------
# Pallas kernel 1: conv matmul (bf16 operands, f32 acc) with fused BN stats.
# Outputs: bf16 conv result, per-tile column sums and sums-of-squares (f32).
# ----------------------------------------------------------------------------
def _conv_mm_kernel(a_ref, b_ref, o_ref, sum_ref, sq_ref, acc_ref):
    @pl.when(pl.program_id(2) == 0)
    def _():
        acc_ref[...] = jnp.zeros_like(acc_ref)

    acc_ref[...] += jnp.dot(a_ref[...], b_ref[...],
                            preferred_element_type=jnp.float32)

    @pl.when(pl.program_id(2) == pl.num_programs(2) - 1)
    def _():
        acc = acc_ref[...]
        o_ref[...] = acc.astype(o_ref.dtype)
        s = jnp.sum(acc, axis=0, keepdims=True)
        q = jnp.sum(acc * acc, axis=0, keepdims=True)
        sum_ref[...] = jnp.broadcast_to(s, sum_ref.shape)
        sq_ref[...] = jnp.broadcast_to(q, sq_ref.shape)


def _conv_matmul(a, b):
    """a: (M, K) patches, b: (K, N) weights.  bf16 matmul with f32 accumulate.
    Returns (y_pad bf16 (Mp, Np), col_sum (Np,), col_sqsum (Np,), M, N).
    Padded A rows / B columns are exactly zero (no bias), so the fused column
    sums are correct when divided by the true M."""
    M, K = a.shape
    Kb, N = b.shape
    assert K == Kb
    tm, Mp = _pick_tile(M, 512, 8)
    tk, Kp = _pick_tile(K, 2048, 128)
    tn, Np = _pick_tile(N, 512, 128)
    gm, gn, gk = Mp // tm, Np // tn, Kp // tk

    a_p = jnp.pad(a.astype(jnp.bfloat16), ((0, Mp - M), (0, Kp - K)))
    b_p = jnp.pad(b.astype(jnp.bfloat16), ((0, Kp - K), (0, Np - N)))

    y_pad, sums, sqs = pl.pallas_call(
        _conv_mm_kernel,
        out_shape=(
            jax.ShapeDtypeStruct((Mp, Np), jnp.bfloat16),
            jax.ShapeDtypeStruct((8 * gm, Np), jnp.float32),
            jax.ShapeDtypeStruct((8 * gm, Np), jnp.float32),
        ),
        grid_spec=pltpu.PrefetchScalarGridSpec(
            num_scalar_prefetch=0,
            grid=(gm, gn, gk),
            in_specs=[
                pl.BlockSpec((tm, tk), lambda i, j, k: (i, k)),
                pl.BlockSpec((tk, tn), lambda i, j, k: (k, j)),
            ],
            out_specs=[
                pl.BlockSpec((tm, tn), lambda i, j, k: (i, j)),
                pl.BlockSpec((8, tn), lambda i, j, k: (i, j)),
                pl.BlockSpec((8, tn), lambda i, j, k: (i, j)),
            ],
            scratch_shapes=[pltpu.VMEM((tm, tn), jnp.float32)],
        ),
        compiler_params=pltpu.CompilerParams(
            dimension_semantics=("parallel", "parallel", "arbitrary"),
            vmem_limit_bytes=VMEM_LIMIT),
    )(a_p, b_p)

    col_sum = jnp.sum(sums[0::8], axis=0)   # one valid row per M-tile
    col_sq = jnp.sum(sqs[0::8], axis=0)
    return y_pad, col_sum, col_sq, M, N


# ----------------------------------------------------------------------------
# Pallas kernel 2: FC matmul (bf16 operands, f32 acc) + bias (+ LeakyReLU).
# ----------------------------------------------------------------------------
def _fc_mm_kernel(a_ref, b_ref, bias_ref, o_ref, acc_ref, *, apply_leaky):
    @pl.when(pl.program_id(2) == 0)
    def _():
        acc_ref[...] = jnp.zeros_like(acc_ref)

    acc_ref[...] += jnp.dot(a_ref[...], b_ref[...],
                            preferred_element_type=jnp.float32)

    @pl.when(pl.program_id(2) == pl.num_programs(2) - 1)
    def _():
        y = acc_ref[...] + bias_ref[...]
        if apply_leaky:
            y = jnp.where(y > 0, y, 0.1 * y)
        o_ref[...] = y.astype(o_ref.dtype)


@functools.partial(jax.jit, static_argnames=("apply_leaky",))
def linear_pallas(x, w, b, apply_leaky=False):
    M, K = x.shape
    _, N = w.shape
    tm, Mp = _pick_tile(M, 256, 8)       # batch is tiny -> tm small
    tk, Kp = _pick_tile(K, 2048, 128)    # large K/N tiles: weight streaming
    tn, Np = _pick_tile(N, 1024, 128)
    gm, gn, gk = Mp // tm, Np // tn, Kp // tk

    a_p = jnp.pad(x.astype(jnp.bfloat16), ((0, Mp - M), (0, Kp - K)))
    b_p = jnp.pad(w.astype(jnp.bfloat16), ((0, Kp - K), (0, Np - N)))
    bias_p = jnp.pad(b.astype(jnp.float32), (0, Np - N)).reshape(1, Np)

    out = pl.pallas_call(
        functools.partial(_fc_mm_kernel, apply_leaky=apply_leaky),
        out_shape=jax.ShapeDtypeStruct((Mp, Np), jnp.float32),
        grid_spec=pltpu.PrefetchScalarGridSpec(
            num_scalar_prefetch=0,
            grid=(gm, gn, gk),
            in_specs=[
                pl.BlockSpec((tm, tk), lambda i, j, k: (i, k)),
                pl.BlockSpec((tk, tn), lambda i, j, k: (k, j)),
                pl.BlockSpec((1, tn), lambda i, j, k: (0, j)),
            ],
            out_specs=pl.BlockSpec((tm, tn), lambda i, j, k: (i, j)),
            scratch_shapes=[pltpu.VMEM((tm, tn), jnp.float32)],
        ),
        compiler_params=pltpu.CompilerParams(
            dimension_semantics=("parallel", "parallel", "arbitrary"),
            vmem_limit_bytes=VMEM_LIMIT),
    )(a_p, b_p, bias_p)
    return out[:M, :N]


# ----------------------------------------------------------------------------
# Pallas kernel 3: fused BatchNorm-apply + LeakyReLU(0.1), bf16 in/out.
# ----------------------------------------------------------------------------
def _bn_leaky_kernel(x_ref, scale_ref, shift_ref, o_ref):
    y = x_ref[...].astype(jnp.float32) * scale_ref[...] + shift_ref[...]
    o_ref[...] = jnp.where(y > 0, y, 0.1 * y).astype(o_ref.dtype)


def _bn_leaky_pallas(y_pad, scale, shift):
    Mp, Np = y_pad.shape
    tbm = Mp
    for cand in (2048, 1024, 512, 256, 128, 64, 32, 16, 8):
        if cand <= Mp and Mp % cand == 0:
            tbm = cand
            break
    # Keep the bf16 input tile at/under ~2 MiB so double-buffering fits scoped
    # VMEM on every generation.
    while tbm > 8 and tbm * Np * 2 > (2 << 20) and Mp % (tbm // 2) == 0:
        tbm //= 2
    scale2 = scale.reshape(1, Np).astype(jnp.float32)
    shift2 = shift.reshape(1, Np).astype(jnp.float32)
    return pl.pallas_call(
        _bn_leaky_kernel,
        out_shape=jax.ShapeDtypeStruct((Mp, Np), jnp.bfloat16),
        grid=(Mp // tbm,),
        in_specs=[
            pl.BlockSpec((tbm, Np), lambda i: (i, 0)),
            pl.BlockSpec((1, Np), lambda i: (0, 0)),
            pl.BlockSpec((1, Np), lambda i: (0, 0)),
        ],
        out_specs=pl.BlockSpec((tbm, Np), lambda i: (i, 0)),
        compiler_params=pltpu.CompilerParams(
            dimension_semantics=("parallel",),
            vmem_limit_bytes=VMEM_LIMIT),
    )(y_pad, scale2, shift2)


# ----------------------------------------------------------------------------
# Glue: im2col, ConvBlock (Conv2d + BatchNorm2d + LeakyReLU), MaxPool.
# ----------------------------------------------------------------------------
def _im2col(x, kh, kw, pad, stride):
    """x: (B, H, W, C) -> patches (B*OH*OW, kh*kw*C), plus OH, OW."""
    B, H, W, C = x.shape
    xp = jnp.pad(x, ((0, 0), (pad, pad), (pad, pad), (0, 0)))
    OH = (H + 2 * pad - kh) // stride + 1
    OW = (W + 2 * pad - kw) // stride + 1
    # TODO(synk): avoid materializing the patch matrix (9x/49x activation
    # blow-up) by folding kh*kw into the matmul reduction grid with
    # shifted-window index_maps on the padded NHWC input.
    cols = []
    for i in range(kh):
        for j in range(kw):
            cols.append(xp[:, i:i + stride * OH:stride,
                           j:j + stride * OW:stride, :])
    patches = jnp.stack(cols, axis=3).reshape(B * OH * OW, kh * kw * C)
    return patches, OH, OW


@functools.partial(jax.jit, static_argnames=("kh", "kw", "pad", "stride"))
def conv_bn_leaky(x, w, gamma, beta, *, kh, kw, pad, stride):
    """ConvBlock: Conv2d (bias omitted: exactly cancelled by training-mode BN)
    -> BatchNorm2d with batch statistics -> LeakyReLU(0.1)."""
    B = x.shape[0]
    patches, OH, OW = _im2col(x, kh, kw, pad, stride)
    y_pad, col_sum, col_sq, M, N = _conv_matmul(patches, w)
    Np = y_pad.shape[1]

    mean = col_sum / M
    var = jnp.maximum(col_sq / M - mean * mean, 0.0)     # biased var (PyTorch BN)
    gamma_p = jnp.pad(gamma, (0, Np - N), constant_values=1.0)
    beta_p = jnp.pad(beta, (0, Np - N))
    scale = gamma_p * lax.rsqrt(var + 1e-5)
    shift = beta_p - mean * scale

    z_pad = _bn_leaky_pallas(y_pad, scale, shift)
    return z_pad[:M, :N].reshape(B, OH, OW, N)


def maxpool2(x):
    # TODO(synk): fuse MaxPool2d(2,2) into the BN+LeakyReLU Pallas kernel for
    # the layers followed by pooling (saves one full activation write+read).
    B, H, W, C = x.shape
    return jnp.max(x.reshape(B, H // 2, 2, W // 2, 2, C), axis=(2, 4))


# ----------------------------------------------------------------------------
# Parameter init (deterministic, in-script) and forward pass
# ----------------------------------------------------------------------------
def init_params(key, image_channels=3, image_size=448):
    params = {'convs': []}
    cin = image_channels
    for layer in LAYER_ORDER:
        for (cout, k, pad, stride) in CORE_CFG[layer]:
            key, kw_ = jax.random.split(key)
            fan_in = k * k * cin
            w = jax.random.normal(kw_, (fan_in, cout), jnp.float32) / math.sqrt(fan_in)
            params['convs'].append({
                'w': w,
                'gamma': jnp.ones((cout,), jnp.float32),
                'beta': jnp.zeros((cout,), jnp.float32),
                'k': k, 'pad': pad, 'stride': stride,
            })
            cin = cout
    # The core downsamples by 64x (stride-2 conv, 4 pools, one stride-2 conv
    # in layer5).  The PyTorch module hard-codes Linear(1024*7*7, ...), which
    # is exactly this formula at image_size=448.
    s_out = image_size // 64
    d_in = 1024 * s_out * s_out
    key, k1, k2, k3, k4 = jax.random.split(key, 5)
    params['fc1_w'] = jax.random.normal(k1, (d_in, 4096), jnp.float32) / math.sqrt(d_in)
    params['fc1_b'] = jax.random.normal(k2, (4096,), jnp.float32) * 0.01
    params['fc2_w'] = jax.random.normal(k3, (4096, 7 * 7 * 30), jnp.float32) / math.sqrt(4096)
    params['fc2_b'] = jax.random.normal(k4, (7 * 7 * 30,), jnp.float32) * 0.01
    return params


def yolo_forward(params, image_nchw):
    # layout: image arrives NCHW (PyTorch); kept NHWC + bf16 internally.
    x = jnp.transpose(image_nchw, (0, 2, 3, 1)).astype(jnp.bfloat16)
    idx = 0
    for layer in LAYER_ORDER:
        for _ in CORE_CFG[layer]:
            p = params['convs'][idx]; idx += 1
            x = conv_bn_leaky(x, p['w'], p['gamma'], p['beta'],
                              kh=p['k'], kw=p['k'], pad=p['pad'], stride=p['stride'])
        if layer != 'layer5':
            x = maxpool2(x)
    # Flatten in PyTorch (NCHW) order: transpose back before flattening.
    B = x.shape[0]
    x = jnp.transpose(x, (0, 3, 1, 2)).reshape(B, -1)
    h = linear_pallas(x, params['fc1_w'], params['fc1_b'], apply_leaky=True)
    out = linear_pallas(h, params['fc2_w'], params['fc2_b'], apply_leaky=False)
    return out                                            # (B, 7*7*30)


if __name__ == "__main__":
    key = jax.random.PRNGKey(0)
    key, pkey, xkey = jax.random.split(key, 3)
    # Small test shape: 64x64 is the smallest spatial size that survives the
    # six /2 downsamplings (-> 1x1x1024 before the FC head).  Using 448x448
    # reproduces the module's hard-coded Linear(1024*7*7, ...) sizes.
    H = W = 64
    params = init_params(pkey, image_channels=3, image_size=H)
    image = jax.random.normal(xkey, (2, 3, H, W), jnp.float32)

    out = yolo_forward(params, image)
    out = jax.block_until_ready(out)

    assert out.shape == (2, 7 * 7 * 30), out.shape
    assert bool(jnp.all(jnp.isfinite(out)))
    print("KERNEL_OK")
</pallas_src>

<mosaic_0001>
module attributes {stable_mosaic.version = 11 : i64} {
  func.func @_conv_mm_kernel(%arg0: i32, %arg1: i32, %arg2: i32, %arg3: memref<512x256xbf16, #tpu.memory_space<vmem>>, %arg4: memref<256x128xbf16, #tpu.memory_space<vmem>>, %arg5: memref<512x128xbf16, #tpu.memory_space<vmem>>, %arg6: memref<8x128xf32, #tpu.memory_space<vmem>>, %arg7: memref<8x128xf32, #tpu.memory_space<vmem>>, %arg8: memref<512x128xf32, #tpu.memory_space<vmem>>) attributes {dimension_semantics = [#tpu.dimension_semantics<parallel>, #tpu.dimension_semantics<parallel>, #tpu.dimension_semantics<arbitrary>], iteration_bounds = array<i64: 4, 1, 1>, scalar_prefetch = 0 : i64, scratch_operands = 1 : i64, tpu.core_type = #tpu.core_type<tc>, window_params = [{transform_indices = @transform_0, window_bounds = array<i64: 512, 256>}, {transform_indices = @transform_1, window_bounds = array<i64: 256, 128>}, {transform_indices = @transform_2, window_bounds = array<i64: 512, 128>}, {transform_indices = @transform_3, window_bounds = array<i64: 8, 128>}, {transform_indices = @transform_4, window_bounds = array<i64: 8, 128>}]} {
    %c0_i32 = arith.constant 0 : i32
    %0 = arith.cmpi eq, %arg2, %c0_i32 : i32
    %1 = arith.extui %0 : i1 to i32
    %c0_i32_0 = arith.constant 0 : i32
    %2 = arith.cmpi ne, %1, %c0_i32_0 : i32
    scf.if %2 {
      %cst_10 = arith.constant 0.000000e+00 : f32
      %12 = vector.broadcast %cst_10 : f32 to vector<512x128xf32>
      %c0_11 = arith.constant 0 : index
      %c0_12 = arith.constant 0 : index
      %13 = vector.load %arg8[%c0_11, %c0_12] : memref<512x128xf32, #tpu.memory_space<vmem>>, vector<512x128xf32>
      tpu.vector_store %arg8[%c0_11, %c0_12], %12 {strides = array<i32>} : memref<512x128xf32, #tpu.memory_space<vmem>>, vector<512x128xf32>,
    } else {
    }
    %c0 = arith.constant 0 : index
    %c0_1 = arith.constant 0 : index
    %3 = vector.load %arg8[%c0, %c0_1] : memref<512x128xf32, #tpu.memory_space<vmem>>, vector<512x128xf32>
    %c0_2 = arith.constant 0 : index
    %c0_3 = arith.constant 0 : index
    %4 = vector.load %arg3[%c0_2, %c0_3] : memref<512x256xbf16, #tpu.memory_space<vmem>>, vector<512x256xbf16>
    %c0_4 = arith.constant 0 : index
    %c0_5 = arith.constant 0 : index
    %5 = vector.load %arg4[%c0_4, %c0_5] : memref<256x128xbf16, #tpu.memory_space<vmem>>, vector<256x128xbf16>
    %cst = arith.constant dense<0.000000e+00> : vector<512x128xf32>
    %6 = tpu.matmul %4, %5, %cst {dimension_numbers = #tpu.dot_dimension_numbers<[1], [0], [0], [1], [0, 0, 1, 1], [], []>} : vector<512x256xbf16>, vector<256x128xbf16>, vector<512x128xf32> -> vector<512x128xf32>
    %7 = arith.addf %3, %6 : vector<512x128xf32>
    %c0_6 = arith.constant 0 : index
    %c0_7 = arith.constant 0 : index
    %8 = vector.load %arg8[%c0_6, %c0_7] : memref<512x128xf32, #tpu.memory_space<vmem>>, vector<512x128xf32>
    tpu.vector_store %arg8[%c0_6, %c0_7], %7 {strides = array<i32>} : memref<512x128xf32, #tpu.memory_space<vmem>>, vector<512x128xf32>,
    %c0_i32_8 = arith.constant 0 : i32
    %9 = arith.cmpi eq, %arg2, %c0_i32_8 : i32
    %10 = arith.extui %9 : i1 to i32
    %c0_i32_9 = arith.constant 0 : i32
    %11 = arith.cmpi ne, %10, %c0_i32_9 : i32
    scf.if %11 {
      %c0_10 = arith.constant 0 : index
      %c0_11 = arith.constant 0 : index
      %12 = vector.load %arg8[%c0_10, %c0_11] : memref<512x128xf32, #tpu.memory_space<vmem>>, vector<512x128xf32>
      %13 = arith.truncf %12 : vector<512x128xf32> to vector<512x128xbf16>
      %c0_12 = arith.constant 0 : index
      %c0_13 = arith.constant 0 : index
      %14 = vector.load %arg5[%c0_12, %c0_13] : memref<512x128xbf16, #tpu.memory_space<vmem>>, vector<512x128xbf16>
      tpu.vector_store %arg5[%c0_12, %c0_13], %13 {strides = array<i32>} : memref<512x128xbf16, #tpu.memory_space<vmem>>, vector<512x128xbf16>,
      %cst_14 = arith.constant dense<0.000000e+00> : vector<128xf32>
      %15 = vector.multi_reduction <add>, %12, %cst_14 [0] : vector<512x128xf32> to vector<128xf32>
      %16 = vector.shape_cast %15 : vector<128xf32> to vector<1x128xf32>
      %17 = arith.mulf %12, %12 : vector<512x128xf32>
      %cst_15 = arith.constant dense<0.000000e+00> : vector<128xf32>
      %18 = vector.multi_reduction <add>, %17, %cst_15 [0] : vector<512x128xf32> to vector<128xf32>
      %19 = vector.shape_cast %18 : vector<128xf32> to vector<1x128xf32>
      %20 = vector.shape_cast %16 : vector<1x128xf32> to vector<1x128xf32>
      %21 = vector.broadcast %20 : vector<1x128xf32> to vector<8x128xf32>
      %c0_16 = arith.constant 0 : index
      %c0_17 = arith.constant 0 : index
      %22 = vector.load %arg6[%c0_16, %c0_17] : memref<8x128xf32, #tpu.memory_space<vmem>>, vector<8x128xf32>
      tpu.vector_store %arg6[%c0_16, %c0_17], %21 {strides = array<i32>} : memref<8x128xf32, #tpu.memory_space<vmem>>, vector<8x128xf32>,
      %23 = vector.shape_cast %19 : vector<1x128xf32> to vector<1x128xf32>
      %24 = vector.broadcast %23 : vector<1x128xf32> to vector<8x128xf32>
      %c0_18 = arith.constant 0 : index
      %c0_19 = arith.constant 0 : index
      %25 = vector.load %arg7[%c0_18, %c0_19] : memref<8x128xf32, #tpu.memory_space<vmem>>, vector<8x128xf32>
      tpu.vector_store %arg7[%c0_18, %c0_19], %24 {strides = array<i32>} : memref<8x128xf32, #tpu.memory_space<vmem>>, vector<8x128xf32>,
    } else {
    }
    return
  }
  func.func @transform_0(%arg0: i32, %arg1: i32, %arg2: i32) -> (i32, i32) {
    %c0_i32 = arith.constant 0 : i32
    return %arg0, %arg2 : i32, i32
  }
  func.func @transform_1(%arg0: i32, %arg1: i32, %arg2: i32) -> (i32, i32) {
    %c0_i32 = arith.constant 0 : i32
    return %arg2, %arg1 : i32, i32
  }
  func.func @transform_2(%arg0: i32, %arg1: i32, %arg2: i32) -> (i32, i32) {
    %c0_i32 = arith.constant 0 : i32
    return %arg0, %arg1 : i32, i32
  }
  func.func @transform_3(%arg0: i32, %arg1: i32, %arg2: i32) -> (i32, i32) {
    %c0_i32 = arith.constant 0 : i32
    return %arg0, %arg1 : i32, i32
  }
  func.func @transform_4(%arg0: i32, %arg1: i32, %arg2: i32) -> (i32, i32) {
    %c0_i32 = arith.constant 0 : i32
    return %arg0, %arg1 : i32, i32
  }
}

module attributes {stable_mosaic.version = 11 : i64} {
  func.func @_bn_leaky_kernel(%arg0: i32, %arg1: memref<2048x128xbf16, #tpu.memory_space<vmem>>, %arg2: memref<1x128xf32, #tpu.memory_space<vmem>>, %arg3: memref<1x128xf32, #tpu.memory_space<vmem>>, %arg4: memref<2048x128xbf16, #tpu.memory_space<vmem>>) attributes {dimension_semantics = [#tpu.dimension_semantics<parallel>], iteration_bounds = array<i64: 1>, scalar_prefetch = 0 : i64, scratch_operands = 0 : i64, tpu.core_type = #tpu.core_type<tc>, window_params = [{transform_indices = @transform_0, window_bounds = array<i64: 2048, 128>}, {pipeline_mode = #tpu.pipeline_mode<synchronous>, transform_indices = @transform_1, window_bounds = array<i64: 1, 128>}, {pipeline_mode = #tpu.pipeline_mode<synchronous>, transform_indices = @transform_2, window_bounds = array<i64: 1, 128>}, {transform_indices = @transform_3, window_bounds = array<i64: 2048, 128>}]} {
    %c0 = arith.constant 0 : index
    %c0_0 = arith.constant 0 : index
    %0 = vector.load %arg1[%c0, %c0_0] : memref<2048x128xbf16, #tpu.memory_space<vmem>>, vector<2048x128xbf16>
    %1 = arith.extf %0 : vector<2048x128xbf16> to vector<2048x128xf32>
    %c0_1 = arith.constant 0 : index
    %c0_2 = arith.constant 0 : index
    %2 = vector.load %arg2[%c0_1, %c0_2] : memref<1x128xf32, #tpu.memory_space<vmem>>, vector<1x128xf32>
    %3 = vector.broadcast %2 : vector<1x128xf32> to vector<2048x128xf32>
    %4 = arith.mulf %1, %3 : vector<2048x128xf32>
    %c0_3 = arith.constant 0 : index
    %c0_4 = arith.constant 0 : index
    %5 = vector.load %arg3[%c0_3, %c0_4] : memref<1x128xf32, #tpu.memory_space<vmem>>, vector<1x128xf32>
    %6 = vector.broadcast %5 : vector<1x128xf32> to vector<2048x128xf32>
    %7 = arith.addf %4, %6 : vector<2048x128xf32>
    %cst = arith.constant 0.000000e+00 : f32
    %8 = vector.broadcast %cst : f32 to vector<2048x128xf32>
    %9 = arith.cmpf ogt, %7, %8 : vector<2048x128xf32>
    %cst_5 = arith.constant 1.000000e-01 : f32
    %10 = vector.broadcast %cst_5 : f32 to vector<2048x128xf32>
    %11 = arith.mulf %10, %7 : vector<2048x128xf32>
    %12 = arith.select %9, %7, %11 : vector<2048x128xi1>, vector<2048x128xf32>
    %13 = arith.truncf %12 : vector<2048x128xf32> to vector<2048x128xbf16>
    %c0_6 = arith.constant 0 : index
    %c0_7 = arith.constant 0 : index
    %14 = vector.load %arg4[%c0_6, %c0_7] : memref<2048x128xbf16, #tpu.memory_space<vmem>>, vector<2048x128xbf16>
    tpu.vector_store %arg4[%c0_6, %c0_7], %13 {strides = array<i32>} : memref<2048x128xbf16, #tpu.memory_space<vmem>>, vector<2048x128xbf16>,
    return
  }
  func.func @transform_0(%arg0: i32) -> (i32, i32) {
    %c0_i32 = arith.constant 0 : i32
    %c0_i32_0 = arith.constant 0 : i32
    return %arg0, %c0_i32 : i32, i32
  }
  func.func @transform_1(%arg0: i32) -> (i32, i32) {
    %c0_i32 = arith.constant 0 : i32
    %c0_i32_0 = arith.constant 0 : i32
    %c0_i32_1 = arith.constant 0 : i32
    return %c0_i32, %c0_i32_0 : i32, i32
  }
  func.func @transform_2(%arg0: i32) -> (i32, i32) {
    %c0_i32 = arith.constant 0 : i32
    %c0_i32_0 = arith.constant 0 : i32
    %c0_i32_1 = arith.constant 0 : i32
    return %c0_i32, %c0_i32_0 : i32, i32
  }
  func.func @transform_3(%arg0: i32) -> (i32, i32) {
    %c0_i32 = arith.constant 0 : i32
    %c0_i32_0 = arith.constant 0 : i32
    return %arg0, %c0_i32 : i32, i32
  }
}

</mosaic_0001>

<llo_original>
// kernel: conv_bn_leaky.2
$region0: #{conv_bn_leaky.2}
  #allocation0 [shape = 'u32[]', space=smem, size = 0x4, offset = 0x4, fixed_abs, tag = 'smem constant byte address 0x4 - core index']
  #allocation1 [shape = 'u32[144,128]{1,0:T(1,128)}', space=vmem, size = 0x12000, scoped, tag = 'internal scratch']
  #allocation2 [shape = 'f32[512,128]{1,0:T(8,128)}', space=vmem, size = 0x40000, scoped, tag = 'scratch operand']
  %s0 = inlined_call_operand.vmem [shape: bf16[2048,256], index: 0, kind: input, shape index: {}]
  %s1 = inlined_call_operand.vmem [shape: bf16[256,128], index: 1, kind: input, shape index: {}]
  %s2 = inlined_call_operand.vmem [shape: bf16[2048,128], index: 2, kind: output, shape index: {0}]
  %s3 = inlined_call_operand.vmem [shape: f32[32,128], index: 3, kind: output, shape index: {1}]
  %s4 = inlined_call_operand.vmem [shape: f32[32,128], index: 4, kind: output, shape index: {2}]
  %5 = xla_tuple %s2, %s3, %s4
  %s6 = sld [smem:[#allocation0]]
  $region65: #{conv_bn_leaky.2} parent=0
    _
  %s8 = ssub.s32 1, %s6
  %s9 = scalar_select 0, %s8, %s6
  loop: start=0, step=1, limit=6
  $region2: #{conv_bn_leaky.2} parent=0 // loop_pre_header
    _
  $region3: #{conv_bn_leaky.2} parent=0 // loop_header
    %s11 = sphi 0, %s15
    %p12 = scmp.ge.s32.totalorder %s11, 6
    %s18 = sphi 0, %s37
    %s19 = sphi 0, %s33
    %s20 = sphi 0, %s29
    %s21 = sphi 0, %s18
    %s22 = sphi 0, %s19
    %s23 = sphi 0, %s20
    %s24 = sphi 0, %s21
    %s25 = sphi 0, %s22
    %s26 = sphi 0, %s23
    %s42 = sphi 0, %s44
    %s45 = sphi 0, %s42
    %s46 = sphi 0, %s45
    %s62 = sphi 0, %s46
    %s70 = sphi 0, %s72
    %s73 = sphi 0, %s70
    %s74 = sphi 0, %s73
    %s90 = sphi 0, %s74
    %s98 = sphi 0, %s100
    %s101 = sphi 0, %s98
    %s102 = sphi 0, %s101
    %s118 = sphi 0, %s102
    %s126 = sphi 0, %s128
    %s129 = sphi 0, %s126
    %s130 = sphi 0, %s129
    %s146 = sphi 0, %s130
    %s154 = sphi 0, %s156
    %s157 = sphi 0, %s154
    %s158 = sphi 0, %s157
    %s174 = sphi 0, %s158
  $region4: #{conv_bn_leaky.2} parent=0 // loop_header_branch
    %14 = sbr.rel (%p12) target = $region8
  $region5: #{conv_bn_leaky.2} parent=0 // loop_body
    %s16 = ssub.s32 %s11, 1
    %s17 = ssub.s32 %s11, 2
    %s27 = sadd.s32 1, %s20
    %p28 = scmp.ge.s32.totalorder %s27, 1
    %s29 = scalar_select %p28, 0, %s27
    %s30 = sadd.s32 1, %s19
    %s31 = scalar_select %p28, %s30, %s19
    %p32 = scmp.ge.s32.totalorder %s31, 1
    %s33 = scalar_select %p32, 0, %s31
    %s34 = sadd.s32 1, %s18
    %s35 = scalar_select %p32, %s34, %s18
    %p36 = scmp.ge.s32.totalorder %s35, 4
    %s37 = scalar_select %p36, 0, %s35
    %s38 = ssub.s32 %s18, %s37
    %s39 = ssub.s32 %s20, %s29
    %s40 = sor.u32 %s38, %s39
    %p41 = scmp.eq.s32.totalorder %s40, 0
    %s43 = sadd.s32 %s42, 1
    %s44 = scalar_select %p41, %s42, %s43
    %p47 = pneg %p41
    %p48 = scmp.eq.s32.totalorder %s11, 3
    %p49 = por %p47, %p48
    %p50 = scmp.ne.s32.totalorder %s42, %s45
    %p51 = scmp.eq.s32.totalorder %s11, 0
    %p52 = por %p50, %p51
    %p53 = scmp.ne.s32.totalorder %s42, %s45
    %p54 = scmp.eq.s32.totalorder %s16, 3
    %p55 = por %p53, %p54
    %p56 = scmp.ne.s32.totalorder %s45, %s46
    %p57 = scmp.eq.s32.totalorder %s16, 0
    %p58 = por %p56, %p57
    %p59 = scmp.ne.s32.totalorder %s45, %s46
    %p60 = scmp.eq.s32.totalorder %s17, 3
    %p61 = por %p59, %p60
    %p63 = scmp.ne.s32.totalorder %s46, %s62
    %p64 = scmp.eq.s32.totalorder %s17, 0
    %p65 = por %p63, %p64
    %s66 = ssub.s32 %s20, %s29
    %s67 = ssub.s32 %s19, %s33
    %s68 = sor.u32 %s66, %s67
    %p69 = scmp.eq.s32.totalorder %s68, 0
    %s71 = sadd.s32 %s70, 1
    %s72 = scalar_select %p69, %s70, %s71
    %p75 = pneg %p69
    %p76 = scmp.eq.s32.totalorder %s11, 3
    %p77 = por %p75, %p76
    %p78 = scmp.ne.s32.totalorder %s70, %s73
    %p79 = scmp.eq.s32.totalorder %s11, 0
    %p80 = por %p78, %p79
    %p81 = scmp.ne.s32.totalorder %s70, %s73
    %p82 = scmp.eq.s32.totalorder %s16, 3
    %p83 = por %p81, %p82
    %p84 = scmp.ne.s32.totalorder %s73, %s74
    %p85 = scmp.eq.s32.totalorder %s16, 0
    %p86 = por %p84, %p85
    %p87 = scmp.ne.s32.totalorder %s73, %s74
    %p88 = scmp.eq.s32.totalorder %s17, 3
    %p89 = por %p87, %p88
    %p91 = scmp.ne.s32.totalorder %s74, %s90
    %p92 = scmp.eq.s32.totalorder %s17, 0
    %p93 = por %p91, %p92
    %s94 = ssub.s32 %s18, %s37
    %s95 = ssub.s32 %s19, %s33
    %s96 = sor.u32 %s94, %s95
    %p97 = scmp.eq.s32.totalorder %s96, 0
    %s99 = sadd.s32 %s98, 1
    %s100 = scalar_select %p97, %s98, %s99
    %p103 = pneg %p97
    %p104 = scmp.eq.s32.totalorder %s11, 3
    %p105 = por %p103, %p104
    %p106 = scmp.ne.s32.totalorder %s98, %s101
    %p107 = scmp.eq.s32.totalorder %s11, 0
    %p108 = por %p106, %p107
    %p109 = scmp.ne.s32.totalorder %s98, %s101
    %p110 = scmp.eq.s32.totalorder %s16, 3
    %p111 = por %p109, %p110
    %p112 = scmp.ne.s32.totalorder %s101, %s102
    %p113 = scmp.eq.s32.totalorder %s16, 0
    %p114 = por %p112, %p113
    %p115 = scmp.ne.s32.totalorder %s101, %s102
    %p116 = scmp.eq.s32.totalorder %s17, 3
    %p117 = por %p115, %p116
    %p119 = scmp.ne.s32.totalorder %s102, %s118
    %p120 = scmp.eq.s32.totalorder %s17, 0
    %p121 = por %p119, %p120
    %s122 = ssub.s32 %s18, %s37
    %s123 = ssub.s32 %s19, %s33
    %s124 = sor.u32 %s122, %s123
    %p125 = scmp.eq.s32.totalorder %s124, 0
    %s127 = sadd.s32 %s126, 1
    %s128 = scalar_select %p125, %s126, %s127
    %p131 = pneg %p125
    %p132 = scmp.eq.s32.totalorder %s11, 3
    %p133 = por %p131, %p132
    %p134 = scmp.ne.s32.totalorder %s126, %s129
    %p135 = scmp.eq.s32.totalorder %s11, 0
    %p136 = por %p134, %p135
    %p137 = scmp.ne.s32.totalorder %s126, %s129
    %p138 = scmp.eq.s32.totalorder %s16, 3
    %p139 = por %p137, %p138
    %p140 = scmp.ne.s32.totalorder %s129, %s130
    %p141 = scmp.eq.s32.totalorder %s16, 0
    %p142 = por %p140, %p141
    %p143 = scmp.ne.s32.totalorder %s129, %s130
    %p144 = scmp.eq.s32.totalorder %s17, 3
    %p145 = por %p143, %p144
    %p147 = scmp.ne.s32.totalorder %s130, %s146
    %p148 = scmp.eq.s32.totalorder %s17, 0
    %p149 = por %p147, %p148
    %s150 = ssub.s32 %s18, %s37
    %s151 = ssub.s32 %s19, %s33
    %s152 = sor.u32 %s150, %s151
    %p153 = scmp.eq.s32.totalorder %s152, 0
    %s155 = sadd.s32 %s154, 1
    %s156 = scalar_select %p153, %s154, %s155
    %p159 = pneg %p153
    %p160 = scmp.eq.s32.totalorder %s11, 3
    %p161 = por %p159, %p160
    %p162 = scmp.ne.s32.totalorder %s154, %s157
    %p163 = scmp.eq.s32.totalorder %s11, 0
    %p164 = por %p162, %p163
    %p165 = scmp.ne.s32.totalorder %s154, %s157
    %p166 = scmp.eq.s32.totalorder %s16, 3
    %p167 = por %p165, %p166
    %p168 = scmp.ne.s32.totalorder %s157, %s158
    %p169 = scmp.eq.s32.totalorder %s16, 0
    %p170 = por %p168, %p169
    %p171 = scmp.ne.s32.totalorder %s157, %s158
    %p172 = scmp.eq.s32.totalorder %s17, 3
    %p173 = por %p171, %p172
    %p175 = scmp.ne.s32.totalorder %s158, %s174
    %p176 = scmp.eq.s32.totalorder %s17, 0
    %p177 = por %p175, %p176
    %p178 = scmp.le.s32.totalorder 1, %s11
    %p179 = scmp.lt.s32.totalorder %s11, 5
    %p180 = pnand %p178, %p179
    %p181 = pneg %p180
    // Predicated region
    $region9: #{conv_bn_leaky.2} parent=5 // pred_check
      _
    $region10: #{conv_bn_leaky.2} parent=5 // pred_check_branch
      %183 = sbr.rel (%p180) target = $region12
    $region11: #{conv_bn_leaky.2} parent=5 // pred_region
      %s184 = ssub.s32 %s11, 1
      // Predicated region
      $region13: #{conv_bn_leaky.2} parent=11 // pred_check
        %p185 = pneg %p86
      $region14: #{conv_bn_leaky.2} parent=11 // pred_check_branch
        %187 = sbr.rel (%p185) target = $region16
      $region15: #{conv_bn_leaky.2} parent=11 // pred_region
        %s188 = smul.u32 32, %s23
        %p189 = scmp.lt.s32.totalorder %s188, 31
        %s190 = scalar_select %p189, %s188, 31
        %p191 = scmp.lt.s32.totalorder %s22, 0
        %s192 = scalar_select %p191, %s22, 0
        %s193 = sadd.s32 %s192, %s190
        %s194 = smul.addr %s193, 4
        %s195 = scalar_lea.vmem %s1, %s194
        %s196 = smul.u32 32, %s23
      $region16: #{conv_bn_leaky.2} parent=11 // pred_fallthru
        _
    $region12: #{conv_bn_leaky.2} parent=5 // pred_fallthru
      _
    %p197 = scmp.lt.s32.totalorder %s11, 4
    // Predicated region
    $region17: #{conv_bn_leaky.2} parent=5 // pred_check
      %p198 = pneg %p197
    $region18: #{conv_bn_leaky.2} parent=5 // pred_check_branch
      %200 = sbr.rel (%p198) target = $region20
    $region19: #{conv_bn_leaky.2} parent=5 // pred_region
      // Predicated region
      $region21: #{conv_bn_leaky.2} parent=19 // pred_check
        %p201 = pneg %p52
      $region22: #{conv_bn_leaky.2} parent=19 // pred_check_branch
        %203 = sbr.rel (%p201) target = $region24
      $region23: #{conv_bn_leaky.2} parent=19 // pred_region
        %s204 = smul.u32 64, %s18
        %s205 = smul.u32 2, %s20
        %p206 = scmp.lt.s32.totalorder %s204, 255
        %s207 = scalar_select %p206, %s204, 255
        %p208 = scmp.lt.s32.totalorder %s205, 1
        %s209 = scalar_select %p208, %s205, 1
        %s210 = smul.addr %s207, 2
        %s211 = sadd.s32 %s209, %s210
        %s212 = smul.addr %s211, 4
        %s213 = scalar_lea.vmem %s0, %s212
        %s214 = smul.u32 64, %s18
        %s215 = smul.u32 2, %s20
      $region24: #{conv_bn_leaky.2} parent=19 // pred_fallthru
        _
    $region20: #{conv_bn_leaky.2} parent=5 // pred_fallthru
      _
    %p216 = scmp.le.s32.totalorder 1, %s11
    %p217 = scmp.lt.s32.totalorder %s11, 5
    %p218 = pnand %p216, %p217
    %p219 = pneg %p218
    // Predicated region
    $region25: #{conv_bn_leaky.2} parent=5 // pred_check
      _
    $region26: #{conv_bn_leaky.2} parent=5 // pred_check_branch
      %221 = sbr.rel (%p218) target = $region28
    $region27: #{conv_bn_leaky.2} parent=5 // pred_region
      %s222 = ssub.s32 %s11, 1
      %s223 = smul.u32 64, %s21
      %s224 = smul.u32 2, %s23
      %p225 = scmp.lt.s32.totalorder %s223, 255
      %s226 = scalar_select %p225, %s223, 255
      %p227 = scmp.lt.s32.totalorder %s224, 1
      %s228 = scalar_select %p227, %s224, 1
      %s229 = smul.addr %s226, 2
      %s230 = sadd.s32 %s228, %s229
      %s231 = smul.addr %s230, 4
      %s232 = scalar_lea.vmem %s0, %s231
      %p233 = pneg %p58
      %p234 = pneg %p55
      %s235 = smul.u32 32, %s23
      %p236 = scmp.lt.s32.totalorder %s235, 31
      %s237 = scalar_select %p236, %s235, 31
      %p238 = scmp.lt.s32.totalorder %s22, 0
      %s239 = scalar_select %p238, %s22, 0
      %s240 = sadd.s32 %s239, %s237
      %s241 = smul.addr %s240, 4
      %s242 = scalar_lea.vmem %s1, %s241
      %p243 = pneg %p86
      %p244 = pneg %p83
      %p245 = pneg %p114
      %p246 = pneg %p111
      %s247 = smul.u32 64, %s21
      %p248 = scmp.lt.s32.totalorder %s247, 255
      %s249 = scalar_select %p248, %s247, 255
      %p250 = scmp.lt.s32.totalorder %s22, 0
      %s251 = scalar_select %p250, %s22, 0
      %s252 = sadd.s32 %s251, %s249
      %s253 = smul.addr %s252, 4
      %s254 = scalar_lea.vmem %s2, %s253
      %p255 = pneg %p142
      %p256 = pneg %p139
      %p257 = scmp.lt.s32.totalorder %s21, 3
      %s258 = scalar_select %p257, %s21, 3
      %p259 = scmp.lt.s32.totalorder %s22, 0
      %s260 = scalar_select %p259, %s22, 0
      %s261 = sadd.s32 %s260, %s258
      %s262 = smul.addr %s261, 8
      %s263 = scalar_lea.vmem %s3, %s262
      %p264 = pneg %p170
      %p265 = pneg %p167
      %p266 = scmp.lt.s32.totalorder %s21, 3
      %s267 = scalar_select %p266, %s21, 3
      %p268 = scmp.lt.s32.totalorder %s22, 0
      %s269 = scalar_select %p268, %s22, 0
      %s270 = sadd.s32 %s269, %s267
      %s271 = smul.addr %s270, 8
      %s272 = scalar_lea.vmem %s4, %s271
      %s273 = smul.u32 64, %s21
      %s274 = smul.u32 2, %s23
      %p275 = scmp.lt.s32.totalorder %s273, 255
      %s276 = scalar_select %p275, %s273, 255
      %p277 = scmp.lt.s32.totalorder %s274, 1
      %s278 = scalar_select %p277, %s274, 1
      %s279 = smul.addr %s276, 2
      %s280 = sadd.s32 %s278, %s279
      %s281 = smul.addr %s280, 4
      %s282 = scalar_lea.vmem %s0, %s281
      %s283 = smul.u32 64, %s21
      %s284 = smul.u32 2, %s23
      %s285 = smul.u32 32, %s23
      %p286 = scmp.lt.s32.totalorder %s285, 31
      %s287 = scalar_select %p286, %s285, 31
      %p288 = scmp.lt.s32.totalorder %s22, 0
      %s289 = scalar_select %p288, %s22, 0
      %s290 = sadd.s32 %s289, %s287
      %s291 = smul.addr %s290, 4
      %s292 = scalar_lea.vmem %s1, %s291
      %s293 = smul.u32 32, %s23
      %s294 = smul.u32 64, %s21
      %p295 = scmp.lt.s32.totalorder %s294, 255
      %s296 = scalar_select %p295, %s294, 255
      %p297 = scmp.lt.s32.totalorder %s22, 0
      %s298 = scalar_select %p297, %s22, 0
      %s299 = sadd.s32 %s298, %s296
      %s300 = smul.addr %s299, 4
      %s301 = scalar_lea.vmem %s2, %s300
      %s302 = smul.u32 64, %s21
      %p303 = scmp.lt.s32.totalorder %s21, 3
      %s304 = scalar_select %p303, %s21, 3
      %p305 = scmp.lt.s32.totalorder %s22, 0
      %s306 = scalar_select %p305, %s22, 0
      %s307 = sadd.s32 %s306, %s304
      %s308 = smul.addr %s307, 8
      %s309 = scalar_lea.vmem %s3, %s308
      %p310 = scmp.lt.s32.totalorder %s21, 3
      %s311 = scalar_select %p310, %s21, 3
      %p312 = scmp.lt.s32.totalorder %s22, 0
      %s313 = scalar_select %p312, %s22, 0
      %s314 = sadd.s32 %s313, %s311
      %s315 = smul.addr %s314, 8
      %s316 = scalar_lea.vmem %s4, %s315
      %p318 = scmp.eq.s32.totalorder %s23, 0
      // Predicated region
      $region29: #{conv_bn_leaky.2} parent=27 // pred_check
        %p319 = pneg %p318
      $region30: #{conv_bn_leaky.2} parent=27 // pred_check_branch
        %321 = sbr.rel (%p319) target = $region32
      $region31: #{conv_bn_leaky.2} parent=27 // pred_region
        %322 = vst [vmem:[#allocation2] sm:$0xff] 0.0
        %323 = vst [vmem:[#allocation2 + $0x8] sm:$0xff] 0.0
        %324 = vst [vmem:[#allocation2 + $0x10] sm:$0xff] 0.0
        %325 = vst [vmem:[#allocation2 + $0x18] sm:$0xff] 0.0
        %326 = vst [vmem:[#allocation2 + $0x20] sm:$0xff] 0.0
        %327 = vst [vmem:[#allocation2 + $0x28] sm:$0xff] 0.0
        %328 = vst [vmem:[#allocation2 + $0x30] sm:$0xff] 0.0
        %329 = vst [vmem:[#allocation2 + $0x38] sm:$0xff] 0.0
        %330 = vst [vmem:[#allocation2 + $0x40] sm:$0xff] 0.0
        %331 = vst [vmem:[#allocation2 + $0x48] sm:$0xff] 0.0
        %332 = vst [vmem:[#allocation2 + $0x50] sm:$0xff] 0.0
        %333 = vst [vmem:[#allocation2 + $0x58] sm:$0xff] 0.0
        %334 = vst [vmem:[#allocation2 + $0x60] sm:$0xff] 0.0
        %335 = vst [vmem:[#allocation2 + $0x68] sm:$0xff] 0.0
        %336 = vst [vmem:[#allocation2 + $0x70] sm:$0xff] 0.0
        %337 = vst [vmem:[#allocation2 + $0x78] sm:$0xff] 0.0
        %338 = vst [vmem:[#allocation2 + $0x80] sm:$0xff] 0.0
        %339 = vst [vmem:[#allocation2 + $0x88] sm:$0xff] 0.0
        %340 = vst [vmem:[#allocation2 + $0x90] sm:$0xff] 0.0
        %341 = vst [vmem:[#allocation2 + $0x98] sm:$0xff] 0.0
        %342 = vst [vmem:[#allocation2 + $0xa0] sm:$0xff] 0.0
        %343 = vst [vmem:[#allocation2 + $0xa8] sm:$0xff] 0.0
        %344 = vst [vmem:[#allocation2 + $0xb0] sm:$0xff] 0.0
        %345 = vst [vmem:[#allocation2 + $0xb8] sm:$0xff] 0.0
        %346 = vst [vmem:[#allocation2 + $0xc0] sm:$0xff] 0.0
        %347 = vst [vmem:[#allocation2 + $0xc8] sm:$0xff] 0.0
        %348 = vst [vmem:[#allocation2 + $0xd0] sm:$0xff] 0.0
        %349 = vst [vmem:[#allocation2 + $0xd8] sm:$0xff] 0.0
        %350 = vst [vmem:[#allocation2 + $0xe0] sm:$0xff] 0.0
        %351 = vst [vmem:[#allocation2 + $0xe8] sm:$0xff] 0.0
        %352 = vst [vmem:[#allocation2 + $0xf0] sm:$0xff] 0.0
        %353 = vst [vmem:[#allocation2 + $0xf8] sm:$0xff] 0.0
        %354 = vst [vmem:[#allocation2 + $0x100] sm:$0xff] 0.0
        %355 = vst [vmem:[#allocation2 + $0x108] sm:$0xff] 0.0
        %356 = vst [vmem:[#allocation2 + $0x110] sm:$0xff] 0.0
        %357 = vst [vmem:[#allocation2 + $0x118] sm:$0xff] 0.0
        %358 = vst [vmem:[#allocation2 + $0x120] sm:$0xff] 0.0
        %359 = vst [vmem:[#allocation2 + $0x128] sm:$0xff] 0.0
        %360 = vst [vmem:[#allocation2 + $0x130] sm:$0xff] 0.0
        %361 = vst [vmem:[#allocation2 + $0x138] sm:$0xff] 0.0
        %362 = vst [vmem:[#allocation2 + $0x140] sm:$0xff] 0.0
        %363 = vst [vmem:[#allocation2 + $0x148] sm:$0xff] 0.0
        %364 = vst [vmem:[#allocation2 + $0x150] sm:$0xff] 0.0
        %365 = vst [vmem:[#allocation2 + $0x158] sm:$0xff] 0.0
        %366 = vst [vmem:[#allocation2 + $0x160] sm:$0xff] 0.0
        %367 = vst [vmem:[#allocation2 + $0x168] sm:$0xff] 0.0
        %368 = vst [vmem:[#allocation2 + $0x170] sm:$0xff] 0.0
        %369 = vst [vmem:[#allocation2 + $0x178] sm:$0xff] 0.0
        %370 = vst [vmem:[#allocation2 + $0x180] sm:$0xff] 0.0
        %371 = vst [vmem:[#allocation2 + $0x188] sm:$0xff] 0.0
        %372 = vst [vmem:[#allocation2 + $0x190] sm:$0xff] 0.0
        %373 = vst [vmem:[#allocation2 + $0x198] sm:$0xff] 0.0
        %374 = vst [vmem:[#allocation2 + $0x1a0] sm:$0xff] 0.0
        %375 = vst [vmem:[#allocation2 + $0x1a8] sm:$0xff] 0.0
        %376 = vst [vmem:[#allocation2 + $0x1b0] sm:$0xff] 0.0
        %377 = vst [vmem:[#allocation2 + $0x1b8] sm:$0xff] 0.0
        %378 = vst [vmem:[#allocation2 + $0x1c0] sm:$0xff] 0.0
        %379 = vst [vmem:[#allocation2 + $0x1c8] sm:$0xff] 0.0
        %380 = vst [vmem:[#allocation2 + $0x1d0] sm:$0xff] 0.0
        %381 = vst [vmem:[#allocation2 + $0x1d8] sm:$0xff] 0.0
        %382 = vst [vmem:[#allocation2 + $0x1e0] sm:$0xff] 0.0
        %383 = vst [vmem:[#allocation2 + $0x1e8] sm:$0xff] 0.0
        %384 = vst [vmem:[#allocation2 + $0x1f0] sm:$0xff] 0.0
        %385 = vst [vmem:[#allocation2 + $0x1f8] sm:$0xff] 0.0
      $region32: #{conv_bn_leaky.2} parent=27 // pred_fallthru
        _
      %v386 = vld [vmem:[#allocation2] sm:$0xff]
      %v387 = vld [vmem:[#allocation2 + $0x8] sm:$0xff]
      %v388 = vld [vmem:[#allocation2 + $0x10] sm:$0xff]
      %v389 = vld [vmem:[#allocation2 + $0x18] sm:$0xff]
      %v390 = vld [vmem:[#allocation2 + $0x20] sm:$0xff]
      %v391 = vld [vmem:[#allocation2 + $0x28] sm:$0xff]
      %v392 = vld [vmem:[#allocation2 + $0x30] sm:$0xff]
      %v393 = vld [vmem:[#allocation2 + $0x38] sm:$0xff]
      %v394 = vld [vmem:[#allocation2 + $0x40] sm:$0xff]
      %v395 = vld [vmem:[#allocation2 + $0x48] sm:$0xff]
      %v396 = vld [vmem:[#allocation2 + $0x50] sm:$0xff]
      %v397 = vld [vmem:[#allocation2 + $0x58] sm:$0xff]
      %v398 = vld [vmem:[#allocation2 + $0x60] sm:$0xff]
      %v399 = vld [vmem:[#allocation2 + $0x68] sm:$0xff]
      %v400 = vld [vmem:[#allocation2 + $0x70] sm:$0xff]
      %v401 = vld [vmem:[#allocation2 + $0x78] sm:$0xff]
      %v402 = vld [vmem:[#allocation2 + $0x80] sm:$0xff]
      %v403 = vld [vmem:[#allocation2 + $0x88] sm:$0xff]
      %v404 = vld [vmem:[#allocation2 + $0x90] sm:$0xff]
      %v405 = vld [vmem:[#allocation2 + $0x98] sm:$0xff]
      %v406 = vld [vmem:[#allocation2 + $0xa0] sm:$0xff]
      %v407 = vld [vmem:[#allocation2 + $0xa8] sm:$0xff]
      %v408 = vld [vmem:[#allocation2 + $0xb0] sm:$0xff]
      %v409 = vld [vmem:[#allocation2 + $0xb8] sm:$0xff]
      %v410 = vld [vmem:[#allocation2 + $0xc0] sm:$0xff]
      %v411 = vld [vmem:[#allocation2 + $0xc8] sm:$0xff]
      %v412 = vld [vmem:[#allocation2 + $0xd0] sm:$0xff]
      %v413 = vld [vmem:[#allocation2 + $0xd8] sm:$0xff]
      %v414 = vld [vmem:[#allocation2 + $0xe0] sm:$0xff]
      %v415 = vld [vmem:[#allocation2 + $0xe8] sm:$0xff]
      %v416 = vld [vmem:[#allocation2 + $0xf0] sm:$0xff]
      %v417 = vld [vmem:[#allocation2 + $0xf8] sm:$0xff]
      %v418 = vld [vmem:[#allocation2 + $0x100] sm:$0xff]
      %v419 = vld [vmem:[#allocation2 + $0x108] sm:$0xff]
      %v420 = vld [vmem:[#allocation2 + $0x110] sm:$0xff]
      %v421 = vld [vmem:[#allocation2 + $0x118] sm:$0xff]
      %v422 = vld [vmem:[#allocation2 + $0x120] sm:$0xff]
      %v423 = vld [vmem:[#allocation2 + $0x128] sm:$0xff]
      %v424 = vld [vmem:[#allocation2 + $0x130] sm:$0xff]
      %v425 = vld [vmem:[#allocation2 + $0x138] sm:$0xff]
      %v426 = vld [vmem:[#allocation2 + $0x140] sm:$0xff]
      %v427 = vld [vmem:[#allocation2 + $0x148] sm:$0xff]
      %v428 = vld [vmem:[#allocation2 + $0x150] sm:$0xff]
      %v429 = vld [vmem:[#allocation2 + $0x158] sm:$0xff]
      %v430 = vld [vmem:[#allocation2 + $0x160] sm:$0xff]
      %v431 = vld [vmem:[#allocation2 + $0x168] sm:$0xff]
      %v432 = vld [vmem:[#allocation2 + $0x170] sm:$0xff]
      %v433 = vld [vmem:[#allocation2 + $0x178] sm:$0xff]
      %v434 = vld [vmem:[#allocation2 + $0x180] sm:$0xff]
      %v435 = vld [vmem:[#allocation2 + $0x188] sm:$0xff]
      %v436 = vld [vmem:[#allocation2 + $0x190] sm:$0xff]
      %v437 = vld [vmem:[#allocation2 + $0x198] sm:$0xff]
      %v438 = vld [vmem:[#allocation2 + $0x1a0] sm:$0xff]
      %v439 = vld [vmem:[#allocation2 + $0x1a8] sm:$0xff]
      %v440 = vld [vmem:[#allocation2 + $0x1b0] sm:$0xff]
      %v441 = vld [vmem:[#allocation2 + $0x1b8] sm:$0xff]
      %v442 = vld [vmem:[#allocation2 + $0x1c0] sm:$0xff]
      %v443 = vld [vmem:[#allocation2 + $0x1c8] sm:$0xff]
      %v444 = vld [vmem:[#allocation2 + $0x1d0] sm:$0xff]
      %v445 = vld [vmem:[#allocation2 + $0x1d8] sm:$0xff]
      %v446 = vld [vmem:[#allocation2 + $0x1e0] sm:$0xff]
      %v447 = vld [vmem:[#allocation2 + $0x1e8] sm:$0xff]
      %v448 = vld [vmem:[#allocation2 + $0x1f0] sm:$0xff]
      %v449 = vld [vmem:[#allocation2 + $0x1f8] sm:$0xff]
      %v450 = vld [vmem:[%s282] sm:$0xff]
      %v451 = vld [vmem:[%s282 + $0x8] sm:$0xff]
      %v452 = vld [vmem:[%s282 + $0x10] sm:$0xff]
      %v453 = vld [vmem:[%s282 + $0x18] sm:$0xff]
      %v454 = vld [vmem:[%s282 + $0x20] sm:$0xff]
      %v455 = vld [vmem:[%s282 + $0x28] sm:$0xff]
      %v456 = vld [vmem:[%s282 + $0x30] sm:$0xff]
      %v457 = vld [vmem:[%s282 + $0x38] sm:$0xff]
      %v458 = vld [vmem:[%s282 + $0x40] sm:$0xff]
      %v459 = vld [vmem:[%s282 + $0x48] sm:$0xff]
      %v460 = vld [vmem:[%s282 + $0x50] sm:$0xff]
      %v461 = vld [vmem:[%s282 + $0x58] sm:$0xff]
      %v462 = vld [vmem:[%s282 + $0x60] sm:$0xff]
      %v463 = vld [vmem:[%s282 + $0x68] sm:$0xff]
      %v464 = vld [vmem:[%s282 + $0x70] sm:$0xff]
      %v465 = vld [vmem:[%s282 + $0x78] sm:$0xff]
      %v466 = vld [vmem:[%s282 + $0x80] sm:$0xff]
      %v467 = vld [vmem:[%s282 + $0x88] sm:$0xff]
      %v468 = vld [vmem:[%s282 + $0x90] sm:$0xff]
      %v469 = vld [vmem:[%s282 + $0x98] sm:$0xff]
      %v470 = vld [vmem:[%s282 + $0xa0] sm:$0xff]
      %v471 = vld [vmem:[%s282 + $0xa8] sm:$0xff]
      %v472 = vld [vmem:[%s282 + $0xb0] sm:$0xff]
      %v473 = vld [vmem:[%s282 + $0xb8] sm:$0xff]
      %v474 = vld [vmem:[%s282 + $0xc0] sm:$0xff]
      %v475 = vld [vmem:[%s282 + $0xc8] sm:$0xff]
      %v476 = vld [vmem:[%s282 + $0xd0] sm:$0xff]
      %v477 = vld [vmem:[%s282 + $0xd8] sm:$0xff]
      %v478 = vld [vmem:[%s282 + $0xe0] sm:$0xff]
      %v479 = vld [vmem:[%s282 + $0xe8] sm:$0xff]
      %v480 = vld [vmem:[%s282 + $0xf0] sm:$0xff]
      %v481 = vld [vmem:[%s282 + $0xf8] sm:$0xff]
      %v482 = vld [vmem:[%s282 + $0x100] sm:$0xff]
      %v483 = vld [vmem:[%s282 + $0x108] sm:$0xff]
      %v484 = vld [vmem:[%s282 + $0x110] sm:$0xff]
      %v485 = vld [vmem:[%s282 + $0x118] sm:$0xff]
      %v486 = vld [vmem:[%s282 + $0x120] sm:$0xff]
      %v487 = vld [vmem:[%s282 + $0x128] sm:$0xff]
      %v488 = vld [vmem:[%s282 + $0x130] sm:$0xff]
      %v489 = vld [vmem:[%s282 + $0x138] sm:$0xff]
      %v490 = vld [vmem:[%s282 + $0x140] sm:$0xff]
      %v491 = vld [vmem:[%s282 + $0x148] sm:$0xff]
      %v492 = vld [vmem:[%s282 + $0x150] sm:$0xff]
      %v493 = vld [vmem:[%s282 + $0x158] sm:$0xff]
      %v494 = vld [vmem:[%s282 + $0x160] sm:$0xff]
      %v495 = vld [vmem:[%s282 + $0x168] sm:$0xff]
      %v496 = vld [vmem:[%s282 + $0x170] sm:$0xff]
      %v497 = vld [vmem:[%s282 + $0x178] sm:$0xff]
      %v498 = vld [vmem:[%s282 + $0x180] sm:$0xff]
      %v499 = vld [vmem:[%s282 + $0x188] sm:$0xff]
      %v500 = vld [vmem:[%s282 + $0x190] sm:$0xff]
      %v501 = vld [vmem:[%s282 + $0x198] sm:$0xff]
      %v502 = vld [vmem:[%s282 + $0x1a0] sm:$0xff]
      %v503 = vld [vmem:[%s282 + $0x1a8] sm:$0xff]
      %v504 = vld [vmem:[%s282 + $0x1b0] sm:$0xff]
      %v505 = vld [vmem:[%s282 + $0x1b8] sm:$0xff]
      %v506 = vld [vmem:[%s282 + $0x1c0] sm:$0xff]
      %v507 = vld [vmem:[%s282 + $0x1c8] sm:$0xff]
      %v508 = vld [vmem:[%s282 + $0x1d0] sm:$0xff]
      %v509 = vld [vmem:[%s282 + $0x1d8] sm:$0xff]
      %v510 = vld [vmem:[%s282 + $0x1e0] sm:$0xff]
      %v511 = vld [vmem:[%s282 + $0x1e8] sm:$0xff]
      %v512 = vld [vmem:[%s282 + $0x1f0] sm:$0xff]
      %v513 = vld [vmem:[%s282 + $0x1f8] sm:$0xff]
      %v514 = vld [vmem:[%s292] sm:$0xf]
      %v515 = vld [vmem:[%s292 + $0x4] sm:$0xf]
      %v516 = vld [vmem:[%s292 + $0x8] sm:$0xf]
      %v517 = vld [vmem:[%s292 + $0xc] sm:$0xf]
      %v518 = vld [vmem:[%s292 + $0x10] sm:$0xf]
      %v519 = vld [vmem:[%s292 + $0x14] sm:$0xf]
      %v520 = vld [vmem:[%s292 + $0x18] sm:$0xf]
      %v521 = vld [vmem:[%s292 + $0x1c] sm:$0xf]
      %v522 = vld [vmem:[%s292 + $0x20] sm:$0xf]
      %v523 = vld [vmem:[%s292 + $0x24] sm:$0xf]
      %v524 = vld [vmem:[%s292 + $0x28] sm:$0xf]
      %v525 = vld [vmem:[%s292 + $0x2c] sm:$0xf]
      %v526 = vld [vmem:[%s292 + $0x30] sm:$0xf]
      %v527 = vld [vmem:[%s292 + $0x34] sm:$0xf]
      %v528 = vld [vmem:[%s292 + $0x38] sm:$0xf]
      %v529 = vld [vmem:[%s292 + $0x3c] sm:$0xf]
      %v530 = vld [vmem:[%s292 + $0x40] sm:$0xf]
      %v531 = vld [vmem:[%s292 + $0x44] sm:$0xf]
      %v532 = vld [vmem:[%s292 + $0x48] sm:$0xf]
      %v533 = vld [vmem:[%s292 + $0x4c] sm:$0xf]
      %v534 = vld [vmem:[%s292 + $0x50] sm:$0xf]
      %v535 = vld [vmem:[%s292 + $0x54] sm:$0xf]
      %v536 = vld [vmem:[%s292 + $0x58] sm:$0xf]
      %v537 = vld [vmem:[%s292 + $0x5c] sm:$0xf]
      %v538 = vld [vmem:[%s292 + $0x60] sm:$0xf]
      %v539 = vld [vmem:[%s292 + $0x64] sm:$0xf]
      %v540 = vld [vmem:[%s292 + $0x68] sm:$0xf]
      %v541 = vld [vmem:[%s292 + $0x6c] sm:$0xf]
      %v542 = vld [vmem:[%s292 + $0x70] sm:$0xf]
      %v543 = vld [vmem:[%s292 + $0x74] sm:$0xf]
      %v544 = vld [vmem:[%s292 + $0x78] sm:$0xf]
      %v545 = vld [vmem:[%s292 + $0x7c] sm:$0xf]
      %v610 = vunpack.c.l.b16 %v450
      %v611 = vunpack.c.h.b16 %v450
      %v612 = vunpack.c.l.b16 %v451
      %v613 = vunpack.c.h.b16 %v451
      %v614 = vunpack.c.l.b16 %v452
      %v615 = vunpack.c.h.b16 %v452
      %v616 = vunpack.c.l.b16 %v453
      %v617 = vunpack.c.h.b16 %v453
      %v618 = vunpack.c.l.b16 %v454
      %v619 = vunpack.c.h.b16 %v454
      %v620 = vunpack.c.l.b16 %v455
      %v621 = vunpack.c.h.b16 %v455
      %v622 = vunpack.c.l.b16 %v456
      %v623 = vunpack.c.h.b16 %v456
      %v624 = vunpack.c.l.b16 %v457
      %v625 = vunpack.c.h.b16 %v457
      %v626 = vunpack.c.l.b16 %v458
      %v627 = vunpack.c.h.b16 %v458
      %v628 = vunpack.c.l.b16 %v459
      %v629 = vunpack.c.h.b16 %v459
      %v630 = vunpack.c.l.b16 %v460
      %v631 = vunpack.c.h.b16 %v460
      %v632 = vunpack.c.l.b16 %v461
      %v633 = vunpack.c.h.b16 %v461
      %v634 = vunpack.c.l.b16 %v462
      %v635 = vunpack.c.h.b16 %v462
      %v636 = vunpack.c.l.b16 %v463
      %v637 = vunpack.c.h.b16 %v463
      %v638 = vunpack.c.l.b16 %v464
      %v639 = vunpack.c.h.b16 %v464
      %v640 = vunpack.c.l.b16 %v465
      %v641 = vunpack.c.h.b16 %v465
      %v642 = vunpack.c.l.b16 %v466
      %v643 = vunpack.c.h.b16 %v466
      %v644 = vunpack.c.l.b16 %v467
      %v645 = vunpack.c.h.b16 %v467
      %v646 = vunpack.c.l.b16 %v468
      %v647 = vunpack.c.h.b16 %v468
      %v648 = vunpack.c.l.b16 %v469
      %v649 = vunpack.c.h.b16 %v469
      %v650 = vunpack.c.l.b16 %v470
      %v651 = vunpack.c.h.b16 %v470
      %v652 = vunpack.c.l.b16 %v471
      %v653 = vunpack.c.h.b16 %v471
      %v654 = vunpack.c.l.b16 %v472
      %v655 = vunpack.c.h.b16 %v472
      %v656 = vunpack.c.l.b16 %v473
      %v657 = vunpack.c.h.b16 %v473
      %v658 = vunpack.c.l.b16 %v474
      %v659 = vunpack.c.h.b16 %v474
      %v660 = vunpack.c.l.b16 %v475
      %v661 = vunpack.c.h.b16 %v475
      %v662 = vunpack.c.l.b16 %v476
      %v663 = vunpack.c.h.b16 %v476
      %v664 = vunpack.c.l.b16 %v477
      %v665 = vunpack.c.h.b16 %v477
      %v666 = vunpack.c.l.b16 %v478
      %v667 = vunpack.c.h.b16 %v478
      %v668 = vunpack.c.l.b16 %v479
      %v669 = vunpack.c.h.b16 %v479
      %v670 = vunpack.c.l.b16 %v480
      %v671 = vunpack.c.h.b16 %v480
      %v672 = vunpack.c.l.b16 %v481
      %v673 = vunpack.c.h.b16 %v481
      %v674 = vunpack.c.l.b16 %v482
      %v675 = vunpack.c.h.b16 %v482
      %v676 = vunpack.c.l.b16 %v483
      %v677 = vunpack.c.h.b16 %v483
      %v678 = vunpack.c.l.b16 %v484
      %v679 = vunpack.c.h.b16 %v484
      %v680 = vunpack.c.l.b16 %v485
      %v681 = vunpack.c.h.b16 %v485
      %v682 = vunpack.c.l.b16 %v486
      %v683 = vunpack.c.h.b16 %v486
      %v684 = vunpack.c.l.b16 %v487
      %v685 = vunpack.c.h.b16 %v487
      %v686 = vunpack.c.l.b16 %v488
      %v687 = vunpack.c.h.b16 %v488
      %v688 = vunpack.c.l.b16 %v489
      %v689 = vunpack.c.h.b16 %v489
      %v690 = vunpack.c.l.b16 %v490
      %v691 = vunpack.c.h.b16 %v490
      %v692 = vunpack.c.l.b16 %v491
      %v693 = vunpack.c.h.b16 %v491
      %v694 = vunpack.c.l.b16 %v492
      %v695 = vunpack.c.h.b16 %v492
      %v696 = vunpack.c.l.b16 %v493
      %v697 = vunpack.c.h.b16 %v493
      %v698 = vunpack.c.l.b16 %v494
      %v699 = vunpack.c.h.b16 %v494
      %v700 = vunpack.c.l.b16 %v495
      %v701 = vunpack.c.h.b16 %v495
      %v702 = vunpack.c.l.b16 %v496
      %v703 = vunpack.c.h.b16 %v496
      %v704 = vunpack.c.l.b16 %v497
      %v705 = vunpack.c.h.b16 %v497
      %v706 = vunpack.c.l.b16 %v498
      %v707 = vunpack.c.h.b16 %v498
      %v708 = vunpack.c.l.b16 %v499
      %v709 = vunpack.c.h.b16 %v499
      %v710 = vunpack.c.l.b16 %v500
      %v711 = vunpack.c.h.b16 %v500
      %v712 = vunpack.c.l.b16 %v501
      %v713 = vunpack.c.h.b16 %v501
      %v714 = vunpack.c.l.b16 %v502
      %v715 = vunpack.c.h.b16 %v502
      %v716 = vunpack.c.l.b16 %v503
      %v717 = vunpack.c.h.b16 %v503
      %v718 = vunpack.c.l.b16 %v504
      %v719 = vunpack.c.h.b16 %v504
      %v720 = vunpack.c.l.b16 %v505
      %v721 = vunpack.c.h.b16 %v505
      %v722 = vunpack.c.l.b16 %v506
      %v723 = vunpack.c.h.b16 %v506
      %v724 = vunpack.c.l.b16 %v507
      %v725 = vunpack.c.h.b16 %v507
      %v726 = vunpack.c.l.b16 %v508
      %v727 = vunpack.c.h.b16 %v508
      %v728 = vunpack.c.l.b16 %v509
      %v729 = vunpack.c.h.b16 %v509
      %v730 = vunpack.c.l.b16 %v510
      %v731 = vunpack.c.h.b16 %v510
      %v732 = vunpack.c.l.b16 %v511
      %v733 = vunpack.c.h.b16 %v511
      %v734 = vunpack.c.l.b16 %v512
      %v735 = vunpack.c.h.b16 %v512
      %v736 = vunpack.c.l.b16 %v513
      %v737 = vunpack.c.h.b16 %v513
      %v738 = vpack.c.b16 %v612, %v610
      %v739 = vpack.c.b16 %v613, %v611
      %v740 = vpack.c.b16 %v616, %v614
      %v741 = vpack.c.b16 %v617, %v615
      %v742 = vpack.c.b16 %v620, %v618
      %v743 = vpack.c.b16 %v621, %v619
      %v744 = vpack.c.b16 %v624, %v622
      %v745 = vpack.c.b16 %v625, %v623
      %v746 = vpack.c.b16 %v628, %v626
      %v747 = vpack.c.b16 %v629, %v627
      %v748 = vpack.c.b16 %v632, %v630
      %v749 = vpack.c.b16 %v633, %v631
      %v750 = vpack.c.b16 %v636, %v634
      %v751 = vpack.c.b16 %v637, %v635
      %v752 = vpack.c.b16 %v640, %v638
      %v753 = vpack.c.b16 %v641, %v639
      %v754 = vpack.c.b16 %v644, %v642
      %v755 = vpack.c.b16 %v645, %v643
      %v756 = vpack.c.b16 %v648, %v646
      %v757 = vpack.c.b16 %v649, %v647
      %v758 = vpack.c.b16 %v652, %v650
      %v759 = vpack.c.b16 %v653, %v651
      %v760 = vpack.c.b16 %v656, %v654
      %v761 = vpack.c.b16 %v657, %v655
      %v762 = vpack.c.b16 %v660, %v658
      %v763 = vpack.c.b16 %v661, %v659
      %v764 = vpack.c.b16 %v664, %v662
      %v765 = vpack.c.b16 %v665, %v663
      %v766 = vpack.c.b16 %v668, %v666
      %v767 = vpack.c.b16 %v669, %v667
      %v768 = vpack.c.b16 %v672, %v670
      %v769 = vpack.c.b16 %v673, %v671
      %v770 = vpack.c.b16 %v676, %v674
      %v771 = vpack.c.b16 %v677, %v675
      %v772 = vpack.c.b16 %v680, %v678
      %v773 = vpack.c.b16 %v681, %v679
      %v774 = vpack.c.b16 %v684, %v682
      %v775 = vpack.c.b16 %v685, %v683
      %v776 = vpack.c.b16 %v688, %v686
      %v777 = vpack.c.b16 %v689, %v687
      %v778 = vpack.c.b16 %v692, %v690
      %v779 = vpack.c.b16 %v693, %v691
      %v780 = vpack.c.b16 %v696, %v694
      %v781 = vpack.c.b16 %v697, %v695
      %v782 = vpack.c.b16 %v700, %v698
      %v783 = vpack.c.b16 %v701, %v699
      %v784 = vpack.c.b16 %v704, %v702
      %v785 = vpack.c.b16 %v705, %v703
      %v786 = vpack.c.b16 %v708, %v706
      %v787 = vpack.c.b16 %v709, %v707
      %v788 = vpack.c.b16 %v712, %v710
      %v789 = vpack.c.b16 %v713, %v711
      %v790 = vpack.c.b16 %v716, %v714
      %v791 = vpack.c.b16 %v717, %v715
      %v792 = vpack.c.b16 %v720, %v718
      %v793 = vpack.c.b16 %v721, %v719
      %v794 = vpack.c.b16 %v724, %v722
      %v795 = vpack.c.b16 %v725, %v723
      %v796 = vpack.c.b16 %v728, %v726
      %v797 = vpack.c.b16 %v729, %v727
      %v798 = vpack.c.b16 %v732, %v730
      %v799 = vpack.c.b16 %v733, %v731
      %v800 = vpack.c.b16 %v736, %v734
      %v801 = vpack.c.b16 %v737, %v735
      %v898 = vunpack.c.l.b16 %v514
      %v899 = vunpack.c.l.b16 %v515
      %v900 = vunpack.c.l.b16 %v516
      %v901 = vunpack.c.l.b16 %v517
      %v902 = vunpack.c.l.b16 %v518
      %v903 = vunpack.c.l.b16 %v519
      %v904 = vunpack.c.l.b16 %v520
      %v905 = vunpack.c.l.b16 %v521
      %v906 = vunpack.c.l.b16 %v522
      %v907 = vunpack.c.l.b16 %v523
      %v908 = vunpack.c.l.b16 %v524
      %v909 = vunpack.c.l.b16 %v525
      %v910 = vunpack.c.l.b16 %v526
      %v911 = vunpack.c.l.b16 %v527
      %v912 = vunpack.c.l.b16 %v528
      %v913 = vunpack.c.l.b16 %v529
      %v914 = vunpack.c.l.b16 %v530
      %v915 = vunpack.c.l.b16 %v531
      %v916 = vunpack.c.l.b16 %v532
      %v917 = vunpack.c.l.b16 %v533
      %v918 = vunpack.c.l.b16 %v534
      %v919 = vunpack.c.l.b16 %v535
      %v920 = vunpack.c.l.b16 %v536
      %v921 = vunpack.c.l.b16 %v537
      %v922 = vunpack.c.l.b16 %v538
      %v923 = vunpack.c.l.b16 %v539
      %v924 = vunpack.c.l.b16 %v540
      %v925 = vunpack.c.l.b16 %v541
      %v926 = vunpack.c.l.b16 %v542
      %v927 = vunpack.c.l.b16 %v543
      %v928 = vunpack.c.l.b16 %v544
      %v929 = vunpack.c.l.b16 %v545
      %v930 = vpack.c.b16 %v899, %v898
      %v931 = vpack.c.b16 %v901, %v900
      %v932 = vpack.c.b16 %v903, %v902
      %v933 = vpack.c.b16 %v905, %v904
      %v934 = vpack.c.b16 %v907, %v906
      %v935 = vpack.c.b16 %v909, %v908
      %v936 = vpack.c.b16 %v911, %v910
      %v937 = vpack.c.b16 %v913, %v912
      %v938 = vpack.c.b16 %v915, %v914
      %v939 = vpack.c.b16 %v917, %v916
      %v940 = vpack.c.b16 %v919, %v918
      %v941 = vpack.c.b16 %v921, %v920
      %v942 = vpack.c.b16 %v923, %v922
      %v943 = vpack.c.b16 %v925, %v924
      %v944 = vpack.c.b16 %v927, %v926
      %v945 = vpack.c.b16 %v929, %v928
      %962 = vmatprep.subr.bf16.mxu0 0
      %963 = vmatpush1.bf16.msra.mxu0 %v930
      %964 = vmatprep.subr.bf16.mxu0 0
      %965 = vmatpush1.bf16.msra.mxu0 %v931
      %966 = vmatprep.subr.bf16.mxu0 0
      %967 = vmatpush1.bf16.msra.mxu0 %v932
      %968 = vmatprep.subr.bf16.mxu0 0
      %969 = vmatpush1.bf16.msra.mxu0 %v933
      %970 = vmatprep.subr.bf16.mxu0 0
      %971 = vmatpush1.bf16.msra.mxu0 %v934
      %972 = vmatprep.subr.bf16.mxu0 0
      %973 = vmatpush1.bf16.msra.mxu0 %v935
      %974 = vmatprep.subr.bf16.mxu0 0
      %975 = vmatpush1.bf16.msra.mxu0 %v936
      %976 = vmatprep.subr.bf16.mxu0 0
      %977 = vmatpush1.bf16.msra.mxu0 %v937
      %978 = vmatprep.subr.bf16.mxu0 0
      %979 = vmatpush1.bf16.msra.mxu0 %v938
      %980 = vmatprep.subr.bf16.mxu0 0
      %981 = vmatpush1.bf16.msra.mxu0 %v939
      %982 = vmatprep.subr.bf16.mxu0 0
      %983 = vmatpush1.bf16.msra.mxu0 %v940
      %984 = vmatprep.subr.bf16.mxu0 0
      %985 = vmatpush1.bf16.msra.mxu0 %v941
      %986 = vmatprep.subr.bf16.mxu0 0
      %987 = vmatpush1.bf16.msra.mxu0 %v942
      %988 = vmatprep.subr.bf16.mxu0 0
      %989 = vmatpush1.bf16.msra.mxu0 %v943
      %990 = vmatprep.subr.bf16.mxu0 0
      %991 = vmatpush1.bf16.msra.mxu0 %v944
      %992 = vmatprep.subr.bf16.mxu0 0
      %993 = vmatpush1.bf16.msra.mxu0 %v945
      %994 = vmatprep.mubr.bf16.mxu0 %v739
      %995 = vmatmul.mubr.bf16.gmra.mrb[0].mxu0 %v738
      %v996 = vpop.f32.mrb[0].mxu0
      %v997 = vadd.f32 0.0, %v996
      %v998 = vpop.f32.mrb[0].mxu0
      %v999 = vpop.f32.mrb[0].mxu0
      %v1000 = vadd.f32 0.0, %v999
      %v1001 = vpop.f32.mrb[0].mxu0
      %1002 = vmatprep.mubr.bf16.mxu0 %v741
      %1003 = vmatmul.mubr.bf16.gmra.mrb[0].mxu0 %v740
      %v1004 = vpop.f32.mrb[0].mxu0
      %v1005 = vadd.f32 0.0, %v1004
      %v1006 = vpop.f32.mrb[0].mxu0
      %v1007 = vpop.f32.mrb[0].mxu0
      %v1008 = vadd.f32 0.0, %v1007
      %v1009 = vpop.f32.mrb[0].mxu0
      %1010 = vmatprep.mubr.bf16.mxu0 %v743
      %1011 = vmatmul.mubr.bf16.gmra.mrb[0].mxu0 %v742
      %v1012 = vpop.f32.mrb[0].mxu0
      %v1013 = vadd.f32 0.0, %v1012
      %v1014 = vpop.f32.mrb[0].mxu0
      %v1015 = vpop.f32.mrb[0].mxu0
      %v1016 = vadd.f32 0.0, %v1015
      %v1017 = vpop.f32.mrb[0].mxu0
      %1018 = vmatprep.mubr.bf16.mxu0 %v745
      %1019 = vmatmul.mubr.bf16.gmra.mrb[0].mxu0 %v744
      %v1020 = vpop.f32.mrb[0].mxu0
      %v1021 = vadd.f32 0.0, %v1020
      %v1022 = vpop.f32.mrb[0].mxu0
      %v1023 = vpop.f32.mrb[0].mxu0
      %v1024 = vadd.f32 0.0, %v1023
      %v1025 = vpop.f32.mrb[0].mxu0
      %1026 = vmatprep.mubr.bf16.mxu0 %v747
      %1027 = vmatmul.mubr.bf16.gmra.mrb[0].mxu0 %v746
      %v1028 = vpop.f32.mrb[0].mxu0
      %v1029 = vadd.f32 0.0, %v1028
      %v1030 = vpop.f32.mrb[0].mxu0
      %v1031 = vpop.f32.mrb[0].mxu0
      %v1032 = vadd.f32 0.0, %v1031
      %v1033 = vpop.f32.mrb[0].mxu0
      %1034 = vmatprep.mubr.bf16.mxu0 %v749
      %1035 = vmatmul.mubr.bf16.gmra.mrb[0].mxu0 %v748
      %v1036 = vpop.f32.mrb[0].mxu0
      %v1037 = vadd.f32 0.0, %v1036
      %v1038 = vpop.f32.mrb[0].mxu0
      %v1039 = vpop.f32.mrb[0].mxu0
      %v1040 = vadd.f32 0.0, %v1039
      %v1041 = vpop.f32.mrb[0].mxu0
      %1042 = vmatprep.mubr.bf16.mxu0 %v751
      %1043 = vmatmul.mubr.bf16.gmra.mrb[0].mxu0 %v750
      %v1044 = vpop.f32.mrb[0].mxu0
      %v1045 = vadd.f32 0.0, %v1044
      %v1046 = vpop.f32.mrb[0].mxu0
      %v1047 = vpop.f32.mrb[0].mxu0
      %v1048 = vadd.f32 0.0, %v1047
      %v1049 = vpop.f32.mrb[0].mxu0
      %1050 = vmatprep.mubr.bf16.mxu0 %v753
      %1051 = vmatmul.mubr.bf16.gmra.mrb[0].mxu0 %v752
      %v1052 = vpop.f32.mrb[0].mxu0
      %v1053 = vadd.f32 0.0, %v1052
      %v1054 = vpop.f32.mrb[0].mxu0
      %v1055 = vpop.f32.mrb[0].mxu0
      %v1056 = vadd.f32 0.0, %v1055
      %v1057 = vpop.f32.mrb[0].mxu0
      %1058 = vmatprep.mubr.bf16.mxu0 %v755
      %1059 = vmatmul.mubr.bf16.gmra.mrb[0].mxu0 %v754
      %v1060 = vpop.f32.mrb[0].mxu0
      %v1061 = vadd.f32 0.0, %v1060
      %v1062 = vpop.f32.mrb[0].mxu0
      %v1063 = vpop.f32.mrb[0].mxu0
      %v1064 = vadd.f32 0.0, %v1063
      %v1065 = vpop.f32.mrb[0].mxu0
      %1066 = vmatprep.mubr.bf16.mxu0 %v757
      %1067 = vmatmul.mubr.bf16.gmra.mrb[0].mxu0 %v756
      %v1068 = vpop.f32.mrb[0].mxu0
      %v1069 = vadd.f32 0.0, %v1068
      %v1070 = vpop.f32.mrb[0].mxu0
      %v1071 = vpop.f32.mrb[0].mxu0
      %v1072 = vadd.f32 0.0, %v1071
      %v1073 = vpop.f32.mrb[0].mxu0
      %1074 = vmatprep.mubr.bf16.mxu0 %v759
      %1075 = vmatmul.mubr.bf16.gmra.mrb[0].mxu0 %v758
      %v1076 = vpop.f32.mrb[0].mxu0
      %v1077 = vadd.f32 0.0, %v1076
      %v1078 = vpop.f32.mrb[0].mxu0
      %v1079 = vpop.f32.mrb[0].mxu0
      %v1080 = vadd.f32 0.0, %v1079
      %v1081 = vpop.f32.mrb[0].mxu0
      %1082 = vmatprep.mubr.bf16.mxu0 %v761
      %1083 = vmatmul.mubr.bf16.gmra.mrb[0].mxu0 %v760
      %v1084 = vpop.f32.mrb[0].mxu0
      %v1085 = vadd.f32 0.0, %v1084
      %v1086 = vpop.f32.mrb[0].mxu0
      %v1087 = vpop.f32.mrb[0].mxu0
      %v1088 = vadd.f32 0.0, %v1087
      %v1089 = vpop.f32.mrb[0].mxu0
      %1090 = vmatprep.mubr.bf16.mxu0 %v763
      %1091 = vmatmul.mubr.bf16.gmra.mrb[0].mxu0 %v762
      %v1092 = vpop.f32.mrb[0].mxu0
      %v1093 = vadd.f32 0.0, %v1092
      %v1094 = vpop.f32.mrb[0].mxu0
      %v1095 = vpop.f32.mrb[0].mxu0
      %v1096 = vadd.f32 0.0, %v1095
      %v1097 = vpop.f32.mrb[0].mxu0
      %1098 = vmatprep.mubr.bf16.mxu0 %v765
      %1099 = vmatmul.mubr.bf16.gmra.mrb[0].mxu0 %v764
      %v1100 = vpop.f32.mrb[0].mxu0
      %v1101 = vadd.f32 0.0, %v1100
      %v1102 = vpop.f32.mrb[0].mxu0
      %v1103 = vpop.f32.mrb[0].mxu0
      %v1104 = vadd.f32 0.0, %v1103
      %v1105 = vpop.f32.mrb[0].mxu0
      %1106 = vmatprep.mubr.bf16.mxu0 %v767
      %1107 = vmatmul.mubr.bf16.gmra.mrb[0].mxu0 %v766
      %v1108 = vpop.f32.mrb[0].mxu0
      %v1109 = vadd.f32 0.0, %v1108
      %v1110 = vpop.f32.mrb[0].mxu0
      %v1111 = vpop.f32.mrb[0].mxu0
      %v1112 = vadd.f32 0.0, %v1111
      %v1113 = vpop.f32.mrb[0].mxu0
      %1114 = vmatprep.mubr.bf16.mxu0 %v769
      %1115 = vmatmul.mubr.bf16.gmra.mrb[0].mxu0 %v768
      %v1116 = vpop.f32.mrb[0].mxu0
      %v1117 = vadd.f32 0.0, %v1116
      %v1118 = vpop.f32.mrb[0].mxu0
      %v1119 = vpop.f32.mrb[0].mxu0
      %v1120 = vadd.f32 0.0, %v1119
      %v1121 = vpop.f32.mrb[0].mxu0
      %1122 = vmatprep.mubr.bf16.mxu0 %v771
      %1123 = vmatmul.mubr.bf16.gmra.mrb[0].mxu0 %v770
      %v1124 = vpop.f32.mrb[0].mxu0
      %v1125 = vadd.f32 0.0, %v1124
      %v1126 = vpop.f32.mrb[0].mxu0
      %v1127 = vpop.f32.mrb[0].mxu0
      %v1128 = vadd.f32 0.0, %v1127
      %v1129 = vpop.f32.mrb[0].mxu0
      %1130 = vmatprep.mubr.bf16.mxu0 %v773
      %1131 = vmatmul.mubr.bf16.gmra.mrb[0].mxu0 %v772
      %v1132 = vpop.f32.mrb[0].mxu0
      %v1133 = vadd.f32 0.0, %v1132
      %v1134 = vpop.f32.mrb[0].mxu0
      %v1135 = vpop.f32.mrb[0].mxu0
      %v1136 = vadd.f32 0.0, %v1135
      %v1137 = vpop.f32.mrb[0].mxu0
      %1138 = vmatprep.mubr.bf16.mxu0 %v775
      %1139 = vmatmul.mubr.bf16.gmra.mrb[0].mxu0 %v774
      %v1140 = vpop.f32.mrb[0].mxu0
      %v1141 = vadd.f32 0.0, %v1140
      %v1142 = vpop.f32.mrb[0].mxu0
      %v1143 = vpop.f32.mrb[0].mxu0
      %v1144 = vadd.f32 0.0, %v1143
      %v1145 = vpop.f32.mrb[0].mxu0
      %1146 = vmatprep.mubr.bf16.mxu0 %v777
      %1147 = vmatmul.mubr.bf16.gmra.mrb[0].mxu0 %v776
      %v1148 = vpop.f32.mrb[0].mxu0
      %v1149 = vadd.f32 0.0, %v1148
      %v1150 = vpop.f32.mrb[0].mxu0
      %v1151 = vpop.f32.mrb[0].mxu0
      %v1152 = vadd.f32 0.0, %v1151
      %v1153 = vpop.f32.mrb[0].mxu0
      %1154 = vmatprep.mubr.bf16.mxu0 %v779
      %1155 = vmatmul.mubr.bf16.gmra.mrb[0].mxu0 %v778
      %v1156 = vpop.f32.mrb[0].mxu0
      %v1157 = vadd.f32 0.0, %v1156
      %v1158 = vpop.f32.mrb[0].mxu0
      %v1159 = vpop.f32.mrb[0].mxu0
      %v1160 = vadd.f32 0.0, %v1159
      %v1161 = vpop.f32.mrb[0].mxu0
      %1162 = vmatprep.mubr.bf16.mxu0 %v781
      %1163 = vmatmul.mubr.bf16.gmra.mrb[0].mxu0 %v780
      %v1164 = vpop.f32.mrb[0].mxu0
      %v1165 = vadd.f32 0.0, %v1164
      %v1166 = vpop.f32.mrb[0].mxu0
      %v1167 = vpop.f32.mrb[0].mxu0
      %v1168 = vadd.f32 0.0, %v1167
      %v1169 = vpop.f32.mrb[0].mxu0
      %1170 = vmatprep.mubr.bf16.mxu0 %v783
      %1171 = vmatmul.mubr.bf16.gmra.mrb[0].mxu0 %v782
      %v1172 = vpop.f32.mrb[0].mxu0
      %v1173 = vadd.f32 0.0, %v1172
      %v1174 = vpop.f32.mrb[0].mxu0
      %v1175 = vpop.f32.mrb[0].mxu0
      %v1176 = vadd.f32 0.0, %v1175
      %v1177 = vpop.f32.mrb[0].mxu0
      %1178 = vmatprep.mubr.bf16.mxu0 %v785
      %1179 = vmatmul.mubr.bf16.gmra.mrb[0].mxu0 %v784
      %v1180 = vpop.f32.mrb[0].mxu0
      %v1181 = vadd.f32 0.0, %v1180
      %v1182 = vpop.f32.mrb[0].mxu0
      %v1183 = vpop.f32.mrb[0].mxu0
      %v1184 = vadd.f32 0.0, %v1183
      %v1185 = vpop.f32.mrb[0].mxu0
      %1186 = vmatprep.mubr.bf16.mxu0 %v787
      %1187 = vmatmul.mubr.bf16.gmra.mrb[0].mxu0 %v786
      %v1188 = vpop.f32.mrb[0].mxu0
      %v1189 = vadd.f32 0.0, %v1188
      %v1190 = vpop.f32.mrb[0].mxu0
      %v1191 = vpop.f32.mrb[0].mxu0
      %v1192 = vadd.f32 0.0, %v1191
      %v1193 = vpop.f32.mrb[0].mxu0
      %1194 = vmatprep.mubr.bf16.mxu0 %v789
      %1195 = vmatmul.mubr.bf16.gmra.mrb[0].mxu0 %v788
      %v1196 = vpop.f32.mrb[0].mxu0
      %v1197 = vadd.f32 0.0, %v1196
      %v1198 = vpop.f32.mrb[0].mxu0
      %v1199 = vpop.f32.mrb[0].mxu0
      %v1200 = vadd.f32 0.0, %v1199
      %v1201 = vpop.f32.mrb[0].mxu0
      %1202 = vmatprep.mubr.bf16.mxu0 %v791
      %1203 = vmatmul.mubr.bf16.gmra.mrb[0].mxu0 %v790
      %v1204 = vpop.f32.mrb[0].mxu0
      %v1205 = vadd.f32 0.0, %v1204
      %v1206 = vpop.f32.mrb[0].mxu0
      %v1207 = vpop.f32.mrb[0].mxu0
      %v1208 = vadd.f32 0.0, %v1207
      %v1209 = vpop.f32.mrb[0].mxu0
      %1210 = vmatprep.mubr.bf16.mxu0 %v793
      %1211 = vmatmul.mubr.bf16.gmra.mrb[0].mxu0 %v792
      %v1212 = vpop.f32.mrb[0].mxu0
      %v1213 = vadd.f32 0.0, %v1212
      %v1214 = vpop.f32.mrb[0].mxu0
      %v1215 = vpop.f32.mrb[0].mxu0
      %v1216 = vadd.f32 0.0, %v1215
      %v1217 = vpop.f32.mrb[0].mxu0
      %1218 = vmatprep.mubr.bf16.mxu0 %v795
      %1219 = vmatmul.mubr.bf16.gmra.mrb[0].mxu0 %v794
      %v1220 = vpop.f32.mrb[0].mxu0
      %v1221 = vadd.f32 0.0, %v1220
      %v1222 = vpop.f32.mrb[0].mxu0
      %v1223 = vpop.f32.mrb[0].mxu0
      %v1224 = vadd.f32 0.0, %v1223
      %v1225 = vpop.f32.mrb[0].mxu0
      %1226 = vmatprep.mubr.bf16.mxu0 %v797
      %1227 = vmatmul.mubr.bf16.gmra.mrb[0].mxu0 %v796
      %v1228 = vpop.f32.mrb[0].mxu0
      %v1229 = vadd.f32 0.0, %v1228
      %v1230 = vpop.f32.mrb[0].mxu0
      %v1231 = vpop.f32.mrb[0].mxu0
      %v1232 = vadd.f32 0.0, %v1231
      %v1233 = vpop.f32.mrb[0].mxu0
      %1234 = vmatprep.mubr.bf16.mxu0 %v799
      %1235 = vmatmul.mubr.bf16.gmra.mrb[0].mxu0 %v798
      %v1236 = vpop.f32.mrb[0].mxu0
      %v1237 = vadd.f32 0.0, %v1236
      %v1238 = vpop.f32.mrb[0].mxu0
      %v1239 = vpop.f32.mrb[0].mxu0
      %v1240 = vadd.f32 0.0, %v1239
      %v1241 = vpop.f32.mrb[0].mxu0
      %1242 = vmatprep.mubr.bf16.mxu0 %v801
      %1243 = vmatmul.mubr.bf16.gmra.mrb[0].mxu0 %v800
      %v1244 = vpop.f32.mrb[0].mxu0
      %v1245 = vadd.f32 0.0, %v1244
      %v1246 = vpop.f32.mrb[0].mxu0
      %v1247 = vpop.f32.mrb[0].mxu0
      %v1248 = vadd.f32 0.0, %v1247
      %v1249 = vpop.f32.mrb[0].mxu0
      %1250 = vdwg.mxu0
      %v1251 = vadd.f32 %v386, %v997
      %v1252 = vadd.f32 %v387, %v1000
      %v1253 = vadd.f32 %v388, %v1005
      %v1254 = vadd.f32 %v389, %v1008
      %v1255 = vadd.f32 %v390, %v1013
      %v1256 = vadd.f32 %v391, %v1016
      %v1257 = vadd.f32 %v392, %v1021
      %v1258 = vadd.f32 %v393, %v1024
      %v1259 = vadd.f32 %v394, %v1029
      %v1260 = vadd.f32 %v395, %v1032
      %v1261 = vadd.f32 %v396, %v1037
      %v1262 = vadd.f32 %v397, %v1040
      %v1263 = vadd.f32 %v398, %v1045
      %v1264 = vadd.f32 %v399, %v1048
      %v1265 = vadd.f32 %v400, %v1053
      %v1266 = vadd.f32 %v401, %v1056
      %v1267 = vadd.f32 %v402, %v1061
      %v1268 = vadd.f32 %v403, %v1064
      %v1269 = vadd.f32 %v404, %v1069
      %v1270 = vadd.f32 %v405, %v1072
      %v1271 = vadd.f32 %v406, %v1077
      %v1272 = vadd.f32 %v407, %v1080
      %v1273 = vadd.f32 %v408, %v1085
      %v1274 = vadd.f32 %v409, %v1088
      %v1275 = vadd.f32 %v410, %v1093
      %v1276 = vadd.f32 %v411, %v1096
      %v1277 = vadd.f32 %v412, %v1101
      %v1278 = vadd.f32 %v413, %v1104
      %v1279 = vadd.f32 %v414, %v1109
      %v1280 = vadd.f32 %v415, %v1112
      %v1281 = vadd.f32 %v416, %v1117
      %v1282 = vadd.f32 %v417, %v1120
      %v1283 = vadd.f32 %v418, %v1125
      %v1284 = vadd.f32 %v419, %v1128
      %v1285 = vadd.f32 %v420, %v1133
      %v1286 = vadd.f32 %v421, %v1136
      %v1287 = vadd.f32 %v422, %v1141
      %v1288 = vadd.f32 %v423, %v1144
      %v1289 = vadd.f32 %v424, %v1149
      %v1290 = vadd.f32 %v425, %v1152
      %v1291 = vadd.f32 %v426, %v1157
      %v1292 = vadd.f32 %v427, %v1160
      %v1293 = vadd.f32 %v428, %v1165
      %v1294 = vadd.f32 %v429, %v1168
      %v1295 = vadd.f32 %v430, %v1173
      %v1296 = vadd.f32 %v431, %v1176
      %v1297 = vadd.f32 %v432, %v1181
      %v1298 = vadd.f32 %v433, %v1184
      %v1299 = vadd.f32 %v434, %v1189
      %v1300 = vadd.f32 %v435, %v1192
      %v1301 = vadd.f32 %v436, %v1197
      %v1302 = vadd.f32 %v437, %v1200
      %v1303 = vadd.f32 %v438, %v1205
      %v1304 = vadd.f32 %v439, %v1208
      %v1305 = vadd.f32 %v440, %v1213
      %v1306 = vadd.f32 %v441, %v1216
      %v1307 = vadd.f32 %v442, %v1221
      %v1308 = vadd.f32 %v443, %v1224
      %v1309 = vadd.f32 %v444, %v1229
      %v1310 = vadd.f32 %v445, %v1232
      %v1311 = vadd.f32 %v446, %v1237
      %v1312 = vadd.f32 %v447, %v1240
      %v1313 = vadd.f32 %v448, %v1245
      %v1314 = vadd.f32 %v449, %v1248
      %1315 = vst [vmem:[#allocation2] sm:$0xff] %v1251
      %1316 = vst [vmem:[#allocation2 + $0x8] sm:$0xff] %v1252
      %1317 = vst [vmem:[#allocation2 + $0x10] sm:$0xff] %v1253
      %1318 = vst [vmem:[#allocation2 + $0x18] sm:$0xff] %v1254
      %1319 = vst [vmem:[#allocation2 + $0x20] sm:$0xff] %v1255
      %1320 = vst [vmem:[#allocation2 + $0x28] sm:$0xff] %v1256
      %1321 = vst [vmem:[#allocation2 + $0x30] sm:$0xff] %v1257
      %1322 = vst [vmem:[#allocation2 + $0x38] sm:$0xff] %v1258
      %1323 = vst [vmem:[#allocation2 + $0x40] sm:$0xff] %v1259
      %1324 = vst [vmem:[#allocation2 + $0x48] sm:$0xff] %v1260
      %1325 = vst [vmem:[#allocation2 + $0x50] sm:$0xff] %v1261
      %1326 = vst [vmem:[#allocation2 + $0x58] sm:$0xff] %v1262
      %1327 = vst [vmem:[#allocation2 + $0x60] sm:$0xff] %v1263
      %1328 = vst [vmem:[#allocation2 + $0x68] sm:$0xff] %v1264
      %1329 = vst [vmem:[#allocation2 + $0x70] sm:$0xff] %v1265
      %1330 = vst [vmem:[#allocation2 + $0x78] sm:$0xff] %v1266
      %1331 = vst [vmem:[#allocation2 + $0x80] sm:$0xff] %v1267
      %1332 = vst [vmem:[#allocation2 + $0x88] sm:$0xff] %v1268
      %1333 = vst [vmem:[#allocation2 + $0x90] sm:$0xff] %v1269
      %1334 = vst [vmem:[#allocation2 + $0x98] sm:$0xff] %v1270
      %1335 = vst [vmem:[#allocation2 + $0xa0] sm:$0xff] %v1271
      %1336 = vst [vmem:[#allocation2 + $0xa8] sm:$0xff] %v1272
      %1337 = vst [vmem:[#allocation2 + $0xb0] sm:$0xff] %v1273
      %1338 = vst [vmem:[#allocation2 + $0xb8] sm:$0xff] %v1274
      %1339 = vst [vmem:[#allocation2 + $0xc0] sm:$0xff] %v1275
      %1340 = vst [vmem:[#allocation2 + $0xc8] sm:$0xff] %v1276
      %1341 = vst [vmem:[#allocation2 + $0xd0] sm:$0xff] %v1277
      %1342 = vst [vmem:[#allocation2 + $0xd8] sm:$0xff] %v1278
      %1343 = vst [vmem:[#allocation2 + $0xe0] sm:$0xff] %v1279
      %1344 = vst [vmem:[#allocation2 + $0xe8] sm:$0xff] %v1280
      %1345 = vst [vmem:[#allocation2 + $0xf0] sm:$0xff] %v1281
      %1346 = vst [vmem:[#allocation2 + $0xf8] sm:$0xff] %v1282
      %1347 = vst [vmem:[#allocation2 + $0x100] sm:$0xff] %v1283
      %1348 = vst [vmem:[#allocation2 + $0x108] sm:$0xff] %v1284
      %1349 = vst [vmem:[#allocation2 + $0x110] sm:$0xff] %v1285
      %1350 = vst [vmem:[#allocation2 + $0x118] sm:$0xff] %v1286
      %1351 = vst [vmem:[#allocation2 + $0x120] sm:$0xff] %v1287
      %1352 = vst [vmem:[#allocation2 + $0x128] sm:$0xff] %v1288
      %1353 = vst [vmem:[#allocation2 + $0x130] sm:$0xff] %v1289
      %1354 = vst [vmem:[#allocation2 + $0x138] sm:$0xff] %v1290
      %1355 = vst [vmem:[#allocation2 + $0x140] sm:$0xff] %v1291
      %1356 = vst [vmem:[#allocation2 + $0x148] sm:$0xff] %v1292
      %1357 = vst [vmem:[#allocation2 + $0x150] sm:$0xff] %v1293
      %1358 = vst [vmem:[#allocation2 + $0x158] sm:$0xff] %v1294
      %1359 = vst [vmem:[#allocation2 + $0x160] sm:$0xff] %v1295
      %1360 = vst [vmem:[#allocation2 + $0x168] sm:$0xff] %v1296
      %1361 = vst [vmem:[#allocation2 + $0x170] sm:$0xff] %v1297
      %1362 = vst [vmem:[#allocation2 + $0x178] sm:$0xff] %v1298
      %1363 = vst [vmem:[#allocation2 + $0x180] sm:$0xff] %v1299
      %1364 = vst [vmem:[#allocation2 + $0x188] sm:$0xff] %v1300
      %1365 = vst [vmem:[#allocation2 + $0x190] sm:$0xff] %v1301
      %1366 = vst [vmem:[#allocation2 + $0x198] sm:$0xff] %v1302
      %1367 = vst [vmem:[#allocation2 + $0x1a0] sm:$0xff] %v1303
      %1368 = vst [vmem:[#allocation2 + $0x1a8] sm:$0xff] %v1304
      %1369 = vst [vmem:[#allocation2 + $0x1b0] sm:$0xff] %v1305
      %1370 = vst [vmem:[#allocation2 + $0x1b8] sm:$0xff] %v1306
      %1371 = vst [vmem:[#allocation2 + $0x1c0] sm:$0xff] %v1307
      %1372 = vst [vmem:[#allocation2 + $0x1c8] sm:$0xff] %v1308
      %1373 = vst [vmem:[#allocation2 + $0x1d0] sm:$0xff] %v1309
      %1374 = vst [vmem:[#allocation2 + $0x1d8] sm:$0xff] %v1310
      %1375 = vst [vmem:[#allocation2 + $0x1e0] sm:$0xff] %v1311
      %1376 = vst [vmem:[#allocation2 + $0x1e8] sm:$0xff] %v1312
      %1377 = vst [vmem:[#allocation2 + $0x1f0] sm:$0xff] %v1313
      %1378 = vst [vmem:[#allocation2 + $0x1f8] sm:$0xff] %v1314
      // Predicated region
      $region33: #{conv_bn_leaky.2} parent=27 // pred_check
        %p1379 = pneg %p318
      $region34: #{conv_bn_leaky.2} parent=27 // pred_check_branch
        %1381 = sbr.rel (%p1379) target = $region36
      $region35: #{conv_bn_leaky.2} parent=27 // pred_region
        %v1382 = vld [vmem:[#allocation2] sm:$0xff]
        %v1383 = vld [vmem:[#allocation2 + $0x8] sm:$0xff]
        %v1384 = vld [vmem:[#allocation2 + $0x10] sm:$0xff]
        %v1385 = vld [vmem:[#allocation2 + $0x18] sm:$0xff]
        %v1386 = vld [vmem:[#allocation2 + $0x20] sm:$0xff]
        %v1387 = vld [vmem:[#allocation2 + $0x28] sm:$0xff]
        %v1388 = vld [vmem:[#allocation2 + $0x30] sm:$0xff]
        %v1389 = vld [vmem:[#allocation2 + $0x38] sm:$0xff]
        %v1390 = vld [vmem:[#allocation2 + $0x40] sm:$0xff]
        %v1391 = vld [vmem:[#allocation2 + $0x48] sm:$0xff]
        %v1392 = vld [vmem:[#allocation2 + $0x50] sm:$0xff]
        %v1393 = vld [vmem:[#allocation2 + $0x58] sm:$0xff]
        %v1394 = vld [vmem:[#allocation2 + $0x60] sm:$0xff]
        %v1395 = vld [vmem:[#allocation2 + $0x68] sm:$0xff]
        %v1396 = vld [vmem:[#allocation2 + $0x70] sm:$0xff]
        %v1397 = vld [vmem:[#allocation2 + $0x78] sm:$0xff]
        %v1398 = vld [vmem:[#allocation2 + $0x80] sm:$0xff]
        %v1399 = vld [vmem:[#allocation2 + $0x88] sm:$0xff]
        %v1400 = vld [vmem:[#allocation2 + $0x90] sm:$0xff]
        %v1401 = vld [vmem:[#allocation2 + $0x98] sm:$0xff]
        %v1402 = vld [vmem:[#allocation2 + $0xa0] sm:$0xff]
        %v1403 = vld [vmem:[#allocation2 + $0xa8] sm:$0xff]
        %v1404 = vld [vmem:[#allocation2 + $0xb0] sm:$0xff]
        %v1405 = vld [vmem:[#allocation2 + $0xb8] sm:$0xff]
        %v1406 = vld [vmem:[#allocation2 + $0xc0] sm:$0xff]
        %v1407 = vld [vmem:[#allocation2 + $0xc8] sm:$0xff]
        %v1408 = vld [vmem:[#allocation2 + $0xd0] sm:$0xff]
        %v1409 = vld [vmem:[#allocation2 + $0xd8] sm:$0xff]
        %v1410 = vld [vmem:[#allocation2 + $0xe0] sm:$0xff]
        %v1411 = vld [vmem:[#allocation2 + $0xe8] sm:$0xff]
        %v1412 = vld [vmem:[#allocation2 + $0xf0] sm:$0xff]
        %v1413 = vld [vmem:[#allocation2 + $0xf8] sm:$0xff]
        %v1414 = vld [vmem:[#allocation2 + $0x100] sm:$0xff]
        %v1415 = vld [vmem:[#allocation2 + $0x108] sm:$0xff]
        %v1416 = vld [vmem:[#allocation2 + $0x110] sm:$0xff]
        %v1417 = vld [vmem:[#allocation2 + $0x118] sm:$0xff]
        %v1418 = vld [vmem:[#allocation2 + $0x120] sm:$0xff]
        %v1419 = vld [vmem:[#allocation2 + $0x128] sm:$0xff]
        %v1420 = vld [vmem:[#allocation2 + $0x130] sm:$0xff]
        %v1421 = vld [vmem:[#allocation2 + $0x138] sm:$0xff]
        %v1422 = vld [vmem:[#allocation2 + $0x140] sm:$0xff]
        %v1423 = vld [vmem:[#allocation2 + $0x148] sm:$0xff]
        %v1424 = vld [vmem:[#allocation2 + $0x150] sm:$0xff]
        %v1425 = vld [vmem:[#allocation2 + $0x158] sm:$0xff]
        %v1426 = vld [vmem:[#allocation2 + $0x160] sm:$0xff]
        %v1427 = vld [vmem:[#allocation2 + $0x168] sm:$0xff]
        %v1428 = vld [vmem:[#allocation2 + $0x170] sm:$0xff]
        %v1429 = vld [vmem:[#allocation2 + $0x178] sm:$0xff]
        %v1430 = vld [vmem:[#allocation2 + $0x180] sm:$0xff]
        %v1431 = vld [vmem:[#allocation2 + $0x188] sm:$0xff]
        %v1432 = vld [vmem:[#allocation2 + $0x190] sm:$0xff]
        %v1433 = vld [vmem:[#allocation2 + $0x198] sm:$0xff]
        %v1434 = vld [vmem:[#allocation2 + $0x1a0] sm:$0xff]
        %v1435 = vld [vmem:[#allocation2 + $0x1a8] sm:$0xff]
        %v1436 = vld [vmem:[#allocation2 + $0x1b0] sm:$0xff]
        %v1437 = vld [vmem:[#allocation2 + $0x1b8] sm:$0xff]
        %v1438 = vld [vmem:[#allocation2 + $0x1c0] sm:$0xff]
        %v1439 = vld [vmem:[#allocation2 + $0x1c8] sm:$0xff]
        %v1440 = vld [vmem:[#allocation2 + $0x1d0] sm:$0xff]
        %v1441 = vld [vmem:[#allocation2 + $0x1d8] sm:$0xff]
        %v1442 = vld [vmem:[#allocation2 + $0x1e0] sm:$0xff]
        %v1443 = vld [vmem:[#allocation2 + $0x1e8] sm:$0xff]
        %v1444 = vld [vmem:[#allocation2 + $0x1f0] sm:$0xff]
        %v1445 = vld [vmem:[#allocation2 + $0x1f8] sm:$0xff]
        %v1446 = vpack.c.bf16 %v1383, %v1382
        %v1447 = vpack.c.bf16 %v1385, %v1384
        %v1448 = vpack.c.bf16 %v1387, %v1386
        %v1449 = vpack.c.bf16 %v1389, %v1388
        %v1450 = vpack.c.bf16 %v1391, %v1390
        %v1451 = vpack.c.bf16 %v1393, %v1392
        %v1452 = vpack.c.bf16 %v1395, %v1394
        %v1453 = vpack.c.bf16 %v1397, %v1396
        %v1454 = vpack.c.bf16 %v1399, %v1398
        %v1455 = vpack.c.bf16 %v1401, %v1400
        %v1456 = vpack.c.bf16 %v1403, %v1402
        %v1457 = vpack.c.bf16 %v1405, %v1404
        %v1458 = vpack.c.bf16 %v1407, %v1406
        %v1459 = vpack.c.bf16 %v1409, %v1408
        %v1460 = vpack.c.bf16 %v1411, %v1410
        %v1461 = vpack.c.bf16 %v1413, %v1412
        %v1462 = vpack.c.bf16 %v1415, %v1414
        %v1463 = vpack.c.bf16 %v1417, %v1416
        %v1464 = vpack.c.bf16 %v1419, %v1418
        %v1465 = vpack.c.bf16 %v1421, %v1420
        %v1466 = vpack.c.bf16 %v1423, %v1422
        %v1467 = vpack.c.bf16 %v1425, %v1424
        %v1468 = vpack.c.bf16 %v1427, %v1426
        %v1469 = vpack.c.bf16 %v1429, %v1428
        %v1470 = vpack.c.bf16 %v1431, %v1430
        %v1471 = vpack.c.bf16 %v1433, %v1432
        %v1472 = vpack.c.bf16 %v1435, %v1434
        %v1473 = vpack.c.bf16 %v1437, %v1436
        %v1474 = vpack.c.bf16 %v1439, %v1438
        %v1475 = vpack.c.bf16 %v1441, %v1440
        %v1476 = vpack.c.bf16 %v1443, %v1442
        %v1477 = vpack.c.bf16 %v1445, %v1444
        %v1510 = vunpack.c.l.b16 %v1446
        %v1511 = vunpack.c.h.b16 %v1446
        %v1512 = vunpack.c.l.b16 %v1447
        %v1513 = vunpack.c.h.b16 %v1447
        %v1514 = vunpack.c.l.b16 %v1448
        %v1515 = vunpack.c.h.b16 %v1448
        %v1516 = vunpack.c.l.b16 %v1449
        %v1517 = vunpack.c.h.b16 %v1449
        %v1518 = vunpack.c.l.b16 %v1450
        %v1519 = vunpack.c.h.b16 %v1450
        %v1520 = vunpack.c.l.b16 %v1451
        %v1521 = vunpack.c.h.b16 %v1451
        %v1522 = vunpack.c.l.b16 %v1452
        %v1523 = vunpack.c.h.b16 %v1452
        %v1524 = vunpack.c.l.b16 %v1453
        %v1525 = vunpack.c.h.b16 %v1453
        %v1526 = vunpack.c.l.b16 %v1454
        %v1527 = vunpack.c.h.b16 %v1454
        %v1528 = vunpack.c.l.b16 %v1455
        %v1529 = vunpack.c.h.b16 %v1455
        %v1530 = vunpack.c.l.b16 %v1456
        %v1531 = vunpack.c.h.b16 %v1456
        %v1532 = vunpack.c.l.b16 %v1457
        %v1533 = vunpack.c.h.b16 %v1457
        %v1534 = vunpack.c.l.b16 %v1458
        %v1535 = vunpack.c.h.b16 %v1458
        %v1536 = vunpack.c.l.b16 %v1459
        %v1537 = vunpack.c.h.b16 %v1459
        %v1538 = vunpack.c.l.b16 %v1460
        %v1539 = vunpack.c.h.b16 %v1460
        %v1540 = vunpack.c.l.b16 %v1461
        %v1541 = vunpack.c.h.b16 %v1461
        %v1542 = vunpack.c.l.b16 %v1462
        %v1543 = vunpack.c.h.b16 %v1462
        %v1544 = vunpack.c.l.b16 %v1463
        %v1545 = vunpack.c.h.b16 %v1463
        %v1546 = vunpack.c.l.b16 %v1464
        %v1547 = vunpack.c.h.b16 %v1464
        %v1548 = vunpack.c.l.b16 %v1465
        %v1549 = vunpack.c.h.b16 %v1465
        %v1550 = vunpack.c.l.b16 %v1466
        %v1551 = vunpack.c.h.b16 %v1466
        %v1552 = vunpack.c.l.b16 %v1467
        %v1553 = vunpack.c.h.b16 %v1467
        %v1554 = vunpack.c.l.b16 %v1468
        %v1555 = vunpack.c.h.b16 %v1468
        %v1556 = vunpack.c.l.b16 %v1469
        %v1557 = vunpack.c.h.b16 %v1469
        %v1558 = vunpack.c.l.b16 %v1470
        %v1559 = vunpack.c.h.b16 %v1470
        %v1560 = vunpack.c.l.b16 %v1471
        %v1561 = vunpack.c.h.b16 %v1471
        %v1562 = vunpack.c.l.b16 %v1472
        %v1563 = vunpack.c.h.b16 %v1472
        %v1564 = vunpack.c.l.b16 %v1473
        %v1565 = vunpack.c.h.b16 %v1473
        %v1566 = vunpack.c.l.b16 %v1474
        %v1567 = vunpack.c.h.b16 %v1474
        %v1568 = vunpack.c.l.b16 %v1475
        %v1569 = vunpack.c.h.b16 %v1475
        %v1570 = vunpack.c.l.b16 %v1476
        %v1571 = vunpack.c.h.b16 %v1476
        %v1572 = vunpack.c.l.b16 %v1477
        %v1573 = vunpack.c.h.b16 %v1477
        %v1574 = vpack.c.b16 %v1510, %v1510
        %v1575 = vpack.c.b16 %v1511, %v1511
        %v1576 = vpack.c.b16 %v1512, %v1512
        %v1577 = vpack.c.b16 %v1513, %v1513
        %v1578 = vpack.c.b16 %v1514, %v1514
        %v1579 = vpack.c.b16 %v1515, %v1515
        %v1580 = vpack.c.b16 %v1516, %v1516
        %v1581 = vpack.c.b16 %v1517, %v1517
        %v1582 = vpack.c.b16 %v1518, %v1518
        %v1583 = vpack.c.b16 %v1519, %v1519
        %v1584 = vpack.c.b16 %v1520, %v1520
        %v1585 = vpack.c.b16 %v1521, %v1521
        %v1586 = vpack.c.b16 %v1522, %v1522
        %v1587 = vpack.c.b16 %v1523, %v1523
        %v1588 = vpack.c.b16 %v1524, %v1524
        %v1589 = vpack.c.b16 %v1525, %v1525
        %v1590 = vpack.c.b16 %v1526, %v1526
        %v1591 = vpack.c.b16 %v1527, %v1527
        %v1592 = vpack.c.b16 %v1528, %v1528
        %v1593 = vpack.c.b16 %v1529, %v1529
        %v1594 = vpack.c.b16 %v1530, %v1530
        %v1595 = vpack.c.b16 %v1531, %v1531
        %v1596 = vpack.c.b16 %v1532, %v1532
        %v1597 = vpack.c.b16 %v1533, %v1533
        %v1598 = vpack.c.b16 %v1534, %v1534
        %v1599 = vpack.c.b16 %v1535, %v1535
        %v1600 = vpack.c.b16 %v1536, %v1536
        %v1601 = vpack.c.b16 %v1537, %v1537
        %v1602 = vpack.c.b16 %v1538, %v1538
        %v1603 = vpack.c.b16 %v1539, %v1539
        %v1604 = vpack.c.b16 %v1540, %v1540
        %v1605 = vpack.c.b16 %v1541, %v1541
        %v1606 = vpack.c.b16 %v1542, %v1542
        %v1607 = vpack.c.b16 %v1543, %v1543
        %v1608 = vpack.c.b16 %v1544, %v1544
        %v1609 = vpack.c.b16 %v1545, %v1545
        %v1610 = vpack.c.b16 %v1546, %v1546
        %v1611 = vpack.c.b16 %v1547, %v1547
        %v1612 = vpack.c.b16 %v1548, %v1548
        %v1613 = vpack.c.b16 %v1549, %v1549
        %v1614 = vpack.c.b16 %v1550, %v1550
        %v1615 = vpack.c.b16 %v1551, %v1551
        %v1616 = vpack.c.b16 %v1552, %v1552
        %v1617 = vpack.c.b16 %v1553, %v1553
        %v1618 = vpack.c.b16 %v1554, %v1554
        %v1619 = vpack.c.b16 %v1555, %v1555
        %v1620 = vpack.c.b16 %v1556, %v1556
        %v1621 = vpack.c.b16 %v1557, %v1557
        %v1622 = vpack.c.b16 %v1558, %v1558
        %v1623 = vpack.c.b16 %v1559, %v1559
        %v1624 = vpack.c.b16 %v1560, %v1560
        %v1625 = vpack.c.b16 %v1561, %v1561
        %v1626 = vpack.c.b16 %v1562, %v1562
        %v1627 = vpack.c.b16 %v1563, %v1563
        %v1628 = vpack.c.b16 %v1564, %v1564
        %v1629 = vpack.c.b16 %v1565, %v1565
        %v1630 = vpack.c.b16 %v1566, %v1566
        %v1631 = vpack.c.b16 %v1567, %v1567
        %v1632 = vpack.c.b16 %v1568, %v1568
        %v1633 = vpack.c.b16 %v1569, %v1569
        %v1634 = vpack.c.b16 %v1570, %v1570
        %v1635 = vpack.c.b16 %v1571, %v1571
        %v1636 = vpack.c.b16 %v1572, %v1572
        %v1637 = vpack.c.b16 %v1573, %v1573
        %1702 = vst [vmem:[%s301] sm:$0xf] %v1574
        %1703 = vst [vmem:[%s301 + $0x4] sm:$0xf] %v1575
        %1704 = vst [vmem:[%s301 + $0x8] sm:$0xf] %v1576
        %1705 = vst [vmem:[%s301 + $0xc] sm:$0xf] %v1577
        %1706 = vst [vmem:[%s301 + $0x10] sm:$0xf] %v1578
        %1707 = vst [vmem:[%s301 + $0x14] sm:$0xf] %v1579
        %1708 = vst [vmem:[%s301 + $0x18] sm:$0xf] %v1580
        %1709 = vst [vmem:[%s301 + $0x1c] sm:$0xf] %v1581
        %1710 = vst [vmem:[%s301 + $0x20] sm:$0xf] %v1582
        %1711 = vst [vmem:[%s301 + $0x24] sm:$0xf] %v1583
        %1712 = vst [vmem:[%s301 + $0x28] sm:$0xf] %v1584
        %1713 = vst [vmem:[%s301 + $0x2c] sm:$0xf] %v1585
        %1714 = vst [vmem:[%s301 + $0x30] sm:$0xf] %v1586
        %1715 = vst [vmem:[%s301 + $0x34] sm:$0xf] %v1587
        %1716 = vst [vmem:[%s301 + $0x38] sm:$0xf] %v1588
        %1717 = vst [vmem:[%s301 + $0x3c] sm:$0xf] %v1589
        %1718 = vst [vmem:[%s301 + $0x40] sm:$0xf] %v1590
        %1719 = vst [vmem:[%s301 + $0x44] sm:$0xf] %v1591
        %1720 = vst [vmem:[%s301 + $0x48] sm:$0xf] %v1592
        %1721 = vst [vmem:[%s301 + $0x4c] sm:$0xf] %v1593
        %1722 = vst [vmem:[%s301 + $0x50] sm:$0xf] %v1594
        %1723 = vst [vmem:[%s301 + $0x54] sm:$0xf] %v1595
        %1724 = vst [vmem:[%s301 + $0x58] sm:$0xf] %v1596
        %1725 = vst [vmem:[%s301 + $0x5c] sm:$0xf] %v1597
        %1726 = vst [vmem:[%s301 + $0x60] sm:$0xf] %v1598
        %1727 = vst [vmem:[%s301 + $0x64] sm:$0xf] %v1599
        %1728 = vst [vmem:[%s301 + $0x68] sm:$0xf] %v1600
        %1729 = vst [vmem:[%s301 + $0x6c] sm:$0xf] %v1601
        %1730 = vst [vmem:[%s301 + $0x70] sm:$0xf] %v1602
        %1731 = vst [vmem:[%s301 + $0x74] sm:$0xf] %v1603
        %1732 = vst [vmem:[%s301 + $0x78] sm:$0xf] %v1604
        %1733 = vst [vmem:[%s301 + $0x7c] sm:$0xf] %v1605
        %1734 = vst [vmem:[%s301 + $0x80] sm:$0xf] %v1606
        %1735 = vst [vmem:[%s301 + $0x84] sm:$0xf] %v1607
        %1736 = vst [vmem:[%s301 + $0x88] sm:$0xf] %v1608
        %1737 = vst [vmem:[%s301 + $0x8c] sm:$0xf] %v1609
        %1738 = vst [vmem:[%s301 + $0x90] sm:$0xf] %v1610
        %1739 = vst [vmem:[%s301 + $0x94] sm:$0xf] %v1611
        %1740 = vst [vmem:[%s301 + $0x98] sm:$0xf] %v1612
        %1741 = vst [vmem:[%s301 + $0x9c] sm:$0xf] %v1613
        %1742 = vst [vmem:[%s301 + $0xa0] sm:$0xf] %v1614
        %1743 = vst [vmem:[%s301 + $0xa4] sm:$0xf] %v1615
        %1744 = vst [vmem:[%s301 + $0xa8] sm:$0xf] %v1616
        %1745 = vst [vmem:[%s301 + $0xac] sm:$0xf] %v1617
        %1746 = vst [vmem:[%s301 + $0xb0] sm:$0xf] %v1618
        %1747 = vst [vmem:[%s301 + $0xb4] sm:$0xf] %v1619
        %1748 = vst [vmem:[%s301 + $0xb8] sm:$0xf] %v1620
        %1749 = vst [vmem:[%s301 + $0xbc] sm:$0xf] %v1621
        %1750 = vst [vmem:[%s301 + $0xc0] sm:$0xf] %v1622
        %1751 = vst [vmem:[%s301 + $0xc4] sm:$0xf] %v1623
        %1752 = vst [vmem:[%s301 + $0xc8] sm:$0xf] %v1624
        %1753 = vst [vmem:[%s301 + $0xcc] sm:$0xf] %v1625
        %1754 = vst [vmem:[%s301 + $0xd0] sm:$0xf] %v1626
        %1755 = vst [vmem:[%s301 + $0xd4] sm:$0xf] %v1627
        %1756 = vst [vmem:[%s301 + $0xd8] sm:$0xf] %v1628
        %1757 = vst [vmem:[%s301 + $0xdc] sm:$0xf] %v1629
        %1758 = vst [vmem:[%s301 + $0xe0] sm:$0xf] %v1630
        %1759 = vst [vmem:[%s301 + $0xe4] sm:$0xf] %v1631
        %1760 = vst [vmem:[%s301 + $0xe8] sm:$0xf] %v1632
        %1761 = vst [vmem:[%s301 + $0xec] sm:$0xf] %v1633
        %1762 = vst [vmem:[%s301 + $0xf0] sm:$0xf] %v1634
        %1763 = vst [vmem:[%s301 + $0xf4] sm:$0xf] %v1635
        %1764 = vst [vmem:[%s301 + $0xf8] sm:$0xf] %v1636
        %1765 = vst [vmem:[%s301 + $0xfc] sm:$0xf] %v1637
        %v1766 = vadd.f32 %v1382, %v1383
        %v1767 = vadd.f32 %v1766, %v1384
        %v1768 = vadd.f32 %v1767, %v1385
        %v1769 = vadd.f32 %v1768, %v1386
        %v1770 = vadd.f32 %v1769, %v1387
        %v1771 = vadd.f32 %v1770, %v1388
        %v1772 = vadd.f32 %v1771, %v1389
        %v1773 = vadd.f32 %v1772, %v1390
        %v1774 = vadd.f32 %v1773, %v1391
        %v1775 = vadd.f32 %v1774, %v1392
        %v1776 = vadd.f32 %v1775, %v1393
        %v1777 = vadd.f32 %v1776, %v1394
        %v1778 = vadd.f32 %v1777, %v1395
        %v1779 = vadd.f32 %v1778, %v1396
        %v1780 = vadd.f32 %v1779, %v1397
        %v1781 = vadd.f32 %v1780, %v1398
        %v1782 = vadd.f32 %v1781, %v1399
        %v1783 = vadd.f32 %v1782, %v1400
        %v1784 = vadd.f32 %v1783, %v1401
        %v1785 = vadd.f32 %v1784, %v1402
        %v1786 = vadd.f32 %v1785, %v1403
        %v1787 = vadd.f32 %v1786, %v1404
        %v1788 = vadd.f32 %v1787, %v1405
        %v1789 = vadd.f32 %v1788, %v1406
        %v1790 = vadd.f32 %v1789, %v1407
        %v1791 = vadd.f32 %v1790, %v1408
        %v1792 = vadd.f32 %v1791, %v1409
        %v1793 = vadd.f32 %v1792, %v1410
        %v1794 = vadd.f32 %v1793, %v1411
        %v1795 = vadd.f32 %v1794, %v1412
        %v1796 = vadd.f32 %v1795, %v1413
        %v1797 = vadd.f32 %v1796, %v1414
        %v1798 = vadd.f32 %v1797, %v1415
        %v1799 = vadd.f32 %v1798, %v1416
        %v1800 = vadd.f32 %v1799, %v1417
        %v1801 = vadd.f32 %v1800, %v1418
        %v1802 = vadd.f32 %v1801, %v1419
        %v1803 = vadd.f32 %v1802, %v1420
        %v1804 = vadd.f32 %v1803, %v1421
        %v1805 = vadd.f32 %v1804, %v1422
        %v1806 = vadd.f32 %v1805, %v1423
        %v1807 = vadd.f32 %v1806, %v1424
        %v1808 = vadd.f32 %v1807, %v1425
        %v1809 = vadd.f32 %v1808, %v1426
        %v1810 = vadd.f32 %v1809, %v1427
        %v1811 = vadd.f32 %v1810, %v1428
        %v1812 = vadd.f32 %v1811, %v1429
        %v1813 = vadd.f32 %v1812, %v1430
        %v1814 = vadd.f32 %v1813, %v1431
        %v1815 = vadd.f32 %v1814, %v1432
        %v1816 = vadd.f32 %v1815, %v1433
        %v1817 = vadd.f32 %v1816, %v1434
        %v1818 = vadd.f32 %v1817, %v1435
        %v1819 = vadd.f32 %v1818, %v1436
        %v1820 = vadd.f32 %v1819, %v1437
        %v1821 = vadd.f32 %v1820, %v1438
        %v1822 = vadd.f32 %v1821, %v1439
        %v1823 = vadd.f32 %v1822, %v1440
        %v1824 = vadd.f32 %v1823, %v1441
        %v1825 = vadd.f32 %v1824, %v1442
        %v1826 = vadd.f32 %v1825, %v1443
        %v1827 = vadd.f32 %v1826, %v1444
        %v1828 = vadd.f32 %v1827, %v1445
        %v1829 = vrot.slane %v1828, 4
        %v1830 = vadd.f32 %v1828, %v1829
        %v1831 = vrot.slane %v1830, 2
        %v1832 = vadd.f32 %v1830, %v1831
        %v1833 = vrot.slane %v1832, 1
        %v1834 = vadd.f32 %v1832, %v1833
        %v1835 = vmul.f32 %v1382, %v1382
        %v1836 = vmul.f32 %v1383, %v1383
        %v1837 = vmul.f32 %v1384, %v1384
        %v1838 = vmul.f32 %v1385, %v1385
        %v1839 = vmul.f32 %v1386, %v1386
        %v1840 = vmul.f32 %v1387, %v1387
        %v1841 = vmul.f32 %v1388, %v1388
        %v1842 = vmul.f32 %v1389, %v1389
        %v1843 = vmul.f32 %v1390, %v1390
        %v1844 = vmul.f32 %v1391, %v1391
        %v1845 = vmul.f32 %v1392, %v1392
        %v1846 = vmul.f32 %v1393, %v1393
        %v1847 = vmul.f32 %v1394, %v1394
        %v1848 = vmul.f32 %v1395, %v1395
        %v1849 = vmul.f32 %v1396, %v1396
        %v1850 = vmul.f32 %v1397, %v1397
        %v1851 = vmul.f32 %v1398, %v1398
        %v1852 = vmul.f32 %v1399, %v1399
        %v1853 = vmul.f32 %v1400, %v1400
        %v1854 = vmul.f32 %v1401, %v1401
        %v1855 = vmul.f32 %v1402, %v1402
        %v1856 = vmul.f32 %v1403, %v1403
        %v1857 = vmul.f32 %v1404, %v1404
        %v1858 = vmul.f32 %v1405, %v1405
        %v1859 = vmul.f32 %v1406, %v1406
        %v1860 = vmul.f32 %v1407, %v1407
        %v1861 = vmul.f32 %v1408, %v1408
        %v1862 = vmul.f32 %v1409, %v1409
        %v1863 = vmul.f32 %v1410, %v1410
        %v1864 = vmul.f32 %v1411, %v1411
        %v1865 = vmul.f32 %v1412, %v1412
        %v1866 = vmul.f32 %v1413, %v1413
        %v1867 = vmul.f32 %v1414, %v1414
        %v1868 = vmul.f32 %v1415, %v1415
        %v1869 = vmul.f32 %v1416, %v1416
        %v1870 = vmul.f32 %v1417, %v1417
        %v1871 = vmul.f32 %v1418, %v1418
        %v1872 = vmul.f32 %v1419, %v1419
        %v1873 = vmul.f32 %v1420, %v1420
        %v1874 = vmul.f32 %v1421, %v1421
        %v1875 = vmul.f32 %v1422, %v1422
        %v1876 = vmul.f32 %v1423, %v1423
        %v1877 = vmul.f32 %v1424, %v1424
        %v1878 = vmul.f32 %v1425, %v1425
        %v1879 = vmul.f32 %v1426, %v1426
        %v1880 = vmul.f32 %v1427, %v1427
        %v1881 = vmul.f32 %v1428, %v1428
        %v1882 = vmul.f32 %v1429, %v1429
        %v1883 = vmul.f32 %v1430, %v1430
        %v1884 = vmul.f32 %v1431, %v1431
        %v1885 = vmul.f32 %v1432, %v1432
        %v1886 = vmul.f32 %v1433, %v1433
        %v1887 = vmul.f32 %v1434, %v1434
        %v1888 = vmul.f32 %v1435, %v1435
        %v1889 = vmul.f32 %v1436, %v1436
        %v1890 = vmul.f32 %v1437, %v1437
        %v1891 = vmul.f32 %v1438, %v1438
        %v1892 = vmul.f32 %v1439, %v1439
        %v1893 = vmul.f32 %v1440, %v1440
        %v1894 = vmul.f32 %v1441, %v1441
        %v1895 = vmul.f32 %v1442, %v1442
        %v1896 = vmul.f32 %v1443, %v1443
        %v1897 = vmul.f32 %v1444, %v1444
        %v1898 = vmul.f32 %v1445, %v1445
        %v1899 = vadd.f32 %v1835, %v1836
        %v1900 = vadd.f32 %v1899, %v1837
        %v1901 = vadd.f32 %v1900, %v1838
        %v1902 = vadd.f32 %v1901, %v1839
        %v1903 = vadd.f32 %v1902, %v1840
        %v1904 = vadd.f32 %v1903, %v1841
        %v1905 = vadd.f32 %v1904, %v1842
        %v1906 = vadd.f32 %v1905, %v1843
        %v1907 = vadd.f32 %v1906, %v1844
        %v1908 = vadd.f32 %v1907, %v1845
        %v1909 = vadd.f32 %v1908, %v1846
        %v1910 = vadd.f32 %v1909, %v1847
        %v1911 = vadd.f32 %v1910, %v1848
        %v1912 = vadd.f32 %v1911, %v1849
        %v1913 = vadd.f32 %v1912, %v1850
        %v1914 = vadd.f32 %v1913, %v1851
        %v1915 = vadd.f32 %v1914, %v1852
        %v1916 = vadd.f32 %v1915, %v1853
        %v1917 = vadd.f32 %v1916, %v1854
        %v1918 = vadd.f32 %v1917, %v1855
        %v1919 = vadd.f32 %v1918, %v1856
        %v1920 = vadd.f32 %v1919, %v1857
        %v1921 = vadd.f32 %v1920, %v1858
        %v1922 = vadd.f32 %v1921, %v1859
        %v1923 = vadd.f32 %v1922, %v1860
        %v1924 = vadd.f32 %v1923, %v1861
        %v1925 = vadd.f32 %v1924, %v1862
        %v1926 = vadd.f32 %v1925, %v1863
        %v1927 = vadd.f32 %v1926, %v1864
        %v1928 = vadd.f32 %v1927, %v1865
        %v1929 = vadd.f32 %v1928, %v1866
        %v1930 = vadd.f32 %v1929, %v1867
        %v1931 = vadd.f32 %v1930, %v1868
        %v1932 = vadd.f32 %v1931, %v1869
        %v1933 = vadd.f32 %v1932, %v1870
        %v1934 = vadd.f32 %v1933, %v1871
        %v1935 = vadd.f32 %v1934, %v1872
        %v1936 = vadd.f32 %v1935, %v1873
        %v1937 = vadd.f32 %v1936, %v1874
        %v1938 = vadd.f32 %v1937, %v1875
        %v1939 = vadd.f32 %v1938, %v1876
        %v1940 = vadd.f32 %v1939, %v1877
        %v1941 = vadd.f32 %v1940, %v1878
        %v1942 = vadd.f32 %v1941, %v1879
        %v1943 = vadd.f32 %v1942, %v1880
        %v1944 = vadd.f32 %v1943, %v1881
        %v1945 = vadd.f32 %v1944, %v1882
        %v1946 = vadd.f32 %v1945, %v1883
        %v1947 = vadd.f32 %v1946, %v1884
        %v1948 = vadd.f32 %v1947, %v1885
        %v1949 = vadd.f32 %v1948, %v1886
        %v1950 = vadd.f32 %v1949, %v1887
        %v1951 = vadd.f32 %v1950, %v1888
        %v1952 = vadd.f32 %v1951, %v1889
        %v1953 = vadd.f32 %v1952, %v1890
        %v1954 = vadd.f32 %v1953, %v1891
        %v1955 = vadd.f32 %v1954, %v1892
        %v1956 = vadd.f32 %v1955, %v1893
        %v1957 = vadd.f32 %v1956, %v1894
        %v1958 = vadd.f32 %v1957, %v1895
        %v1959 = vadd.f32 %v1958, %v1896
        %v1960 = vadd.f32 %v1959, %v1897
        %v1961 = vadd.f32 %v1960, %v1898
        %v1962 = vrot.slane %v1961, 4
        %v1963 = vadd.f32 %v1961, %v1962
        %v1964 = vrot.slane %v1963, 2
        %v1965 = vadd.f32 %v1963, %v1964
        %v1966 = vrot.slane %v1965, 1
        %v1967 = vadd.f32 %v1965, %v1966
        %1968 = vst [vmem:[%s309] sm:$0xff] %v1834
        %1969 = vst [vmem:[%s316] sm:$0xff] %v1967
      $region36: #{conv_bn_leaky.2} parent=27 // pred_fallthru
        _
      %s1970 = smul.u32 64, %s21
      %p1971 = scmp.lt.s32.totalorder %s1970, 255
      %s1972 = scalar_select %p1971, %s1970, 255
      %p1973 = scmp.lt.s32.totalorder %s22, 0
      %s1974 = scalar_select %p1973, %s22, 0
      %s1975 = sadd.s32 %s1974, %s1972
      %s1976 = smul.addr %s1975, 4
      %s1977 = scalar_lea.vmem %s2, %s1976
      %p1978 = scmp.lt.s32.totalorder %s21, 3
      %s1979 = scalar_select %p1978, %s21, 3
      %p1980 = scmp.lt.s32.totalorder %s22, 0
      %s1981 = scalar_select %p1980, %s22, 0
      %s1982 = sadd.s32 %s1981, %s1979
      %s1983 = smul.addr %s1982, 8
      %s1984 = scalar_lea.vmem %s3, %s1983
      %p1985 = scmp.lt.s32.totalorder %s21, 3
      %s1986 = scalar_select %p1985, %s21, 3
      %p1987 = scmp.lt.s32.totalorder %s22, 0
      %s1988 = scalar_select %p1987, %s22, 0
      %s1989 = sadd.s32 %s1988, %s1986
      %s1990 = smul.addr %s1989, 8
      %s1991 = scalar_lea.vmem %s4, %s1990
      // Predicated region
      $region37: #{conv_bn_leaky.2} parent=27 // pred_check
        %p1992 = pneg %p111
      $region38: #{conv_bn_leaky.2} parent=27 // pred_check_branch
        %1994 = sbr.rel (%p1992) target = $region40
      $region39: #{conv_bn_leaky.2} parent=27 // pred_region
        %s1995 = smul.u32 64, %s21
      $region40: #{conv_bn_leaky.2} parent=27 // pred_fallthru
        _
      // Predicated region
      $region41: #{conv_bn_leaky.2} parent=27 // pred_check
        %p1996 = pneg %p139
      $region42: #{conv_bn_leaky.2} parent=27 // pred_check_branch
        %1998 = sbr.rel (%p1996) target = $region44
      $region43: #{conv_bn_leaky.2} parent=27 // pred_region
        _
      $region44: #{conv_bn_leaky.2} parent=27 // pred_fallthru
        _
      // Predicated region
      $region45: #{conv_bn_leaky.2} parent=27 // pred_check
        %p1999 = pneg %p167
      $region46: #{conv_bn_leaky.2} parent=27 // pred_check_branch
        %2001 = sbr.rel (%p1999) target = $region48
      $region47: #{conv_bn_leaky.2} parent=27 // pred_region
        _
      $region48: #{conv_bn_leaky.2} parent=27 // pred_fallthru
        _
    $region28: #{conv_bn_leaky.2} parent=5 // pred_fallthru
      _
    %p2002 = scmp.le.s32.totalorder 2, %s11
    // Predicated region
    $region49: #{conv_bn_leaky.2} parent=5 // pred_check
      %p2003 = pneg %p2002
    $region50: #{conv_bn_leaky.2} parent=5 // pred_check_branch
      %2005 = sbr.rel (%p2003) target = $region52
    $region51: #{conv_bn_leaky.2} parent=5 // pred_region
      %s2006 = ssub.s32 %s11, 2
      // Predicated region
      $region53: #{conv_bn_leaky.2} parent=51 // pred_check
        %p2007 = pneg %p117
      $region54: #{conv_bn_leaky.2} parent=51 // pred_check_branch
        %2009 = sbr.rel (%p2007) target = $region56
      $region55: #{conv_bn_leaky.2} parent=51 // pred_region
        %s2010 = smul.u32 64, %s24
        %p2011 = scmp.lt.s32.totalorder %s2010, 255
        %s2012 = scalar_select %p2011, %s2010, 255
        %p2013 = scmp.lt.s32.totalorder %s25, 0
        %s2014 = scalar_select %p2013, %s25, 0
        %s2015 = sadd.s32 %s2014, %s2012
        %s2016 = smul.addr %s2015, 4
        %s2017 = scalar_lea.vmem %s2, %s2016
      $region56: #{conv_bn_leaky.2} parent=51 // pred_fallthru
        _
      // Predicated region
      $region57: #{conv_bn_leaky.2} parent=51 // pred_check
        %p2018 = pneg %p145
      $region58: #{conv_bn_leaky.2} parent=51 // pred_check_branch
        %2020 = sbr.rel (%p2018) target = $region60
      $region59: #{conv_bn_leaky.2} parent=51 // pred_region
        %p2021 = scmp.lt.s32.totalorder %s24, 3
        %s2022 = scalar_select %p2021, %s24, 3
        %p2023 = scmp.lt.s32.totalorder %s25, 0
        %s2024 = scalar_select %p2023, %s25, 0
        %s2025 = sadd.s32 %s2024, %s2022
        %s2026 = smul.addr %s2025, 8
        %s2027 = scalar_lea.vmem %s3, %s2026
      $region60: #{conv_bn_leaky.2} parent=51 // pred_fallthru
        _
      // Predicated region
      $region61: #{conv_bn_leaky.2} parent=51 // pred_check
        %p2028 = pneg %p173
      $region62: #{conv_bn_leaky.2} parent=51 // pred_check_branch
        %2030 = sbr.rel (%p2028) target = $region64
      $region63: #{conv_bn_leaky.2} parent=51 // pred_region
        %p2031 = scmp.lt.s32.totalorder %s24, 3
        %s2032 = scalar_select %p2031, %s24, 3
        %p2033 = scmp.lt.s32.totalorder %s25, 0
        %s2034 = scalar_select %p2033, %s25, 0
        %s2035 = sadd.s32 %s2034, %s2032
        %s2036 = smul.addr %s2035, 8
        %s2037 = scalar_lea.vmem %s4, %s2036
      $region64: #{conv_bn_leaky.2} parent=51 // pred_fallthru
        _
    $region52: #{conv_bn_leaky.2} parent=5 // pred_fallthru
      _
  $region6: #{conv_bn_leaky.2} parent=0 // loop_footer
    %s15 = sadd.s32 1, %s11
  $region7: #{conv_bn_leaky.2} parent=0 // loop_footer_branch
    %10 = sbr.rel target = $region3
  $region8: #{conv_bn_leaky.2} parent=0 // loop_exit
    _

// kernel: conv_bn_leaky.3
$region0: #{conv_bn_leaky.3}
  #allocation0 [shape = 'u32[]', space=smem, size = 0x4, offset = 0x4, fixed_abs, tag = 'smem constant byte address 0x4 - core index']
  #allocation1 [shape = 'u32[144,128]{1,0:T(1,128)}', space=vmem, size = 0x12000, scoped, tag = 'internal scratch']
  %s0 = inlined_call_operand.vmem [shape: bf16[2048,128], index: 0, kind: input, shape index: {}]
  %s1 = inlined_call_operand.vmem [shape: f32[1,128], index: 1, kind: input, shape index: {}]
  %s2 = inlined_call_operand.vmem [shape: f32[1,128], index: 2, kind: input, shape index: {}]
  %s3 = inlined_call_operand.hbm [shape: bf16[2048,128], index: 3, kind: output, shape index: {}]
  %s4 = sld [smem:[#allocation0]]
  $region22: #{conv_bn_leaky.3} parent=0
    _
  %s6 = ssub.s32 1, %s4
  %s7 = scalar_select 0, %s6, %s4
  $region1: #{conv_bn_leaky.3} parent=0
    #allocation2 [shape = 'u8[524288]{0}', space=vmem, size = 0x80000, scoped, tag = 'output window, operand 0, single buffered']
    #allocation3 [shape = 's32[1]{0}', space=sflag, size = 0x4, scoped, tag = 'scoped memory for conv_bn_leaky.3']
    %8 = vsyncpa [#allocation3], 0
    // Predicated region
    $region2: #{conv_bn_leaky.3} parent=1 // pred_check
      _
    $region3: #{conv_bn_leaky.3} parent=1 // pred_check_branch
      %10 = sbr.rel (0) target = $region5
    $region4: #{conv_bn_leaky.3} parent=1 // pred_region
      _
    $region5: #{conv_bn_leaky.3} parent=1 // pred_fallthru
      _
    // Predicated region
    $region6: #{conv_bn_leaky.3} parent=1 // pred_check
      _
    $region7: #{conv_bn_leaky.3} parent=1 // pred_check_branch
      %12 = sbr.rel (0) target = $region9
    $region8: #{conv_bn_leaky.3} parent=1 // pred_region
      _
    $region9: #{conv_bn_leaky.3} parent=1 // pred_fallthru
      _
    // Predicated region
    $region10: #{conv_bn_leaky.3} parent=1 // pred_check
      _
    $region11: #{conv_bn_leaky.3} parent=1 // pred_check_branch
      %14 = sbr.rel (0) target = $region13
    $region12: #{conv_bn_leaky.3} parent=1 // pred_region
      _
    $region13: #{conv_bn_leaky.3} parent=1 // pred_fallthru
      _
    %v15 = vld [vmem:[%s0] sm:$0xf]
    %v16 = vld [vmem:[%s0 + $0x4] sm:$0xf]
    %v17 = vld [vmem:[%s0 + $0x8] sm:$0xf]
    %v18 = vld [vmem:[%s0 + $0xc] sm:$0xf]
    %v19 = vld [vmem:[%s0 + $0x10] sm:$0xf]
    %v20 = vld [vmem:[%s0 + $0x14] sm:$0xf]
    %v21 = vld [vmem:[%s0 + $0x18] sm:$0xf]
    %v22 = vld [vmem:[%s0 + $0x1c] sm:$0xf]
    %v23 = vld [vmem:[%s0 + $0x20] sm:$0xf]
    %v24 = vld [vmem:[%s0 + $0x24] sm:$0xf]
    %v25 = vld [vmem:[%s0 + $0x28] sm:$0xf]
    %v26 = vld [vmem:[%s0 + $0x2c] sm:$0xf]
    %v27 = vld [vmem:[%s0 + $0x30] sm:$0xf]
    %v28 = vld [vmem:[%s0 + $0x34] sm:$0xf]
    %v29 = vld [vmem:[%s0 + $0x38] sm:$0xf]
    %v30 = vld [vmem:[%s0 + $0x3c] sm:$0xf]
    %v31 = vld [vmem:[%s0 + $0x40] sm:$0xf]
    %v32 = vld [vmem:[%s0 + $0x44] sm:$0xf]
    %v33 = vld [vmem:[%s0 + $0x48] sm:$0xf]
    %v34 = vld [vmem:[%s0 + $0x4c] sm:$0xf]
    %v35 = vld [vmem:[%s0 + $0x50] sm:$0xf]
    %v36 = vld [vmem:[%s0 + $0x54] sm:$0xf]
    %v37 = vld [vmem:[%s0 + $0x58] sm:$0xf]
    %v38 = vld [vmem:[%s0 + $0x5c] sm:$0xf]
    %v39 = vld [vmem:[%s0 + $0x60] sm:$0xf]
    %v40 = vld [vmem:[%s0 + $0x64] sm:$0xf]
    %v41 = vld [vmem:[%s0 + $0x68] sm:$0xf]
    %v42 = vld [vmem:[%s0 + $0x6c] sm:$0xf]
    %v43 = vld [vmem:[%s0 + $0x70] sm:$0xf]
    %v44 = vld [vmem:[%s0 + $0x74] sm:$0xf]
    %v45 = vld [vmem:[%s0 + $0x78] sm:$0xf]
    %v46 = vld [vmem:[%s0 + $0x7c] sm:$0xf]
    %v47 = vld [vmem:[%s0 + $0x80] sm:$0xf]
    %v48 = vld [vmem:[%s0 + $0x84] sm:$0xf]
    %v49 = vld [vmem:[%s0 + $0x88] sm:$0xf]
    %v50 = vld [vmem:[%s0 + $0x8c] sm:$0xf]
    %v51 = vld [vmem:[%s0 + $0x90] sm:$0xf]
    %v52 = vld [vmem:[%s0 + $0x94] sm:$0xf]
    %v53 = vld [vmem:[%s0 + $0x98] sm:$0xf]
    %v54 = vld [vmem:[%s0 + $0x9c] sm:$0xf]
    %v55 = vld [vmem:[%s0 + $0xa0] sm:$0xf]
    %v56 = vld [vmem:[%s0 + $0xa4] sm:$0xf]
    %v57 = vld [vmem:[%s0 + $0xa8] sm:$0xf]
    %v58 = vld [vmem:[%s0 + $0xac] sm:$0xf]
    %v59 = vld [vmem:[%s0 + $0xb0] sm:$0xf]
    %v60 = vld [vmem:[%s0 + $0xb4] sm:$0xf]
    %v61 = vld [vmem:[%s0 + $0xb8] sm:$0xf]
    %v62 = vld [vmem:[%s0 + $0xbc] sm:$0xf]
    %v63 = vld [vmem:[%s0 + $0xc0] sm:$0xf]
    %v64 = vld [vmem:[%s0 + $0xc4] sm:$0xf]
    %v65 = vld [vmem:[%s0 + $0xc8] sm:$0xf]
    %v66 = vld [vmem:[%s0 + $0xcc] sm:$0xf]
    %v67 = vld [vmem:[%s0 + $0xd0] sm:$0xf]
    %v68 = vld [vmem:[%s0 + $0xd4] sm:$0xf]
    %v69 = vld [vmem:[%s0 + $0xd8] sm:$0xf]
    %v70 = vld [vmem:[%s0 + $0xdc] sm:$0xf]
    %v71 = vld [vmem:[%s0 + $0xe0] sm:$0xf]
    %v72 = vld [vmem:[%s0 + $0xe4] sm:$0xf]
    %v73 = vld [vmem:[%s0 + $0xe8] sm:$0xf]
    %v74 = vld [vmem:[%s0 + $0xec] sm:$0xf]
    %v75 = vld [vmem:[%s0 + $0xf0] sm:$0xf]
    %v76 = vld [vmem:[%s0 + $0xf4] sm:$0xf]
    %v77 = vld [vmem:[%s0 + $0xf8] sm:$0xf]
    %v78 = vld [vmem:[%s0 + $0xfc] sm:$0xf]
    %v79 = vld [vmem:[%s0 + $0x100] sm:$0xf]
    %v80 = vld [vmem:[%s0 + $0x104] sm:$0xf]
    %v81 = vld [vmem:[%s0 + $0x108] sm:$0xf]
    %v82 = vld [vmem:[%s0 + $0x10c] sm:$0xf]
    %v83 = vld [vmem:[%s0 + $0x110] sm:$0xf]
    %v84 = vld [vmem:[%s0 + $0x114] sm:$0xf]
    %v85 = vld [vmem:[%s0 + $0x118] sm:$0xf]
    %v86 = vld [vmem:[%s0 + $0x11c] sm:$0xf]
    %v87 = vld [vmem:[%s0 + $0x120] sm:$0xf]
    %v88 = vld [vmem:[%s0 + $0x124] sm:$0xf]
    %v89 = vld [vmem:[%s0 + $0x128] sm:$0xf]
    %v90 = vld [vmem:[%s0 + $0x12c] sm:$0xf]
    %v91 = vld [vmem:[%s0 + $0x130] sm:$0xf]
    %v92 = vld [vmem:[%s0 + $0x134] sm:$0xf]
    %v93 = vld [vmem:[%s0 + $0x138] sm:$0xf]
    %v94 = vld [vmem:[%s0 + $0x13c] sm:$0xf]
    %v95 = vld [vmem:[%s0 + $0x140] sm:$0xf]
    %v96 = vld [vmem:[%s0 + $0x144] sm:$0xf]
    %v97 = vld [vmem:[%s0 + $0x148] sm:$0xf]
    %v98 = vld [vmem:[%s0 + $0x14c] sm:$0xf]
    %v99 = vld [vmem:[%s0 + $0x150] sm:$0xf]
    %v100 = vld [vmem:[%s0 + $0x154] sm:$0xf]
    %v101 = vld [vmem:[%s0 + $0x158] sm:$0xf]
    %v102 = vld [vmem:[%s0 + $0x15c] sm:$0xf]
    %v103 = vld [vmem:[%s0 + $0x160] sm:$0xf]
    %v104 = vld [vmem:[%s0 + $0x164] sm:$0xf]
    %v105 = vld [vmem:[%s0 + $0x168] sm:$0xf]
    %v106 = vld [vmem:[%s0 + $0x16c] sm:$0xf]
    %v107 = vld [vmem:[%s0 + $0x170] sm:$0xf]
    %v108 = vld [vmem:[%s0 + $0x174] sm:$0xf]
    %v109 = vld [vmem:[%s0 + $0x178] sm:$0xf]
    %v110 = vld [vmem:[%s0 + $0x17c] sm:$0xf]
    %v111 = vld [vmem:[%s0 + $0x180] sm:$0xf]
    %v112 = vld [vmem:[%s0 + $0x184] sm:$0xf]
    %v113 = vld [vmem:[%s0 + $0x188] sm:$0xf]
    %v114 = vld [vmem:[%s0 + $0x18c] sm:$0xf]
    %v115 = vld [vmem:[%s0 + $0x190] sm:$0xf]
    %v116 = vld [vmem:[%s0 + $0x194] sm:$0xf]
    %v117 = vld [vmem:[%s0 + $0x198] sm:$0xf]
    %v118 = vld [vmem:[%s0 + $0x19c] sm:$0xf]
    %v119 = vld [vmem:[%s0 + $0x1a0] sm:$0xf]
    %v120 = vld [vmem:[%s0 + $0x1a4] sm:$0xf]
    %v121 = vld [vmem:[%s0 + $0x1a8] sm:$0xf]
    %v122 = vld [vmem:[%s0 + $0x1ac] sm:$0xf]
    %v123 = vld [vmem:[%s0 + $0x1b0] sm:$0xf]
    %v124 = vld [vmem:[%s0 + $0x1b4] sm:$0xf]
    %v125 = vld [vmem:[%s0 + $0x1b8] sm:$0xf]
    %v126 = vld [vmem:[%s0 + $0x1bc] sm:$0xf]
    %v127 = vld [vmem:[%s0 + $0x1c0] sm:$0xf]
    %v128 = vld [vmem:[%s0 + $0x1c4] sm:$0xf]
    %v129 = vld [vmem:[%s0 + $0x1c8] sm:$0xf]
    %v130 = vld [vmem:[%s0 + $0x1cc] sm:$0xf]
    %v131 = vld [vmem:[%s0 + $0x1d0] sm:$0xf]
    %v132 = vld [vmem:[%s0 + $0x1d4] sm:$0xf]
    %v133 = vld [vmem:[%s0 + $0x1d8] sm:$0xf]
    %v134 = vld [vmem:[%s0 + $0x1dc] sm:$0xf]
    %v135 = vld [vmem:[%s0 + $0x1e0] sm:$0xf]
    %v136 = vld [vmem:[%s0 + $0x1e4] sm:$0xf]
    %v137 = vld [vmem:[%s0 + $0x1e8] sm:$0xf]
    %v138 = vld [vmem:[%s0 + $0x1ec] sm:$0xf]
    %v139 = vld [vmem:[%s0 + $0x1f0] sm:$0xf]
    %v140 = vld [vmem:[%s0 + $0x1f4] sm:$0xf]
    %v141 = vld [vmem:[%s0 + $0x1f8] sm:$0xf]
    %v142 = vld [vmem:[%s0 + $0x1fc] sm:$0xf]
    %v143 = vld [vmem:[%s0 + $0x200] sm:$0xf]
    %v144 = vld [vmem:[%s0 + $0x204] sm:$0xf]
    %v145 = vld [vmem:[%s0 + $0x208] sm:$0xf]
    %v146 = vld [vmem:[%s0 + $0x20c] sm:$0xf]
    %v147 = vld [vmem:[%s0 + $0x210] sm:$0xf]
    %v148 = vld [vmem:[%s0 + $0x214] sm:$0xf]
    %v149 = vld [vmem:[%s0 + $0x218] sm:$0xf]
    %v150 = vld [vmem:[%s0 + $0x21c] sm:$0xf]
    %v151 = vld [vmem:[%s0 + $0x220] sm:$0xf]
    %v152 = vld [vmem:[%s0 + $0x224] sm:$0xf]
    %v153 = vld [vmem:[%s0 + $0x228] sm:$0xf]
    %v154 = vld [vmem:[%s0 + $0x22c] sm:$0xf]
    %v155 = vld [vmem:[%s0 + $0x230] sm:$0xf]
    %v156 = vld [vmem:[%s0 + $0x234] sm:$0xf]
    %v157 = vld [vmem:[%s0 + $0x238] sm:$0xf]
    %v158 = vld [vmem:[%s0 + $0x23c] sm:$0xf]
    %v159 = vld [vmem:[%s0 + $0x240] sm:$0xf]
    %v160 = vld [vmem:[%s0 + $0x244] sm:$0xf]
    %v161 = vld [vmem:[%s0 + $0x248] sm:$0xf]
    %v162 = vld [vmem:[%s0 + $0x24c] sm:$0xf]
    %v163 = vld [vmem:[%s0 + $0x250] sm:$0xf]
    %v164 = vld [vmem:[%s0 + $0x254] sm:$0xf]
    %v165 = vld [vmem:[%s0 + $0x258] sm:$0xf]
    %v166 = vld [vmem:[%s0 + $0x25c] sm:$0xf]
    %v167 = vld [vmem:[%s0 + $0x260] sm:$0xf]
    %v168 = vld [vmem:[%s0 + $0x264] sm:$0xf]
    %v169 = vld [vmem:[%s0 + $0x268] sm:$0xf]
    %v170 = vld [vmem:[%s0 + $0x26c] sm:$0xf]
    %v171 = vld [vmem:[%s0 + $0x270] sm:$0xf]
    %v172 = vld [vmem:[%s0 + $0x274] sm:$0xf]
    %v173 = vld [vmem:[%s0 + $0x278] sm:$0xf]
    %v174 = vld [vmem:[%s0 + $0x27c] sm:$0xf]
    %v175 = vld [vmem:[%s0 + $0x280] sm:$0xf]
    %v176 = vld [vmem:[%s0 + $0x284] sm:$0xf]
    %v177 = vld [vmem:[%s0 + $0x288] sm:$0xf]
    %v178 = vld [vmem:[%s0 + $0x28c] sm:$0xf]
    %v179 = vld [vmem:[%s0 + $0x290] sm:$0xf]
    %v180 = vld [vmem:[%s0 + $0x294] sm:$0xf]
    %v181 = vld [vmem:[%s0 + $0x298] sm:$0xf]
    %v182 = vld [vmem:[%s0 + $0x29c] sm:$0xf]
    %v183 = vld [vmem:[%s0 + $0x2a0] sm:$0xf]
    %v184 = vld [vmem:[%s0 + $0x2a4] sm:$0xf]
    %v185 = vld [vmem:[%s0 + $0x2a8] sm:$0xf]
    %v186 = vld [vmem:[%s0 + $0x2ac] sm:$0xf]
    %v187 = vld [vmem:[%s0 + $0x2b0] sm:$0xf]
    %v188 = vld [vmem:[%s0 + $0x2b4] sm:$0xf]
    %v189 = vld [vmem:[%s0 + $0x2b8] sm:$0xf]
    %v190 = vld [vmem:[%s0 + $0x2bc] sm:$0xf]
    %v191 = vld [vmem:[%s0 + $0x2c0] sm:$0xf]
    %v192 = vld [vmem:[%s0 + $0x2c4] sm:$0xf]
    %v193 = vld [vmem:[%s0 + $0x2c8] sm:$0xf]
    %v194 = vld [vmem:[%s0 + $0x2cc] sm:$0xf]
    %v195 = vld [vmem:[%s0 + $0x2d0] sm:$0xf]
    %v196 = vld [vmem:[%s0 + $0x2d4] sm:$0xf]
    %v197 = vld [vmem:[%s0 + $0x2d8] sm:$0xf]
    %v198 = vld [vmem:[%s0 + $0x2dc] sm:$0xf]
    %v199 = vld [vmem:[%s0 + $0x2e0] sm:$0xf]
    %v200 = vld [vmem:[%s0 + $0x2e4] sm:$0xf]
    %v201 = vld [vmem:[%s0 + $0x2e8] sm:$0xf]
    %v202 = vld [vmem:[%s0 + $0x2ec] sm:$0xf]
    %v203 = vld [vmem:[%s0 + $0x2f0] sm:$0xf]
    %v204 = vld [vmem:[%s0 + $0x2f4] sm:$0xf]
    %v205 = vld [vmem:[%s0 + $0x2f8] sm:$0xf]
    %v206 = vld [vmem:[%s0 + $0x2fc] sm:$0xf]
    %v207 = vld [vmem:[%s0 + $0x300] sm:$0xf]
    %v208 = vld [vmem:[%s0 + $0x304] sm:$0xf]
    %v209 = vld [vmem:[%s0 + $0x308] sm:$0xf]
    %v210 = vld [vmem:[%s0 + $0x30c] sm:$0xf]
    %v211 = vld [vmem:[%s0 + $0x310] sm:$0xf]
    %v212 = vld [vmem:[%s0 + $0x314] sm:$0xf]
    %v213 = vld [vmem:[%s0 + $0x318] sm:$0xf]
    %v214 = vld [vmem:[%s0 + $0x31c] sm:$0xf]
    %v215 = vld [vmem:[%s0 + $0x320] sm:$0xf]
    %v216 = vld [vmem:[%s0 + $0x324] sm:$0xf]
    %v217 = vld [vmem:[%s0 + $0x328] sm:$0xf]
    %v218 = vld [vmem:[%s0 + $0x32c] sm:$0xf]
    %v219 = vld [vmem:[%s0 + $0x330] sm:$0xf]
    %v220 = vld [vmem:[%s0 + $0x334] sm:$0xf]
    %v221 = vld [vmem:[%s0 + $0x338] sm:$0xf]
    %v222 = vld [vmem:[%s0 + $0x33c] sm:$0xf]
    %v223 = vld [vmem:[%s0 + $0x340] sm:$0xf]
    %v224 = vld [vmem:[%s0 + $0x344] sm:$0xf]
    %v225 = vld [vmem:[%s0 + $0x348] sm:$0xf]
    %v226 = vld [vmem:[%s0 + $0x34c] sm:$0xf]
    %v227 = vld [vmem:[%s0 + $0x350] sm:$0xf]
    %v228 = vld [vmem:[%s0 + $0x354] sm:$0xf]
    %v229 = vld [vmem:[%s0 + $0x358] sm:$0xf]
    %v230 = vld [vmem:[%s0 + $0x35c] sm:$0xf]
    %v231 = vld [vmem:[%s0 + $0x360] sm:$0xf]
    %v232 = vld [vmem:[%s0 + $0x364] sm:$0xf]
    %v233 = vld [vmem:[%s0 + $0x368] sm:$0xf]
    %v234 = vld [vmem:[%s0 + $0x36c] sm:$0xf]
    %v235 = vld [vmem:[%s0 + $0x370] sm:$0xf]
    %v236 = vld [vmem:[%s0 + $0x374] sm:$0xf]
    %v237 = vld [vmem:[%s0 + $0x378] sm:$0xf]
    %v238 = vld [vmem:[%s0 + $0x37c] sm:$0xf]
    %v239 = vld [vmem:[%s0 + $0x380] sm:$0xf]
    %v240 = vld [vmem:[%s0 + $0x384] sm:$0xf]
    %v241 = vld [vmem:[%s0 + $0x388] sm:$0xf]
    %v242 = vld [vmem:[%s0 + $0x38c] sm:$0xf]
    %v243 = vld [vmem:[%s0 + $0x390] sm:$0xf]
    %v244 = vld [vmem:[%s0 + $0x394] sm:$0xf]
    %v245 = vld [vmem:[%s0 + $0x398] sm:$0xf]
    %v246 = vld [vmem:[%s0 + $0x39c] sm:$0xf]
    %v247 = vld [vmem:[%s0 + $0x3a0] sm:$0xf]
    %v248 = vld [vmem:[%s0 + $0x3a4] sm:$0xf]
    %v249 = vld [vmem:[%s0 + $0x3a8] sm:$0xf]
    %v250 = vld [vmem:[%s0 + $0x3ac] sm:$0xf]
    %v251 = vld [vmem:[%s0 + $0x3b0] sm:$0xf]
    %v252 = vld [vmem:[%s0 + $0x3b4] sm:$0xf]
    %v253 = vld [vmem:[%s0 + $0x3b8] sm:$0xf]
    %v254 = vld [vmem:[%s0 + $0x3bc] sm:$0xf]
    %v255 = vld [vmem:[%s0 + $0x3c0] sm:$0xf]
    %v256 = vld [vmem:[%s0 + $0x3c4] sm:$0xf]
    %v257 = vld [vmem:[%s0 + $0x3c8] sm:$0xf]
    %v258 = vld [vmem:[%s0 + $0x3cc] sm:$0xf]
    %v259 = vld [vmem:[%s0 + $0x3d0] sm:$0xf]
    %v260 = vld [vmem:[%s0 + $0x3d4] sm:$0xf]
    %v261 = vld [vmem:[%s0 + $0x3d8] sm:$0xf]
    %v262 = vld [vmem:[%s0 + $0x3dc] sm:$0xf]
    %v263 = vld [vmem:[%s0 + $0x3e0] sm:$0xf]
    %v264 = vld [vmem:[%s0 + $0x3e4] sm:$0xf]
    %v265 = vld [vmem:[%s0 + $0x3e8] sm:$0xf]
    %v266 = vld [vmem:[%s0 + $0x3ec] sm:$0xf]
    %v267 = vld [vmem:[%s0 + $0x3f0] sm:$0xf]
    %v268 = vld [vmem:[%s0 + $0x3f4] sm:$0xf]
    %v269 = vld [vmem:[%s0 + $0x3f8] sm:$0xf]
    %v270 = vld [vmem:[%s0 + $0x3fc] sm:$0xf]
    %v271 = vunpack.c.l.bf16 %v15
    %v272 = vunpack.c.l.bf16 %v16
    %v273 = vunpack.c.l.bf16 %v17
    %v274 = vunpack.c.l.bf16 %v18
    %v275 = vunpack.c.l.bf16 %v19
    %v276 = vunpack.c.l.bf16 %v20
    %v277 = vunpack.c.l.bf16 %v21
    %v278 = vunpack.c.l.bf16 %v22
    %v279 = vunpack.c.l.bf16 %v23
    %v280 = vunpack.c.l.bf16 %v24
    %v281 = vunpack.c.l.bf16 %v25
    %v282 = vunpack.c.l.bf16 %v26
    %v283 = vunpack.c.l.bf16 %v27
    %v284 = vunpack.c.l.bf16 %v28
    %v285 = vunpack.c.l.bf16 %v29
    %v286 = vunpack.c.l.bf16 %v30
    %v287 = vunpack.c.l.bf16 %v31
    %v288 = vunpack.c.l.bf16 %v32
    %v289 = vunpack.c.l.bf16 %v33
    %v290 = vunpack.c.l.bf16 %v34
    %v291 = vunpack.c.l.bf16 %v35
    %v292 = vunpack.c.l.bf16 %v36
    %v293 = vunpack.c.l.bf16 %v37
    %v294 = vunpack.c.l.bf16 %v38
    %v295 = vunpack.c.l.bf16 %v39
    %v296 = vunpack.c.l.bf16 %v40
    %v297 = vunpack.c.l.bf16 %v41
    %v298 = vunpack.c.l.bf16 %v42
    %v299 = vunpack.c.l.bf16 %v43
    %v300 = vunpack.c.l.bf16 %v44
    %v301 = vunpack.c.l.bf16 %v45
    %v302 = vunpack.c.l.bf16 %v46
    %v303 = vunpack.c.l.bf16 %v47
    %v304 = vunpack.c.l.bf16 %v48
    %v305 = vunpack.c.l.bf16 %v49
    %v306 = vunpack.c.l.bf16 %v50
    %v307 = vunpack.c.l.bf16 %v51
    %v308 = vunpack.c.l.bf16 %v52
    %v309 = vunpack.c.l.bf16 %v53
    %v310 = vunpack.c.l.bf16 %v54
    %v311 = vunpack.c.l.bf16 %v55
    %v312 = vunpack.c.l.bf16 %v56
    %v313 = vunpack.c.l.bf16 %v57
    %v314 = vunpack.c.l.bf16 %v58
    %v315 = vunpack.c.l.bf16 %v59
    %v316 = vunpack.c.l.bf16 %v60
    %v317 = vunpack.c.l.bf16 %v61
    %v318 = vunpack.c.l.bf16 %v62
    %v319 = vunpack.c.l.bf16 %v63
    %v320 = vunpack.c.l.bf16 %v64
    %v321 = vunpack.c.l.bf16 %v65
    %v322 = vunpack.c.l.bf16 %v66
    %v323 = vunpack.c.l.bf16 %v67
    %v324 = vunpack.c.l.bf16 %v68
    %v325 = vunpack.c.l.bf16 %v69
    %v326 = vunpack.c.l.bf16 %v70
    %v327 = vunpack.c.l.bf16 %v71
    %v328 = vunpack.c.l.bf16 %v72
    %v329 = vunpack.c.l.bf16 %v73
    %v330 = vunpack.c.l.bf16 %v74
    %v331 = vunpack.c.l.bf16 %v75
    %v332 = vunpack.c.l.bf16 %v76
    %v333 = vunpack.c.l.bf16 %v77
    %v334 = vunpack.c.l.bf16 %v78
    %v335 = vunpack.c.l.bf16 %v79
    %v336 = vunpack.c.l.bf16 %v80
    %v337 = vunpack.c.l.bf16 %v81
    %v338 = vunpack.c.l.bf16 %v82
    %v339 = vunpack.c.l.bf16 %v83
    %v340 = vunpack.c.l.bf16 %v84
    %v341 = vunpack.c.l.bf16 %v85
    %v342 = vunpack.c.l.bf16 %v86
    %v343 = vunpack.c.l.bf16 %v87
    %v344 = vunpack.c.l.bf16 %v88
    %v345 = vunpack.c.l.bf16 %v89
    %v346 = vunpack.c.l.bf16 %v90
    %v347 = vunpack.c.l.bf16 %v91
    %v348 = vunpack.c.l.bf16 %v92
    %v349 = vunpack.c.l.bf16 %v93
    %v350 = vunpack.c.l.bf16 %v94
    %v351 = vunpack.c.l.bf16 %v95
    %v352 = vunpack.c.l.bf16 %v96
    %v353 = vunpack.c.l.bf16 %v97
    %v354 = vunpack.c.l.bf16 %v98
    %v355 = vunpack.c.l.bf16 %v99
    %v356 = vunpack.c.l.bf16 %v100
    %v357 = vunpack.c.l.bf16 %v101
    %v358 = vunpack.c.l.bf16 %v102
    %v359 = vunpack.c.l.bf16 %v103
    %v360 = vunpack.c.l.bf16 %v104
    %v361 = vunpack.c.l.bf16 %v105
    %v362 = vunpack.c.l.bf16 %v106
    %v363 = vunpack.c.l.bf16 %v107
    %v364 = vunpack.c.l.bf16 %v108
    %v365 = vunpack.c.l.bf16 %v109
    %v366 = vunpack.c.l.bf16 %v110
    %v367 = vunpack.c.l.bf16 %v111
    %v368 = vunpack.c.l.bf16 %v112
    %v369 = vunpack.c.l.bf16 %v113
    %v370 = vunpack.c.l.bf16 %v114
    %v371 = vunpack.c.l.bf16 %v115
    %v372 = vunpack.c.l.bf16 %v116
    %v373 = vunpack.c.l.bf16 %v117
    %v374 = vunpack.c.l.bf16 %v118
    %v375 = vunpack.c.l.bf16 %v119
    %v376 = vunpack.c.l.bf16 %v120
    %v377 = vunpack.c.l.bf16 %v121
    %v378 = vunpack.c.l.bf16 %v122
    %v379 = vunpack.c.l.bf16 %v123
    %v380 = vunpack.c.l.bf16 %v124
    %v381 = vunpack.c.l.bf16 %v125
    %v382 = vunpack.c.l.bf16 %v126
    %v383 = vunpack.c.l.bf16 %v127
    %v384 = vunpack.c.l.bf16 %v128
    %v385 = vunpack.c.l.bf16 %v129
    %v386 = vunpack.c.l.bf16 %v130
    %v387 = vunpack.c.l.bf16 %v131
    %v388 = vunpack.c.l.bf16 %v132
    %v389 = vunpack.c.l.bf16 %v133
    %v390 = vunpack.c.l.bf16 %v134
    %v391 = vunpack.c.l.bf16 %v135
    %v392 = vunpack.c.l.bf16 %v136
    %v393 = vunpack.c.l.bf16 %v137
    %v394 = vunpack.c.l.bf16 %v138
    %v395 = vunpack.c.l.bf16 %v139
    %v396 = vunpack.c.l.bf16 %v140
    %v397 = vunpack.c.l.bf16 %v141
    %v398 = vunpack.c.l.bf16 %v142
    %v399 = vunpack.c.l.bf16 %v143
    %v400 = vunpack.c.l.bf16 %v144
    %v401 = vunpack.c.l.bf16 %v145
    %v402 = vunpack.c.l.bf16 %v146
    %v403 = vunpack.c.l.bf16 %v147
    %v404 = vunpack.c.l.bf16 %v148
    %v405 = vunpack.c.l.bf16 %v149
    %v406 = vunpack.c.l.bf16 %v150
    %v407 = vunpack.c.l.bf16 %v151
    %v408 = vunpack.c.l.bf16 %v152
    %v409 = vunpack.c.l.bf16 %v153
    %v410 = vunpack.c.l.bf16 %v154
    %v411 = vunpack.c.l.bf16 %v155
    %v412 = vunpack.c.l.bf16 %v156
    %v413 = vunpack.c.l.bf16 %v157
    %v414 = vunpack.c.l.bf16 %v158
    %v415 = vunpack.c.l.bf16 %v159
    %v416 = vunpack.c.l.bf16 %v160
    %v417 = vunpack.c.l.bf16 %v161
    %v418 = vunpack.c.l.bf16 %v162
    %v419 = vunpack.c.l.bf16 %v163
    %v420 = vunpack.c.l.bf16 %v164
    %v421 = vunpack.c.l.bf16 %v165
    %v422 = vunpack.c.l.bf16 %v166
    %v423 = vunpack.c.l.bf16 %v167
    %v424 = vunpack.c.l.bf16 %v168
    %v425 = vunpack.c.l.bf16 %v169
    %v426 = vunpack.c.l.bf16 %v170
    %v427 = vunpack.c.l.bf16 %v171
    %v428 = vunpack.c.l.bf16 %v172
    %v429 = vunpack.c.l.bf16 %v173
    %v430 = vunpack.c.l.bf16 %v174
    %v431 = vunpack.c.l.bf16 %v175
    %v432 = vunpack.c.l.bf16 %v176
    %v433 = vunpack.c.l.bf16 %v177
    %v434 = vunpack.c.l.bf16 %v178
    %v435 = vunpack.c.l.bf16 %v179
    %v436 = vunpack.c.l.bf16 %v180
    %v437 = vunpack.c.l.bf16 %v181
    %v438 = vunpack.c.l.bf16 %v182
    %v439 = vunpack.c.l.bf16 %v183
    %v440 = vunpack.c.l.bf16 %v184
    %v441 = vunpack.c.l.bf16 %v185
    %v442 = vunpack.c.l.bf16 %v186
    %v443 = vunpack.c.l.bf16 %v187
    %v444 = vunpack.c.l.bf16 %v188
    %v445 = vunpack.c.l.bf16 %v189
    %v446 = vunpack.c.l.bf16 %v190
    %v447 = vunpack.c.l.bf16 %v191
    %v448 = vunpack.c.l.bf16 %v192
    %v449 = vunpack.c.l.bf16 %v193
    %v450 = vunpack.c.l.bf16 %v194
    %v451 = vunpack.c.l.bf16 %v195
    %v452 = vunpack.c.l.bf16 %v196
    %v453 = vunpack.c.l.bf16 %v197
    %v454 = vunpack.c.l.bf16 %v198
    %v455 = vunpack.c.l.bf16 %v199
    %v456 = vunpack.c.l.bf16 %v200
    %v457 = vunpack.c.l.bf16 %v201
    %v458 = vunpack.c.l.bf16 %v202
    %v459 = vunpack.c.l.bf16 %v203
    %v460 = vunpack.c.l.bf16 %v204
    %v461 = vunpack.c.l.bf16 %v205
    %v462 = vunpack.c.l.bf16 %v206
    %v463 = vunpack.c.l.bf16 %v207
    %v464 = vunpack.c.l.bf16 %v208
    %v465 = vunpack.c.l.bf16 %v209
    %v466 = vunpack.c.l.bf16 %v210
    %v467 = vunpack.c.l.bf16 %v211
    %v468 = vunpack.c.l.bf16 %v212
    %v469 = vunpack.c.l.bf16 %v213
    %v470 = vunpack.c.l.bf16 %v214
    %v471 = vunpack.c.l.bf16 %v215
    %v472 = vunpack.c.l.bf16 %v216
    %v473 = vunpack.c.l.bf16 %v217
    %v474 = vunpack.c.l.bf16 %v218
    %v475 = vunpack.c.l.bf16 %v219
    %v476 = vunpack.c.l.bf16 %v220
    %v477 = vunpack.c.l.bf16 %v221
    %v478 = vunpack.c.l.bf16 %v222
    %v479 = vunpack.c.l.bf16 %v223
    %v480 = vunpack.c.l.bf16 %v224
    %v481 = vunpack.c.l.bf16 %v225
    %v482 = vunpack.c.l.bf16 %v226
    %v483 = vunpack.c.l.bf16 %v227
    %v484 = vunpack.c.l.bf16 %v228
    %v485 = vunpack.c.l.bf16 %v229
    %v486 = vunpack.c.l.bf16 %v230
    %v487 = vunpack.c.l.bf16 %v231
    %v488 = vunpack.c.l.bf16 %v232
    %v489 = vunpack.c.l.bf16 %v233
    %v490 = vunpack.c.l.bf16 %v234
    %v491 = vunpack.c.l.bf16 %v235
    %v492 = vunpack.c.l.bf16 %v236
    %v493 = vunpack.c.l.bf16 %v237
    %v494 = vunpack.c.l.bf16 %v238
    %v495 = vunpack.c.l.bf16 %v239
    %v496 = vunpack.c.l.bf16 %v240
    %v497 = vunpack.c.l.bf16 %v241
    %v498 = vunpack.c.l.bf16 %v242
    %v499 = vunpack.c.l.bf16 %v243
    %v500 = vunpack.c.l.bf16 %v244
    %v501 = vunpack.c.l.bf16 %v245
    %v502 = vunpack.c.l.bf16 %v246
    %v503 = vunpack.c.l.bf16 %v247
    %v504 = vunpack.c.l.bf16 %v248
    %v505 = vunpack.c.l.bf16 %v249
    %v506 = vunpack.c.l.bf16 %v250
    %v507 = vunpack.c.l.bf16 %v251
    %v508 = vunpack.c.l.bf16 %v252
    %v509 = vunpack.c.l.bf16 %v253
    %v510 = vunpack.c.l.bf16 %v254
    %v511 = vunpack.c.l.bf16 %v255
    %v512 = vunpack.c.l.bf16 %v256
    %v513 = vunpack.c.l.bf16 %v257
    %v514 = vunpack.c.l.bf16 %v258
    %v515 = vunpack.c.l.bf16 %v259
    %v516 = vunpack.c.l.bf16 %v260
    %v517 = vunpack.c.l.bf16 %v261
    %v518 = vunpack.c.l.bf16 %v262
    %v519 = vunpack.c.l.bf16 %v263
    %v520 = vunpack.c.l.bf16 %v264
    %v521 = vunpack.c.l.bf16 %v265
    %v522 = vunpack.c.l.bf16 %v266
    %v523 = vunpack.c.l.bf16 %v267
    %v524 = vunpack.c.l.bf16 %v268
    %v525 = vunpack.c.l.bf16 %v269
    %v526 = vunpack.c.l.bf16 %v270
    %v527 = vld [vmem:[%s1] sm:$0x1]
    %v529 = vlaneseq
    %v530 = vshrl.u32 %v529, 7
    %v531 = vsub.s32 0, %v530
    %v532 = vrot.slane %v527, %v531
    %v534 = vmul.f32 %v271, %v532
    %v535 = vmul.f32 %v272, %v532
    %v536 = vmul.f32 %v273, %v532
    %v537 = vmul.f32 %v274, %v532
    %v538 = vmul.f32 %v275, %v532
    %v539 = vmul.f32 %v276, %v532
    %v540 = vmul.f32 %v277, %v532
    %v541 = vmul.f32 %v278, %v532
    %v542 = vmul.f32 %v279, %v532
    %v543 = vmul.f32 %v280, %v532
    %v544 = vmul.f32 %v281, %v532
    %v545 = vmul.f32 %v282, %v532
    %v546 = vmul.f32 %v283, %v532
    %v547 = vmul.f32 %v284, %v532
    %v548 = vmul.f32 %v285, %v532
    %v549 = vmul.f32 %v286, %v532
    %v550 = vmul.f32 %v287, %v532
    %v551 = vmul.f32 %v288, %v532
    %v552 = vmul.f32 %v289, %v532
    %v553 = vmul.f32 %v290, %v532
    %v554 = vmul.f32 %v291, %v532
    %v555 = vmul.f32 %v292, %v532
    %v556 = vmul.f32 %v293, %v532
    %v557 = vmul.f32 %v294, %v532
    %v558 = vmul.f32 %v295, %v532
    %v559 = vmul.f32 %v296, %v532
    %v560 = vmul.f32 %v297, %v532
    %v561 = vmul.f32 %v298, %v532
    %v562 = vmul.f32 %v299, %v532
    %v563 = vmul.f32 %v300, %v532
    %v564 = vmul.f32 %v301, %v532
    %v565 = vmul.f32 %v302, %v532
    %v566 = vmul.f32 %v303, %v532
    %v567 = vmul.f32 %v304, %v532
    %v568 = vmul.f32 %v305, %v532
    %v569 = vmul.f32 %v306, %v532
    %v570 = vmul.f32 %v307, %v532
    %v571 = vmul.f32 %v308, %v532
    %v572 = vmul.f32 %v309, %v532
    %v573 = vmul.f32 %v310, %v532
    %v574 = vmul.f32 %v311, %v532
    %v575 = vmul.f32 %v312, %v532
    %v576 = vmul.f32 %v313, %v532
    %v577 = vmul.f32 %v314, %v532
    %v578 = vmul.f32 %v315, %v532
    %v579 = vmul.f32 %v316, %v532
    %v580 = vmul.f32 %v317, %v532
    %v581 = vmul.f32 %v318, %v532
    %v582 = vmul.f32 %v319, %v532
    %v583 = vmul.f32 %v320, %v532
    %v584 = vmul.f32 %v321, %v532
    %v585 = vmul.f32 %v322, %v532
    %v586 = vmul.f32 %v323, %v532
    %v587 = vmul.f32 %v324, %v532
    %v588 = vmul.f32 %v325, %v532
    %v589 = vmul.f32 %v326, %v532
    %v590 = vmul.f32 %v327, %v532
    %v591 = vmul.f32 %v328, %v532
    %v592 = vmul.f32 %v329, %v532
    %v593 = vmul.f32 %v330, %v532
    %v594 = vmul.f32 %v331, %v532
    %v595 = vmul.f32 %v332, %v532
    %v596 = vmul.f32 %v333, %v532
    %v597 = vmul.f32 %v334, %v532
    %v598 = vmul.f32 %v335, %v532
    %v599 = vmul.f32 %v336, %v532
    %v600 = vmul.f32 %v337, %v532
    %v601 = vmul.f32 %v338, %v532
    %v602 = vmul.f32 %v339, %v532
    %v603 = vmul.f32 %v340, %v532
    %v604 = vmul.f32 %v341, %v532
    %v605 = vmul.f32 %v342, %v532
    %v606 = vmul.f32 %v343, %v532
    %v607 = vmul.f32 %v344, %v532
    %v608 = vmul.f32 %v345, %v532
    %v609 = vmul.f32 %v346, %v532
    %v610 = vmul.f32 %v347, %v532
    %v611 = vmul.f32 %v348, %v532
    %v612 = vmul.f32 %v349, %v532
    %v613 = vmul.f32 %v350, %v532
    %v614 = vmul.f32 %v351, %v532
    %v615 = vmul.f32 %v352, %v532
    %v616 = vmul.f32 %v353, %v532
    %v617 = vmul.f32 %v354, %v532
    %v618 = vmul.f32 %v355, %v532
    %v619 = vmul.f32 %v356, %v532
    %v620 = vmul.f32 %v357, %v532
    %v621 = vmul.f32 %v358, %v532
    %v622 = vmul.f32 %v359, %v532
    %v623 = vmul.f32 %v360, %v532
    %v624 = vmul.f32 %v361, %v532
    %v625 = vmul.f32 %v362, %v532
    %v626 = vmul.f32 %v363, %v532
    %v627 = vmul.f32 %v364, %v532
    %v628 = vmul.f32 %v365, %v532
    %v629 = vmul.f32 %v366, %v532
    %v630 = vmul.f32 %v367, %v532
    %v631 = vmul.f32 %v368, %v532
    %v632 = vmul.f32 %v369, %v532
    %v633 = vmul.f32 %v370, %v532
    %v634 = vmul.f32 %v371, %v532
    %v635 = vmul.f32 %v372, %v532
    %v636 = vmul.f32 %v373, %v532
    %v637 = vmul.f32 %v374, %v532
    %v638 = vmul.f32 %v375, %v532
    %v639 = vmul.f32 %v376, %v532
    %v640 = vmul.f32 %v377, %v532
    %v641 = vmul.f32 %v378, %v532
    %v642 = vmul.f32 %v379, %v532
    %v643 = vmul.f32 %v380, %v532
    %v644 = vmul.f32 %v381, %v532
    %v645 = vmul.f32 %v382, %v532
    %v646 = vmul.f32 %v383, %v532
    %v647 = vmul.f32 %v384, %v532
    %v648 = vmul.f32 %v385, %v532
    %v649 = vmul.f32 %v386, %v532
    %v650 = vmul.f32 %v387, %v532
    %v651 = vmul.f32 %v388, %v532
    %v652 = vmul.f32 %v389, %v532
    %v653 = vmul.f32 %v390, %v532
    %v654 = vmul.f32 %v391, %v532
    %v655 = vmul.f32 %v392, %v532
    %v656 = vmul.f32 %v393, %v532
    %v657 = vmul.f32 %v394, %v532
    %v658 = vmul.f32 %v395, %v532
    %v659 = vmul.f32 %v396, %v532
    %v660 = vmul.f32 %v397, %v532
    %v661 = vmul.f32 %v398, %v532
    %v662 = vmul.f32 %v399, %v532
    %v663 = vmul.f32 %v400, %v532
    %v664 = vmul.f32 %v401, %v532
    %v665 = vmul.f32 %v402, %v532
    %v666 = vmul.f32 %v403, %v532
    %v667 = vmul.f32 %v404, %v532
    %v668 = vmul.f32 %v405, %v532
    %v669 = vmul.f32 %v406, %v532
    %v670 = vmul.f32 %v407, %v532
    %v671 = vmul.f32 %v408, %v532
    %v672 = vmul.f32 %v409, %v532
    %v673 = vmul.f32 %v410, %v532
    %v674 = vmul.f32 %v411, %v532
    %v675 = vmul.f32 %v412, %v532
    %v676 = vmul.f32 %v413, %v532
    %v677 = vmul.f32 %v414, %v532
    %v678 = vmul.f32 %v415, %v532
    %v679 = vmul.f32 %v416, %v532
    %v680 = vmul.f32 %v417, %v532
    %v681 = vmul.f32 %v418, %v532
    %v682 = vmul.f32 %v419, %v532
    %v683 = vmul.f32 %v420, %v532
    %v684 = vmul.f32 %v421, %v532
    %v685 = vmul.f32 %v422, %v532
    %v686 = vmul.f32 %v423, %v532
    %v687 = vmul.f32 %v424, %v532
    %v688 = vmul.f32 %v425, %v532
    %v689 = vmul.f32 %v426, %v532
    %v690 = vmul.f32 %v427, %v532
    %v691 = vmul.f32 %v428, %v532
    %v692 = vmul.f32 %v429, %v532
    %v693 = vmul.f32 %v430, %v532
    %v694 = vmul.f32 %v431, %v532
    %v695 = vmul.f32 %v432, %v532
    %v696 = vmul.f32 %v433, %v532
    %v697 = vmul.f32 %v434, %v532
    %v698 = vmul.f32 %v435, %v532
    %v699 = vmul.f32 %v436, %v532
    %v700 = vmul.f32 %v437, %v532
    %v701 = vmul.f32 %v438, %v532
    %v702 = vmul.f32 %v439, %v532
    %v703 = vmul.f32 %v440, %v532
    %v704 = vmul.f32 %v441, %v532
    %v705 = vmul.f32 %v442, %v532
    %v706 = vmul.f32 %v443, %v532
    %v707 = vmul.f32 %v444, %v532
    %v708 = vmul.f32 %v445, %v532
    %v709 = vmul.f32 %v446, %v532
    %v710 = vmul.f32 %v447, %v532
    %v711 = vmul.f32 %v448, %v532
    %v712 = vmul.f32 %v449, %v532
    %v713 = vmul.f32 %v450, %v532
    %v714 = vmul.f32 %v451, %v532
    %v715 = vmul.f32 %v452, %v532
    %v716 = vmul.f32 %v453, %v532
    %v717 = vmul.f32 %v454, %v532
    %v718 = vmul.f32 %v455, %v532
    %v719 = vmul.f32 %v456, %v532
    %v720 = vmul.f32 %v457, %v532
    %v721 = vmul.f32 %v458, %v532
    %v722 = vmul.f32 %v459, %v532
    %v723 = vmul.f32 %v460, %v532
    %v724 = vmul.f32 %v461, %v532
    %v725 = vmul.f32 %v462, %v532
    %v726 = vmul.f32 %v463, %v532
    %v727 = vmul.f32 %v464, %v532
    %v728 = vmul.f32 %v465, %v532
    %v729 = vmul.f32 %v466, %v532
    %v730 = vmul.f32 %v467, %v532
    %v731 = vmul.f32 %v468, %v532
    %v732 = vmul.f32 %v469, %v532
    %v733 = vmul.f32 %v470, %v532
    %v734 = vmul.f32 %v471, %v532
    %v735 = vmul.f32 %v472, %v532
    %v736 = vmul.f32 %v473, %v532
    %v737 = vmul.f32 %v474, %v532
    %v738 = vmul.f32 %v475, %v532
    %v739 = vmul.f32 %v476, %v532
    %v740 = vmul.f32 %v477, %v532
    %v741 = vmul.f32 %v478, %v532
    %v742 = vmul.f32 %v479, %v532
    %v743 = vmul.f32 %v480, %v532
    %v744 = vmul.f32 %v481, %v532
    %v745 = vmul.f32 %v482, %v532
    %v746 = vmul.f32 %v483, %v532
    %v747 = vmul.f32 %v484, %v532
    %v748 = vmul.f32 %v485, %v532
    %v749 = vmul.f32 %v486, %v532
    %v750 = vmul.f32 %v487, %v532
    %v751 = vmul.f32 %v488, %v532
    %v752 = vmul.f32 %v489, %v532
    %v753 = vmul.f32 %v490, %v532
    %v754 = vmul.f32 %v491, %v532
    %v755 = vmul.f32 %v492, %v532
    %v756 = vmul.f32 %v493, %v532
    %v757 = vmul.f32 %v494, %v532
    %v758 = vmul.f32 %v495, %v532
    %v759 = vmul.f32 %v496, %v532
    %v760 = vmul.f32 %v497, %v532
    %v761 = vmul.f32 %v498, %v532
    %v762 = vmul.f32 %v499, %v532
    %v763 = vmul.f32 %v500, %v532
    %v764 = vmul.f32 %v501, %v532
    %v765 = vmul.f32 %v502, %v532
    %v766 = vmul.f32 %v503, %v532
    %v767 = vmul.f32 %v504, %v532
    %v768 = vmul.f32 %v505, %v532
    %v769 = vmul.f32 %v506, %v532
    %v770 = vmul.f32 %v507, %v532
    %v771 = vmul.f32 %v508, %v532
    %v772 = vmul.f32 %v509, %v532
    %v773 = vmul.f32 %v510, %v532
    %v774 = vmul.f32 %v511, %v532
    %v775 = vmul.f32 %v512, %v532
    %v776 = vmul.f32 %v513, %v532
    %v777 = vmul.f32 %v514, %v532
    %v778 = vmul.f32 %v515, %v532
    %v779 = vmul.f32 %v516, %v532
    %v780 = vmul.f32 %v517, %v532
    %v781 = vmul.f32 %v518, %v532
    %v782 = vmul.f32 %v519, %v532
    %v783 = vmul.f32 %v520, %v532
    %v784 = vmul.f32 %v521, %v532
    %v785 = vmul.f32 %v522, %v532
    %v786 = vmul.f32 %v523, %v532
    %v787 = vmul.f32 %v524, %v532
    %v788 = vmul.f32 %v525, %v532
    %v789 = vmul.f32 %v526, %v532
    %v790 = vld [vmem:[%s2] sm:$0x1]
    %v792 = vlaneseq
    %v793 = vshrl.u32 %v792, 7
    %v794 = vsub.s32 0, %v793
    %v795 = vrot.slane %v790, %v794
    %v797 = vadd.f32 %v534, %v795
    %v798 = vadd.f32 %v535, %v795
    %v799 = vadd.f32 %v536, %v795
    %v800 = vadd.f32 %v537, %v795
    %v801 = vadd.f32 %v538, %v795
    %v802 = vadd.f32 %v539, %v795
    %v803 = vadd.f32 %v540, %v795
    %v804 = vadd.f32 %v541, %v795
    %v805 = vadd.f32 %v542, %v795
    %v806 = vadd.f32 %v543, %v795
    %v807 = vadd.f32 %v544, %v795
    %v808 = vadd.f32 %v545, %v795
    %v809 = vadd.f32 %v546, %v795
    %v810 = vadd.f32 %v547, %v795
    %v811 = vadd.f32 %v548, %v795
    %v812 = vadd.f32 %v549, %v795
    %v813 = vadd.f32 %v550, %v795
    %v814 = vadd.f32 %v551, %v795
    %v815 = vadd.f32 %v552, %v795
    %v816 = vadd.f32 %v553, %v795
    %v817 = vadd.f32 %v554, %v795
    %v818 = vadd.f32 %v555, %v795
    %v819 = vadd.f32 %v556, %v795
    %v820 = vadd.f32 %v557, %v795
    %v821 = vadd.f32 %v558, %v795
    %v822 = vadd.f32 %v559, %v795
    %v823 = vadd.f32 %v560, %v795
    %v824 = vadd.f32 %v561, %v795
    %v825 = vadd.f32 %v562, %v795
    %v826 = vadd.f32 %v563, %v795
    %v827 = vadd.f32 %v564, %v795
    %v828 = vadd.f32 %v565, %v795
    %v829 = vadd.f32 %v566, %v795
    %v830 = vadd.f32 %v567, %v795
    %v831 = vadd.f32 %v568, %v795
    %v832 = vadd.f32 %v569, %v795
    %v833 = vadd.f32 %v570, %v795
    %v834 = vadd.f32 %v571, %v795
    %v835 = vadd.f32 %v572, %v795
    %v836 = vadd.f32 %v573, %v795
    %v837 = vadd.f32 %v574, %v795
    %v838 = vadd.f32 %v575, %v795
    %v839 = vadd.f32 %v576, %v795
    %v840 = vadd.f32 %v577, %v795
    %v841 = vadd.f32 %v578, %v795
    %v842 = vadd.f32 %v579, %v795
    %v843 = vadd.f32 %v580, %v795
    %v844 = vadd.f32 %v581, %v795
    %v845 = vadd.f32 %v582, %v795
    %v846 = vadd.f32 %v583, %v795
    %v847 = vadd.f32 %v584, %v795
    %v848 = vadd.f32 %v585, %v795
    %v849 = vadd.f32 %v586, %v795
    %v850 = vadd.f32 %v587, %v795
    %v851 = vadd.f32 %v588, %v795
    %v852 = vadd.f32 %v589, %v795
    %v853 = vadd.f32 %v590, %v795
    %v854 = vadd.f32 %v591, %v795
    %v855 = vadd.f32 %v592, %v795
    %v856 = vadd.f32 %v593, %v795
    %v857 = vadd.f32 %v594, %v795
    %v858 = vadd.f32 %v595, %v795
    %v859 = vadd.f32 %v596, %v795
    %v860 = vadd.f32 %v597, %v795
    %v861 = vadd.f32 %v598, %v795
    %v862 = vadd.f32 %v599, %v795
    %v863 = vadd.f32 %v600, %v795
    %v864 = vadd.f32 %v601, %v795
    %v865 = vadd.f32 %v602, %v795
    %v866 = vadd.f32 %v603, %v795
    %v867 = vadd.f32 %v604, %v795
    %v868 = vadd.f32 %v605, %v795
    %v869 = vadd.f32 %v606, %v795
    %v870 = vadd.f32 %v607, %v795
    %v871 = vadd.f32 %v608, %v795
    %v872 = vadd.f32 %v609, %v795
    %v873 = vadd.f32 %v610, %v795
    %v874 = vadd.f32 %v611, %v795
    %v875 = vadd.f32 %v612, %v795
    %v876 = vadd.f32 %v613, %v795
    %v877 = vadd.f32 %v614, %v795
    %v878 = vadd.f32 %v615, %v795
    %v879 = vadd.f32 %v616, %v795
    %v880 = vadd.f32 %v617, %v795
    %v881 = vadd.f32 %v618, %v795
    %v882 = vadd.f32 %v619, %v795
    %v883 = vadd.f32 %v620, %v795
    %v884 = vadd.f32 %v621, %v795
    %v885 = vadd.f32 %v622, %v795
    %v886 = vadd.f32 %v623, %v795
    %v887 = vadd.f32 %v624, %v795
    %v888 = vadd.f32 %v625, %v795
    %v889 = vadd.f32 %v626, %v795
    %v890 = vadd.f32 %v627, %v795
    %v891 = vadd.f32 %v628, %v795
    %v892 = vadd.f32 %v629, %v795
    %v893 = vadd.f32 %v630, %v795
    %v894 = vadd.f32 %v631, %v795
    %v895 = vadd.f32 %v632, %v795
    %v896 = vadd.f32 %v633, %v795
    %v897 = vadd.f32 %v634, %v795
    %v898 = vadd.f32 %v635, %v795
    %v899 = vadd.f32 %v636, %v795
    %v900 = vadd.f32 %v637, %v795
    %v901 = vadd.f32 %v638, %v795
    %v902 = vadd.f32 %v639, %v795
    %v903 = vadd.f32 %v640, %v795
    %v904 = vadd.f32 %v641, %v795
    %v905 = vadd.f32 %v642, %v795
    %v906 = vadd.f32 %v643, %v795
    %v907 = vadd.f32 %v644, %v795
    %v908 = vadd.f32 %v645, %v795
    %v909 = vadd.f32 %v646, %v795
    %v910 = vadd.f32 %v647, %v795
    %v911 = vadd.f32 %v648, %v795
    %v912 = vadd.f32 %v649, %v795
    %v913 = vadd.f32 %v650, %v795
    %v914 = vadd.f32 %v651, %v795
    %v915 = vadd.f32 %v652, %v795
    %v916 = vadd.f32 %v653, %v795
    %v917 = vadd.f32 %v654, %v795
    %v918 = vadd.f32 %v655, %v795
    %v919 = vadd.f32 %v656, %v795
    %v920 = vadd.f32 %v657, %v795
    %v921 = vadd.f32 %v658, %v795
    %v922 = vadd.f32 %v659, %v795
    %v923 = vadd.f32 %v660, %v795
    %v924 = vadd.f32 %v661, %v795
    %v925 = vadd.f32 %v662, %v795
    %v926 = vadd.f32 %v663, %v795
    %v927 = vadd.f32 %v664, %v795
    %v928 = vadd.f32 %v665, %v795
    %v929 = vadd.f32 %v666, %v795
    %v930 = vadd.f32 %v667, %v795
    %v931 = vadd.f32 %v668, %v795
    %v932 = vadd.f32 %v669, %v795
    %v933 = vadd.f32 %v670, %v795
    %v934 = vadd.f32 %v671, %v795
    %v935 = vadd.f32 %v672, %v795
    %v936 = vadd.f32 %v673, %v795
    %v937 = vadd.f32 %v674, %v795
    %v938 = vadd.f32 %v675, %v795
    %v939 = vadd.f32 %v676, %v795
    %v940 = vadd.f32 %v677, %v795
    %v941 = vadd.f32 %v678, %v795
    %v942 = vadd.f32 %v679, %v795
    %v943 = vadd.f32 %v680, %v795
    %v944 = vadd.f32 %v681, %v795
    %v945 = vadd.f32 %v682, %v795
    %v946 = vadd.f32 %v683, %v795
    %v947 = vadd.f32 %v684, %v795
    %v948 = vadd.f32 %v685, %v795
    %v949 = vadd.f32 %v686, %v795
    %v950 = vadd.f32 %v687, %v795
    %v951 = vadd.f32 %v688, %v795
    %v952 = vadd.f32 %v689, %v795
    %v953 = vadd.f32 %v690, %v795
    %v954 = vadd.f32 %v691, %v795
    %v955 = vadd.f32 %v692, %v795
    %v956 = vadd.f32 %v693, %v795
    %v957 = vadd.f32 %v694, %v795
    %v958 = vadd.f32 %v695, %v795
    %v959 = vadd.f32 %v696, %v795
    %v960 = vadd.f32 %v697, %v795
    %v961 = vadd.f32 %v698, %v795
    %v962 = vadd.f32 %v699, %v795
    %v963 = vadd.f32 %v700, %v795
    %v964 = vadd.f32 %v701, %v795
    %v965 = vadd.f32 %v702, %v795
    %v966 = vadd.f32 %v703, %v795
    %v967 = vadd.f32 %v704, %v795
    %v968 = vadd.f32 %v705, %v795
    %v969 = vadd.f32 %v706, %v795
    %v970 = vadd.f32 %v707, %v795
    %v971 = vadd.f32 %v708, %v795
    %v972 = vadd.f32 %v709, %v795
    %v973 = vadd.f32 %v710, %v795
    %v974 = vadd.f32 %v711, %v795
    %v975 = vadd.f32 %v712, %v795
    %v976 = vadd.f32 %v713, %v795
    %v977 = vadd.f32 %v714, %v795
    %v978 = vadd.f32 %v715, %v795
    %v979 = vadd.f32 %v716, %v795
    %v980 = vadd.f32 %v717, %v795
    %v981 = vadd.f32 %v718, %v795
    %v982 = vadd.f32 %v719, %v795
    %v983 = vadd.f32 %v720, %v795
    %v984 = vadd.f32 %v721, %v795
    %v985 = vadd.f32 %v722, %v795
    %v986 = vadd.f32 %v723, %v795
    %v987 = vadd.f32 %v724, %v795
    %v988 = vadd.f32 %v725, %v795
    %v989 = vadd.f32 %v726, %v795
    %v990 = vadd.f32 %v727, %v795
    %v991 = vadd.f32 %v728, %v795
    %v992 = vadd.f32 %v729, %v795
    %v993 = vadd.f32 %v730, %v795
    %v994 = vadd.f32 %v731, %v795
    %v995 = vadd.f32 %v732, %v795
    %v996 = vadd.f32 %v733, %v795
    %v997 = vadd.f32 %v734, %v795
    %v998 = vadd.f32 %v735, %v795
    %v999 = vadd.f32 %v736, %v795
    %v1000 = vadd.f32 %v737, %v795
    %v1001 = vadd.f32 %v738, %v795
    %v1002 = vadd.f32 %v739, %v795
    %v1003 = vadd.f32 %v740, %v795
    %v1004 = vadd.f32 %v741, %v795
    %v1005 = vadd.f32 %v742, %v795
    %v1006 = vadd.f32 %v743, %v795
    %v1007 = vadd.f32 %v744, %v795
    %v1008 = vadd.f32 %v745, %v795
    %v1009 = vadd.f32 %v746, %v795
    %v1010 = vadd.f32 %v747, %v795
    %v1011 = vadd.f32 %v748, %v795
    %v1012 = vadd.f32 %v749, %v795
    %v1013 = vadd.f32 %v750, %v795
    %v1014 = vadd.f32 %v751, %v795
    %v1015 = vadd.f32 %v752, %v795
    %v1016 = vadd.f32 %v753, %v795
    %v1017 = vadd.f32 %v754, %v795
    %v1018 = vadd.f32 %v755, %v795
    %v1019 = vadd.f32 %v756, %v795
    %v1020 = vadd.f32 %v757, %v795
    %v1021 = vadd.f32 %v758, %v795
    %v1022 = vadd.f32 %v759, %v795
    %v1023 = vadd.f32 %v760, %v795
    %v1024 = vadd.f32 %v761, %v795
    %v1025 = vadd.f32 %v762, %v795
    %v1026 = vadd.f32 %v763, %v795
    %v1027 = vadd.f32 %v764, %v795
    %v1028 = vadd.f32 %v765, %v795
    %v1029 = vadd.f32 %v766, %v795
    %v1030 = vadd.f32 %v767, %v795
    %v1031 = vadd.f32 %v768, %v795
    %v1032 = vadd.f32 %v769, %v795
    %v1033 = vadd.f32 %v770, %v795
    %v1034 = vadd.f32 %v771, %v795
    %v1035 = vadd.f32 %v772, %v795
    %v1036 = vadd.f32 %v773, %v795
    %v1037 = vadd.f32 %v774, %v795
    %v1038 = vadd.f32 %v775, %v795
    %v1039 = vadd.f32 %v776, %v795
    %v1040 = vadd.f32 %v777, %v795
    %v1041 = vadd.f32 %v778, %v795
    %v1042 = vadd.f32 %v779, %v795
    %v1043 = vadd.f32 %v780, %v795
    %v1044 = vadd.f32 %v781, %v795
    %v1045 = vadd.f32 %v782, %v795
    %v1046 = vadd.f32 %v783, %v795
    %v1047 = vadd.f32 %v784, %v795
    %v1048 = vadd.f32 %v785, %v795
    %v1049 = vadd.f32 %v786, %v795
    %v1050 = vadd.f32 %v787, %v795
    %v1051 = vadd.f32 %v788, %v795
    %v1052 = vadd.f32 %v789, %v795
    %vm1053 = vcmp.gt.f32.partialorder %v797, 0.0
    %vm1054 = vcmp.gt.f32.partialorder %v798, 0.0
    %vm1055 = vcmp.gt.f32.partialorder %v799, 0.0
    %vm1056 = vcmp.gt.f32.partialorder %v800, 0.0
    %vm1057 = vcmp.gt.f32.partialorder %v801, 0.0
    %vm1058 = vcmp.gt.f32.partialorder %v802, 0.0
    %vm1059 = vcmp.gt.f32.partialorder %v803, 0.0
    %vm1060 = vcmp.gt.f32.partialorder %v804, 0.0
    %vm1061 = vcmp.gt.f32.partialorder %v805, 0.0
    %vm1062 = vcmp.gt.f32.partialorder %v806, 0.0
    %vm1063 = vcmp.gt.f32.partialorder %v807, 0.0
    %vm1064 = vcmp.gt.f32.partialorder %v808, 0.0
    %vm1065 = vcmp.gt.f32.partialorder %v809, 0.0
    %vm1066 = vcmp.gt.f32.partialorder %v810, 0.0
    %vm1067 = vcmp.gt.f32.partialorder %v811, 0.0
    %vm1068 = vcmp.gt.f32.partialorder %v812, 0.0
    %vm1069 = vcmp.gt.f32.partialorder %v813, 0.0
    %vm1070 = vcmp.gt.f32.partialorder %v814, 0.0
    %vm1071 = vcmp.gt.f32.partialorder %v815, 0.0
    %vm1072 = vcmp.gt.f32.partialorder %v816, 0.0
    %vm1073 = vcmp.gt.f32.partialorder %v817, 0.0
    %vm1074 = vcmp.gt.f32.partialorder %v818, 0.0
    %vm1075 = vcmp.gt.f32.partialorder %v819, 0.0
    %vm1076 = vcmp.gt.f32.partialorder %v820, 0.0
    %vm1077 = vcmp.gt.f32.partialorder %v821, 0.0
    %vm1078 = vcmp.gt.f32.partialorder %v822, 0.0
    %vm1079 = vcmp.gt.f32.partialorder %v823, 0.0
    %vm1080 = vcmp.gt.f32.partialorder %v824, 0.0
    %vm1081 = vcmp.gt.f32.partialorder %v825, 0.0
    %vm1082 = vcmp.gt.f32.partialorder %v826, 0.0
    %vm1083 = vcmp.gt.f32.partialorder %v827, 0.0
    %vm1084 = vcmp.gt.f32.partialorder %v828, 0.0
    %vm1085 = vcmp.gt.f32.partialorder %v829, 0.0
    %vm1086 = vcmp.gt.f32.partialorder %v830, 0.0
    %vm1087 = vcmp.gt.f32.partialorder %v831, 0.0
    %vm1088 = vcmp.gt.f32.partialorder %v832, 0.0
    %vm1089 = vcmp.gt.f32.partialorder %v833, 0.0
    %vm1090 = vcmp.gt.f32.partialorder %v834, 0.0
    %vm1091 = vcmp.gt.f32.partialorder %v835, 0.0
    %vm1092 = vcmp.gt.f32.partialorder %v836, 0.0
    %vm1093 = vcmp.gt.f32.partialorder %v837, 0.0
    %vm1094 = vcmp.gt.f32.partialorder %v838, 0.0
    %vm1095 = vcmp.gt.f32.partialorder %v839, 0.0
    %vm1096 = vcmp.gt.f32.partialorder %v840, 0.0
    %vm1097 = vcmp.gt.f32.partialorder %v841, 0.0
    %vm1098 = vcmp.gt.f32.partialorder %v842, 0.0
    %vm1099 = vcmp.gt.f32.partialorder %v843, 0.0
    %vm1100 = vcmp.gt.f32.partialorder %v844, 0.0
    %vm1101 = vcmp.gt.f32.partialorder %v845, 0.0
    %vm1102 = vcmp.gt.f32.partialorder %v846, 0.0
    %vm1103 = vcmp.gt.f32.partialorder %v847, 0.0
    %vm1104 = vcmp.gt.f32.partialorder %v848, 0.0
    %vm1105 = vcmp.gt.f32.partialorder %v849, 0.0
    %vm1106 = vcmp.gt.f32.partialorder %v850, 0.0
    %vm1107 = vcmp.gt.f32.partialorder %v851, 0.0
    %vm1108 = vcmp.gt.f32.partialorder %v852, 0.0
    %vm1109 = vcmp.gt.f32.partialorder %v853, 0.0
    %vm1110 = vcmp.gt.f32.partialorder %v854, 0.0
    %vm1111 = vcmp.gt.f32.partialorder %v855, 0.0
    %vm1112 = vcmp.gt.f32.partialorder %v856, 0.0
    %vm1113 = vcmp.gt.f32.partialorder %v857, 0.0
    %vm1114 = vcmp.gt.f32.partialorder %v858, 0.0
    %vm1115 = vcmp.gt.f32.partialorder %v859, 0.0
    %vm1116 = vcmp.gt.f32.partialorder %v860, 0.0
    %vm1117 = vcmp.gt.f32.partialorder %v861, 0.0
    %vm1118 = vcmp.gt.f32.partialorder %v862, 0.0
    %vm1119 = vcmp.gt.f32.partialorder %v863, 0.0
    %vm1120 = vcmp.gt.f32.partialorder %v864, 0.0
    %vm1121 = vcmp.gt.f32.partialorder %v865, 0.0
    %vm1122 = vcmp.gt.f32.partialorder %v866, 0.0
    %vm1123 = vcmp.gt.f32.partialorder %v867, 0.0
    %vm1124 = vcmp.gt.f32.partialorder %v868, 0.0
    %vm1125 = vcmp.gt.f32.partialorder %v869, 0.0
    %vm1126 = vcmp.gt.f32.partialorder %v870, 0.0
    %vm1127 = vcmp.gt.f32.partialorder %v871, 0.0
    %vm1128 = vcmp.gt.f32.partialorder %v872, 0.0
    %vm1129 = vcmp.gt.f32.partialorder %v873, 0.0
    %vm1130 = vcmp.gt.f32.partialorder %v874, 0.0
    %vm1131 = vcmp.gt.f32.partialorder %v875, 0.0
    %vm1132 = vcmp.gt.f32.partialorder %v876, 0.0
    %vm1133 = vcmp.gt.f32.partialorder %v877, 0.0
    %vm1134 = vcmp.gt.f32.partialorder %v878, 0.0
    %vm1135 = vcmp.gt.f32.partialorder %v879, 0.0
    %vm1136 = vcmp.gt.f32.partialorder %v880, 0.0
    %vm1137 = vcmp.gt.f32.partialorder %v881, 0.0
    %vm1138 = vcmp.gt.f32.partialorder %v882, 0.0
    %vm1139 = vcmp.gt.f32.partialorder %v883, 0.0
    %vm1140 = vcmp.gt.f32.partialorder %v884, 0.0
    %vm1141 = vcmp.gt.f32.partialorder %v885, 0.0
    %vm1142 = vcmp.gt.f32.partialorder %v886, 0.0
    %vm1143 = vcmp.gt.f32.partialorder %v887, 0.0
    %vm1144 = vcmp.gt.f32.partialorder %v888, 0.0
    %vm1145 = vcmp.gt.f32.partialorder %v889, 0.0
    %vm1146 = vcmp.gt.f32.partialorder %v890, 0.0
    %vm1147 = vcmp.gt.f32.partialorder %v891, 0.0
    %vm1148 = vcmp.gt.f32.partialorder %v892, 0.0
    %vm1149 = vcmp.gt.f32.partialorder %v893, 0.0
    %vm1150 = vcmp.gt.f32.partialorder %v894, 0.0
    %vm1151 = vcmp.gt.f32.partialorder %v895, 0.0
    %vm1152 = vcmp.gt.f32.partialorder %v896, 0.0
    %vm1153 = vcmp.gt.f32.partialorder %v897, 0.0
    %vm1154 = vcmp.gt.f32.partialorder %v898, 0.0
    %vm1155 = vcmp.gt.f32.partialorder %v899, 0.0
    %vm1156 = vcmp.gt.f32.partialorder %v900, 0.0
    %vm1157 = vcmp.gt.f32.partialorder %v901, 0.0
    %vm1158 = vcmp.gt.f32.partialorder %v902, 0.0
    %vm1159 = vcmp.gt.f32.partialorder %v903, 0.0
    %vm1160 = vcmp.gt.f32.partialorder %v904, 0.0
    %vm1161 = vcmp.gt.f32.partialorder %v905, 0.0
    %vm1162 = vcmp.gt.f32.partialorder %v906, 0.0
    %vm1163 = vcmp.gt.f32.partialorder %v907, 0.0
    %vm1164 = vcmp.gt.f32.partialorder %v908, 0.0
    %vm1165 = vcmp.gt.f32.partialorder %v909, 0.0
    %vm1166 = vcmp.gt.f32.partialorder %v910, 0.0
    %vm1167 = vcmp.gt.f32.partialorder %v911, 0.0
    %vm1168 = vcmp.gt.f32.partialorder %v912, 0.0
    %vm1169 = vcmp.gt.f32.partialorder %v913, 0.0
    %vm1170 = vcmp.gt.f32.partialorder %v914, 0.0
    %vm1171 = vcmp.gt.f32.partialorder %v915, 0.0
    %vm1172 = vcmp.gt.f32.partialorder %v916, 0.0
    %vm1173 = vcmp.gt.f32.partialorder %v917, 0.0
    %vm1174 = vcmp.gt.f32.partialorder %v918, 0.0
    %vm1175 = vcmp.gt.f32.partialorder %v919, 0.0
    %vm1176 = vcmp.gt.f32.partialorder %v920, 0.0
    %vm1177 = vcmp.gt.f32.partialorder %v921, 0.0
    %vm1178 = vcmp.gt.f32.partialorder %v922, 0.0
    %vm1179 = vcmp.gt.f32.partialorder %v923, 0.0
    %vm1180 = vcmp.gt.f32.partialorder %v924, 0.0
    %vm1181 = vcmp.gt.f32.partialorder %v925, 0.0
    %vm1182 = vcmp.gt.f32.partialorder %v926, 0.0
    %vm1183 = vcmp.gt.f32.partialorder %v927, 0.0
    %vm1184 = vcmp.gt.f32.partialorder %v928, 0.0
    %vm1185 = vcmp.gt.f32.partialorder %v929, 0.0
    %vm1186 = vcmp.gt.f32.partialorder %v930, 0.0
    %vm1187 = vcmp.gt.f32.partialorder %v931, 0.0
    %vm1188 = vcmp.gt.f32.partialorder %v932, 0.0
    %vm1189 = vcmp.gt.f32.partialorder %v933, 0.0
    %vm1190 = vcmp.gt.f32.partialorder %v934, 0.0
    %vm1191 = vcmp.gt.f32.partialorder %v935, 0.0
    %vm1192 = vcmp.gt.f32.partialorder %v936, 0.0
    %vm1193 = vcmp.gt.f32.partialorder %v937, 0.0
    %vm1194 = vcmp.gt.f32.partialorder %v938, 0.0
    %vm1195 = vcmp.gt.f32.partialorder %v939, 0.0
    %vm1196 = vcmp.gt.f32.partialorder %v940, 0.0
    %vm1197 = vcmp.gt.f32.partialorder %v941, 0.0
    %vm1198 = vcmp.gt.f32.partialorder %v942, 0.0
    %vm1199 = vcmp.gt.f32.partialorder %v943, 0.0
    %vm1200 = vcmp.gt.f32.partialorder %v944, 0.0
    %vm1201 = vcmp.gt.f32.partialorder %v945, 0.0
    %vm1202 = vcmp.gt.f32.partialorder %v946, 0.0
    %vm1203 = vcmp.gt.f32.partialorder %v947, 0.0
    %vm1204 = vcmp.gt.f32.partialorder %v948, 0.0
    %vm1205 = vcmp.gt.f32.partialorder %v949, 0.0
    %vm1206 = vcmp.gt.f32.partialorder %v950, 0.0
    %vm1207 = vcmp.gt.f32.partialorder %v951, 0.0
    %vm1208 = vcmp.gt.f32.partialorder %v952, 0.0
    %vm1209 = vcmp.gt.f32.partialorder %v953, 0.0
    %vm1210 = vcmp.gt.f32.partialorder %v954, 0.0
    %vm1211 = vcmp.gt.f32.partialorder %v955, 0.0
    %vm1212 = vcmp.gt.f32.partialorder %v956, 0.0
    %vm1213 = vcmp.gt.f32.partialorder %v957, 0.0
    %vm1214 = vcmp.gt.f32.partialorder %v958, 0.0
    %vm1215 = vcmp.gt.f32.partialorder %v959, 0.0
    %vm1216 = vcmp.gt.f32.partialorder %v960, 0.0
    %vm1217 = vcmp.gt.f32.partialorder %v961, 0.0
    %vm1218 = vcmp.gt.f32.partialorder %v962, 0.0
    %vm1219 = vcmp.gt.f32.partialorder %v963, 0.0
    %vm1220 = vcmp.gt.f32.partialorder %v964, 0.0
    %vm1221 = vcmp.gt.f32.partialorder %v965, 0.0
    %vm1222 = vcmp.gt.f32.partialorder %v966, 0.0
    %vm1223 = vcmp.gt.f32.partialorder %v967, 0.0
    %vm1224 = vcmp.gt.f32.partialorder %v968, 0.0
    %vm1225 = vcmp.gt.f32.partialorder %v969, 0.0
    %vm1226 = vcmp.gt.f32.partialorder %v970, 0.0
    %vm1227 = vcmp.gt.f32.partialorder %v971, 0.0
    %vm1228 = vcmp.gt.f32.partialorder %v972, 0.0
    %vm1229 = vcmp.gt.f32.partialorder %v973, 0.0
    %vm1230 = vcmp.gt.f32.partialorder %v974, 0.0
    %vm1231 = vcmp.gt.f32.partialorder %v975, 0.0
    %vm1232 = vcmp.gt.f32.partialorder %v976, 0.0
    %vm1233 = vcmp.gt.f32.partialorder %v977, 0.0
    %vm1234 = vcmp.gt.f32.partialorder %v978, 0.0
    %vm1235 = vcmp.gt.f32.partialorder %v979, 0.0
    %vm1236 = vcmp.gt.f32.partialorder %v980, 0.0
    %vm1237 = vcmp.gt.f32.partialorder %v981, 0.0
    %vm1238 = vcmp.gt.f32.partialorder %v982, 0.0
    %vm1239 = vcmp.gt.f32.partialorder %v983, 0.0
    %vm1240 = vcmp.gt.f32.partialorder %v984, 0.0
    %vm1241 = vcmp.gt.f32.partialorder %v985, 0.0
    %vm1242 = vcmp.gt.f32.partialorder %v986, 0.0
    %vm1243 = vcmp.gt.f32.partialorder %v987, 0.0
    %vm1244 = vcmp.gt.f32.partialorder %v988, 0.0
    %vm1245 = vcmp.gt.f32.partialorder %v989, 0.0
    %vm1246 = vcmp.gt.f32.partialorder %v990, 0.0
    %vm1247 = vcmp.gt.f32.partialorder %v991, 0.0
    %vm1248 = vcmp.gt.f32.partialorder %v992, 0.0
    %vm1249 = vcmp.gt.f32.partialorder %v993, 0.0
    %vm1250 = vcmp.gt.f32.partialorder %v994, 0.0
    %vm1251 = vcmp.gt.f32.partialorder %v995, 0.0
    %vm1252 = vcmp.gt.f32.partialorder %v996, 0.0
    %vm1253 = vcmp.gt.f32.partialorder %v997, 0.0
    %vm1254 = vcmp.gt.f32.partialorder %v998, 0.0
    %vm1255 = vcmp.gt.f32.partialorder %v999, 0.0
    %vm1256 = vcmp.gt.f32.partialorder %v1000, 0.0
    %vm1257 = vcmp.gt.f32.partialorder %v1001, 0.0
    %vm1258 = vcmp.gt.f32.partialorder %v1002, 0.0
    %vm1259 = vcmp.gt.f32.partialorder %v1003, 0.0
    %vm1260 = vcmp.gt.f32.partialorder %v1004, 0.0
    %vm1261 = vcmp.gt.f32.partialorder %v1005, 0.0
    %vm1262 = vcmp.gt.f32.partialorder %v1006, 0.0
    %vm1263 = vcmp.gt.f32.partialorder %v1007, 0.0
    %vm1264 = vcmp.gt.f32.partialorder %v1008, 0.0
    %vm1265 = vcmp.gt.f32.partialorder %v1009, 0.0
    %vm1266 = vcmp.gt.f32.partialorder %v1010, 0.0
    %vm1267 = vcmp.gt.f32.partialorder %v1011, 0.0
    %vm1268 = vcmp.gt.f32.partialorder %v1012, 0.0
    %vm1269 = vcmp.gt.f32.partialorder %v1013, 0.0
    %vm1270 = vcmp.gt.f32.partialorder %v1014, 0.0
    %vm1271 = vcmp.gt.f32.partialorder %v1015, 0.0
    %vm1272 = vcmp.gt.f32.partialorder %v1016, 0.0
    %vm1273 = vcmp.gt.f32.partialorder %v1017, 0.0
    %vm1274 = vcmp.gt.f32.partialorder %v1018, 0.0
    %vm1275 = vcmp.gt.f32.partialorder %v1019, 0.0
    %vm1276 = vcmp.gt.f32.partialorder %v1020, 0.0
    %vm1277 = vcmp.gt.f32.partialorder %v1021, 0.0
    %vm1278 = vcmp.gt.f32.partialorder %v1022, 0.0
    %vm1279 = vcmp.gt.f32.partialorder %v1023, 0.0
    %vm1280 = vcmp.gt.f32.partialorder %v1024, 0.0
    %vm1281 = vcmp.gt.f32.partialorder %v1025, 0.0
    %vm1282 = vcmp.gt.f32.partialorder %v1026, 0.0
    %vm1283 = vcmp.gt.f32.partialorder %v1027, 0.0
    %vm1284 = vcmp.gt.f32.partialorder %v1028, 0.0
    %vm1285 = vcmp.gt.f32.partialorder %v1029, 0.0
    %vm1286 = vcmp.gt.f32.partialorder %v1030, 0.0
    %vm1287 = vcmp.gt.f32.partialorder %v1031, 0.0
    %vm1288 = vcmp.gt.f32.partialorder %v1032, 0.0
    %vm1289 = vcmp.gt.f32.partialorder %v1033, 0.0
    %vm1290 = vcmp.gt.f32.partialorder %v1034, 0.0
    %vm1291 = vcmp.gt.f32.partialorder %v1035, 0.0
    %vm1292 = vcmp.gt.f32.partialorder %v1036, 0.0
    %vm1293 = vcmp.gt.f32.partialorder %v1037, 0.0
    %vm1294 = vcmp.gt.f32.partialorder %v1038, 0.0
    %vm1295 = vcmp.gt.f32.partialorder %v1039, 0.0
    %vm1296 = vcmp.gt.f32.partialorder %v1040, 0.0
    %vm1297 = vcmp.gt.f32.partialorder %v1041, 0.0
    %vm1298 = vcmp.gt.f32.partialorder %v1042, 0.0
    %vm1299 = vcmp.gt.f32.partialorder %v1043, 0.0
    %vm1300 = vcmp.gt.f32.partialorder %v1044, 0.0
    %vm1301 = vcmp.gt.f32.partialorder %v1045, 0.0
    %vm1302 = vcmp.gt.f32.partialorder %v1046, 0.0
    %vm1303 = vcmp.gt.f32.partialorder %v1047, 0.0
    %vm1304 = vcmp.gt.f32.partialorder %v1048, 0.0
    %vm1305 = vcmp.gt.f32.partialorder %v1049, 0.0
    %vm1306 = vcmp.gt.f32.partialorder %v1050, 0.0
    %vm1307 = vcmp.gt.f32.partialorder %v1051, 0.0
    %vm1308 = vcmp.gt.f32.partialorder %v1052, 0.0
    %v1309 = vmul.f32 %v797, 0.1
    %v1310 = vmul.f32 %v798, 0.1
    %v1311 = vmul.f32 %v799, 0.1
    %v1312 = vmul.f32 %v800, 0.1
    %v1313 = vmul.f32 %v801, 0.1
    %v1314 = vmul.f32 %v802, 0.1
    %v1315 = vmul.f32 %v803, 0.1
    %v1316 = vmul.f32 %v804, 0.1
    %v1317 = vmul.f32 %v805, 0.1
    %v1318 = vmul.f32 %v806, 0.1
    %v1319 = vmul.f32 %v807, 0.1
    %v1320 = vmul.f32 %v808, 0.1
    %v1321 = vmul.f32 %v809, 0.1
    %v1322 = vmul.f32 %v810, 0.1
    %v1323 = vmul.f32 %v811, 0.1
    %v1324 = vmul.f32 %v812, 0.1
    %v1325 = vmul.f32 %v813, 0.1
    %v1326 = vmul.f32 %v814, 0.1
    %v1327 = vmul.f32 %v815, 0.1
    %v1328 = vmul.f32 %v816, 0.1
    %v1329 = vmul.f32 %v817, 0.1
    %v1330 = vmul.f32 %v818, 0.1
    %v1331 = vmul.f32 %v819, 0.1
    %v1332 = vmul.f32 %v820, 0.1
    %v1333 = vmul.f32 %v821, 0.1
    %v1334 = vmul.f32 %v822, 0.1
    %v1335 = vmul.f32 %v823, 0.1
    %v1336 = vmul.f32 %v824, 0.1
    %v1337 = vmul.f32 %v825, 0.1
    %v1338 = vmul.f32 %v826, 0.1
    %v1339 = vmul.f32 %v827, 0.1
    %v1340 = vmul.f32 %v828, 0.1
    %v1341 = vmul.f32 %v829, 0.1
    %v1342 = vmul.f32 %v830, 0.1
    %v1343 = vmul.f32 %v831, 0.1
    %v1344 = vmul.f32 %v832, 0.1
    %v1345 = vmul.f32 %v833, 0.1
    %v1346 = vmul.f32 %v834, 0.1
    %v1347 = vmul.f32 %v835, 0.1
    %v1348 = vmul.f32 %v836, 0.1
    %v1349 = vmul.f32 %v837, 0.1
    %v1350 = vmul.f32 %v838, 0.1
    %v1351 = vmul.f32 %v839, 0.1
    %v1352 = vmul.f32 %v840, 0.1
    %v1353 = vmul.f32 %v841, 0.1
    %v1354 = vmul.f32 %v842, 0.1
    %v1355 = vmul.f32 %v843, 0.1
    %v1356 = vmul.f32 %v844, 0.1
    %v1357 = vmul.f32 %v845, 0.1
    %v1358 = vmul.f32 %v846, 0.1
    %v1359 = vmul.f32 %v847, 0.1
    %v1360 = vmul.f32 %v848, 0.1
    %v1361 = vmul.f32 %v849, 0.1
    %v1362 = vmul.f32 %v850, 0.1
    %v1363 = vmul.f32 %v851, 0.1
    %v1364 = vmul.f32 %v852, 0.1
    %v1365 = vmul.f32 %v853, 0.1
    %v1366 = vmul.f32 %v854, 0.1
    %v1367 = vmul.f32 %v855, 0.1
    %v1368 = vmul.f32 %v856, 0.1
    %v1369 = vmul.f32 %v857, 0.1
    %v1370 = vmul.f32 %v858, 0.1
    %v1371 = vmul.f32 %v859, 0.1
    %v1372 = vmul.f32 %v860, 0.1
    %v1373 = vmul.f32 %v861, 0.1
    %v1374 = vmul.f32 %v862, 0.1
    %v1375 = vmul.f32 %v863, 0.1
    %v1376 = vmul.f32 %v864, 0.1
    %v1377 = vmul.f32 %v865, 0.1
    %v1378 = vmul.f32 %v866, 0.1
    %v1379 = vmul.f32 %v867, 0.1
    %v1380 = vmul.f32 %v868, 0.1
    %v1381 = vmul.f32 %v869, 0.1
    %v1382 = vmul.f32 %v870, 0.1
    %v1383 = vmul.f32 %v871, 0.1
    %v1384 = vmul.f32 %v872, 0.1
    %v1385 = vmul.f32 %v873, 0.1
    %v1386 = vmul.f32 %v874, 0.1
    %v1387 = vmul.f32 %v875, 0.1
    %v1388 = vmul.f32 %v876, 0.1
    %v1389 = vmul.f32 %v877, 0.1
    %v1390 = vmul.f32 %v878, 0.1
    %v1391 = vmul.f32 %v879, 0.1
    %v1392 = vmul.f32 %v880, 0.1
    %v1393 = vmul.f32 %v881, 0.1
    %v1394 = vmul.f32 %v882, 0.1
    %v1395 = vmul.f32 %v883, 0.1
    %v1396 = vmul.f32 %v884, 0.1
    %v1397 = vmul.f32 %v885, 0.1
    %v1398 = vmul.f32 %v886, 0.1
    %v1399 = vmul.f32 %v887, 0.1
    %v1400 = vmul.f32 %v888, 0.1
    %v1401 = vmul.f32 %v889, 0.1
    %v1402 = vmul.f32 %v890, 0.1
    %v1403 = vmul.f32 %v891, 0.1
    %v1404 = vmul.f32 %v892, 0.1
    %v1405 = vmul.f32 %v893, 0.1
    %v1406 = vmul.f32 %v894, 0.1
    %v1407 = vmul.f32 %v895, 0.1
    %v1408 = vmul.f32 %v896, 0.1
    %v1409 = vmul.f32 %v897, 0.1
    %v1410 = vmul.f32 %v898, 0.1
    %v1411 = vmul.f32 %v899, 0.1
    %v1412 = vmul.f32 %v900, 0.1
    %v1413 = vmul.f32 %v901, 0.1
    %v1414 = vmul.f32 %v902, 0.1
    %v1415 = vmul.f32 %v903, 0.1
    %v1416 = vmul.f32 %v904, 0.1
    %v1417 = vmul.f32 %v905, 0.1
    %v1418 = vmul.f32 %v906, 0.1
    %v1419 = vmul.f32 %v907, 0.1
    %v1420 = vmul.f32 %v908, 0.1
    %v1421 = vmul.f32 %v909, 0.1
    %v1422 = vmul.f32 %v910, 0.1
    %v1423 = vmul.f32 %v911, 0.1
    %v1424 = vmul.f32 %v912, 0.1
    %v1425 = vmul.f32 %v913, 0.1
    %v1426 = vmul.f32 %v914, 0.1
    %v1427 = vmul.f32 %v915, 0.1
    %v1428 = vmul.f32 %v916, 0.1
    %v1429 = vmul.f32 %v917, 0.1
    %v1430 = vmul.f32 %v918, 0.1
    %v1431 = vmul.f32 %v919, 0.1
    %v1432 = vmul.f32 %v920, 0.1
    %v1433 = vmul.f32 %v921, 0.1
    %v1434 = vmul.f32 %v922, 0.1
    %v1435 = vmul.f32 %v923, 0.1
    %v1436 = vmul.f32 %v924, 0.1
    %v1437 = vmul.f32 %v925, 0.1
    %v1438 = vmul.f32 %v926, 0.1
    %v1439 = vmul.f32 %v927, 0.1
    %v1440 = vmul.f32 %v928, 0.1
    %v1441 = vmul.f32 %v929, 0.1
    %v1442 = vmul.f32 %v930, 0.1
    %v1443 = vmul.f32 %v931, 0.1
    %v1444 = vmul.f32 %v932, 0.1
    %v1445 = vmul.f32 %v933, 0.1
    %v1446 = vmul.f32 %v934, 0.1
    %v1447 = vmul.f32 %v935, 0.1
    %v1448 = vmul.f32 %v936, 0.1
    %v1449 = vmul.f32 %v937, 0.1
    %v1450 = vmul.f32 %v938, 0.1
    %v1451 = vmul.f32 %v939, 0.1
    %v1452 = vmul.f32 %v940, 0.1
    %v1453 = vmul.f32 %v941, 0.1
    %v1454 = vmul.f32 %v942, 0.1
    %v1455 = vmul.f32 %v943, 0.1
    %v1456 = vmul.f32 %v944, 0.1
    %v1457 = vmul.f32 %v945, 0.1
    %v1458 = vmul.f32 %v946, 0.1
    %v1459 = vmul.f32 %v947, 0.1
    %v1460 = vmul.f32 %v948, 0.1
    %v1461 = vmul.f32 %v949, 0.1
    %v1462 = vmul.f32 %v950, 0.1
    %v1463 = vmul.f32 %v951, 0.1
    %v1464 = vmul.f32 %v952, 0.1
    %v1465 = vmul.f32 %v953, 0.1
    %v1466 = vmul.f32 %v954, 0.1
    %v1467 = vmul.f32 %v955, 0.1
    %v1468 = vmul.f32 %v956, 0.1
    %v1469 = vmul.f32 %v957, 0.1
    %v1470 = vmul.f32 %v958, 0.1
    %v1471 = vmul.f32 %v959, 0.1
    %v1472 = vmul.f32 %v960, 0.1
    %v1473 = vmul.f32 %v961, 0.1
    %v1474 = vmul.f32 %v962, 0.1
    %v1475 = vmul.f32 %v963, 0.1
    %v1476 = vmul.f32 %v964, 0.1
    %v1477 = vmul.f32 %v965, 0.1
    %v1478 = vmul.f32 %v966, 0.1
    %v1479 = vmul.f32 %v967, 0.1
    %v1480 = vmul.f32 %v968, 0.1
    %v1481 = vmul.f32 %v969, 0.1
    %v1482 = vmul.f32 %v970, 0.1
    %v1483 = vmul.f32 %v971, 0.1
    %v1484 = vmul.f32 %v972, 0.1
    %v1485 = vmul.f32 %v973, 0.1
    %v1486 = vmul.f32 %v974, 0.1
    %v1487 = vmul.f32 %v975, 0.1
    %v1488 = vmul.f32 %v976, 0.1
    %v1489 = vmul.f32 %v977, 0.1
    %v1490 = vmul.f32 %v978, 0.1
    %v1491 = vmul.f32 %v979, 0.1
    %v1492 = vmul.f32 %v980, 0.1
    %v1493 = vmul.f32 %v981, 0.1
    %v1494 = vmul.f32 %v982, 0.1
    %v1495 = vmul.f32 %v983, 0.1
    %v1496 = vmul.f32 %v984, 0.1
    %v1497 = vmul.f32 %v985, 0.1
    %v1498 = vmul.f32 %v986, 0.1
    %v1499 = vmul.f32 %v987, 0.1
    %v1500 = vmul.f32 %v988, 0.1
    %v1501 = vmul.f32 %v989, 0.1
    %v1502 = vmul.f32 %v990, 0.1
    %v1503 = vmul.f32 %v991, 0.1
    %v1504 = vmul.f32 %v992, 0.1
    %v1505 = vmul.f32 %v993, 0.1
    %v1506 = vmul.f32 %v994, 0.1
    %v1507 = vmul.f32 %v995, 0.1
    %v1508 = vmul.f32 %v996, 0.1
    %v1509 = vmul.f32 %v997, 0.1
    %v1510 = vmul.f32 %v998, 0.1
    %v1511 = vmul.f32 %v999, 0.1
    %v1512 = vmul.f32 %v1000, 0.1
    %v1513 = vmul.f32 %v1001, 0.1
    %v1514 = vmul.f32 %v1002, 0.1
    %v1515 = vmul.f32 %v1003, 0.1
    %v1516 = vmul.f32 %v1004, 0.1
    %v1517 = vmul.f32 %v1005, 0.1
    %v1518 = vmul.f32 %v1006, 0.1
    %v1519 = vmul.f32 %v1007, 0.1
    %v1520 = vmul.f32 %v1008, 0.1
    %v1521 = vmul.f32 %v1009, 0.1
    %v1522 = vmul.f32 %v1010, 0.1
    %v1523 = vmul.f32 %v1011, 0.1
    %v1524 = vmul.f32 %v1012, 0.1
    %v1525 = vmul.f32 %v1013, 0.1
    %v1526 = vmul.f32 %v1014, 0.1
    %v1527 = vmul.f32 %v1015, 0.1
    %v1528 = vmul.f32 %v1016, 0.1
    %v1529 = vmul.f32 %v1017, 0.1
    %v1530 = vmul.f32 %v1018, 0.1
    %v1531 = vmul.f32 %v1019, 0.1
    %v1532 = vmul.f32 %v1020, 0.1
    %v1533 = vmul.f32 %v1021, 0.1
    %v1534 = vmul.f32 %v1022, 0.1
    %v1535 = vmul.f32 %v1023, 0.1
    %v1536 = vmul.f32 %v1024, 0.1
    %v1537 = vmul.f32 %v1025, 0.1
    %v1538 = vmul.f32 %v1026, 0.1
    %v1539 = vmul.f32 %v1027, 0.1
    %v1540 = vmul.f32 %v1028, 0.1
    %v1541 = vmul.f32 %v1029, 0.1
    %v1542 = vmul.f32 %v1030, 0.1
    %v1543 = vmul.f32 %v1031, 0.1
    %v1544 = vmul.f32 %v1032, 0.1
    %v1545 = vmul.f32 %v1033, 0.1
    %v1546 = vmul.f32 %v1034, 0.1
    %v1547 = vmul.f32 %v1035, 0.1
    %v1548 = vmul.f32 %v1036, 0.1
    %v1549 = vmul.f32 %v1037, 0.1
    %v1550 = vmul.f32 %v1038, 0.1
    %v1551 = vmul.f32 %v1039, 0.1
    %v1552 = vmul.f32 %v1040, 0.1
    %v1553 = vmul.f32 %v1041, 0.1
    %v1554 = vmul.f32 %v1042, 0.1
    %v1555 = vmul.f32 %v1043, 0.1
    %v1556 = vmul.f32 %v1044, 0.1
    %v1557 = vmul.f32 %v1045, 0.1
    %v1558 = vmul.f32 %v1046, 0.1
    %v1559 = vmul.f32 %v1047, 0.1
    %v1560 = vmul.f32 %v1048, 0.1
    %v1561 = vmul.f32 %v1049, 0.1
    %v1562 = vmul.f32 %v1050, 0.1
    %v1563 = vmul.f32 %v1051, 0.1
    %v1564 = vmul.f32 %v1052, 0.1
    %v1565 = vsel %vm1053, %v797, %v1309
    %v1566 = vsel %vm1054, %v798, %v1310
    %v1567 = vsel %vm1055, %v799, %v1311
    %v1568 = vsel %vm1056, %v800, %v1312
    %v1569 = vsel %vm1057, %v801, %v1313
    %v1570 = vsel %vm1058, %v802, %v1314
    %v1571 = vsel %vm1059, %v803, %v1315
    %v1572 = vsel %vm1060, %v804, %v1316
    %v1573 = vsel %vm1061, %v805, %v1317
    %v1574 = vsel %vm1062, %v806, %v1318
    %v1575 = vsel %vm1063, %v807, %v1319
    %v1576 = vsel %vm1064, %v808, %v1320
    %v1577 = vsel %vm1065, %v809, %v1321
    %v1578 = vsel %vm1066, %v810, %v1322
    %v1579 = vsel %vm1067, %v811, %v1323
    %v1580 = vsel %vm1068, %v812, %v1324
    %v1581 = vsel %vm1069, %v813, %v1325
    %v1582 = vsel %vm1070, %v814, %v1326
    %v1583 = vsel %vm1071, %v815, %v1327
    %v1584 = vsel %vm1072, %v816, %v1328
    %v1585 = vsel %vm1073, %v817, %v1329
    %v1586 = vsel %vm1074, %v818, %v1330
    %v1587 = vsel %vm1075, %v819, %v1331
    %v1588 = vsel %vm1076, %v820, %v1332
    %v1589 = vsel %vm1077, %v821, %v1333
    %v1590 = vsel %vm1078, %v822, %v1334
    %v1591 = vsel %vm1079, %v823, %v1335
    %v1592 = vsel %vm1080, %v824, %v1336
    %v1593 = vsel %vm1081, %v825, %v1337
    %v1594 = vsel %vm1082, %v826, %v1338
    %v1595 = vsel %vm1083, %v827, %v1339
    %v1596 = vsel %vm1084, %v828, %v1340
    %v1597 = vsel %vm1085, %v829, %v1341
    %v1598 = vsel %vm1086, %v830, %v1342
    %v1599 = vsel %vm1087, %v831, %v1343
    %v1600 = vsel %vm1088, %v832, %v1344
    %v1601 = vsel %vm1089, %v833, %v1345
    %v1602 = vsel %vm1090, %v834, %v1346
    %v1603 = vsel %vm1091, %v835, %v1347
    %v1604 = vsel %vm1092, %v836, %v1348
    %v1605 = vsel %vm1093, %v837, %v1349
    %v1606 = vsel %vm1094, %v838, %v1350
    %v1607 = vsel %vm1095, %v839, %v1351
    %v1608 = vsel %vm1096, %v840, %v1352
    %v1609 = vsel %vm1097, %v841, %v1353
    %v1610 = vsel %vm1098, %v842, %v1354
    %v1611 = vsel %vm1099, %v843, %v1355
    %v1612 = vsel %vm1100, %v844, %v1356
    %v1613 = vsel %vm1101, %v845, %v1357
    %v1614 = vsel %vm1102, %v846, %v1358
    %v1615 = vsel %vm1103, %v847, %v1359
    %v1616 = vsel %vm1104, %v848, %v1360
    %v1617 = vsel %vm1105, %v849, %v1361
    %v1618 = vsel %vm1106, %v850, %v1362
    %v1619 = vsel %vm1107, %v851, %v1363
    %v1620 = vsel %vm1108, %v852, %v1364
    %v1621 = vsel %vm1109, %v853, %v1365
    %v1622 = vsel %vm1110, %v854, %v1366
    %v1623 = vsel %vm1111, %v855, %v1367
    %v1624 = vsel %vm1112, %v856, %v1368
    %v1625 = vsel %vm1113, %v857, %v1369
    %v1626 = vsel %vm1114, %v858, %v1370
    %v1627 = vsel %vm1115, %v859, %v1371
    %v1628 = vsel %vm1116, %v860, %v1372
    %v1629 = vsel %vm1117, %v861, %v1373
    %v1630 = vsel %vm1118, %v862, %v1374
    %v1631 = vsel %vm1119, %v863, %v1375
    %v1632 = vsel %vm1120, %v864, %v1376
    %v1633 = vsel %vm1121, %v865, %v1377
    %v1634 = vsel %vm1122, %v866, %v1378
    %v1635 = vsel %vm1123, %v867, %v1379
    %v1636 = vsel %vm1124, %v868, %v1380
    %v1637 = vsel %vm1125, %v869, %v1381
    %v1638 = vsel %vm1126, %v870, %v1382
    %v1639 = vsel %vm1127, %v871, %v1383
    %v1640 = vsel %vm1128, %v872, %v1384
    %v1641 = vsel %vm1129, %v873, %v1385
    %v1642 = vsel %vm1130, %v874, %v1386
    %v1643 = vsel %vm1131, %v875, %v1387
    %v1644 = vsel %vm1132, %v876, %v1388
    %v1645 = vsel %vm1133, %v877, %v1389
    %v1646 = vsel %vm1134, %v878, %v1390
    %v1647 = vsel %vm1135, %v879, %v1391
    %v1648 = vsel %vm1136, %v880, %v1392
    %v1649 = vsel %vm1137, %v881, %v1393
    %v1650 = vsel %vm1138, %v882, %v1394
    %v1651 = vsel %vm1139, %v883, %v1395
    %v1652 = vsel %vm1140, %v884, %v1396
    %v1653 = vsel %vm1141, %v885, %v1397
    %v1654 = vsel %vm1142, %v886, %v1398
    %v1655 = vsel %vm1143, %v887, %v1399
    %v1656 = vsel %vm1144, %v888, %v1400
    %v1657 = vsel %vm1145, %v889, %v1401
    %v1658 = vsel %vm1146, %v890, %v1402
    %v1659 = vsel %vm1147, %v891, %v1403
    %v1660 = vsel %vm1148, %v892, %v1404
    %v1661 = vsel %vm1149, %v893, %v1405
    %v1662 = vsel %vm1150, %v894, %v1406
    %v1663 = vsel %vm1151, %v895, %v1407
    %v1664 = vsel %vm1152, %v896, %v1408
    %v1665 = vsel %vm1153, %v897, %v1409
    %v1666 = vsel %vm1154, %v898, %v1410
    %v1667 = vsel %vm1155, %v899, %v1411
    %v1668 = vsel %vm1156, %v900, %v1412
    %v1669 = vsel %vm1157, %v901, %v1413
    %v1670 = vsel %vm1158, %v902, %v1414
    %v1671 = vsel %vm1159, %v903, %v1415
    %v1672 = vsel %vm1160, %v904, %v1416
    %v1673 = vsel %vm1161, %v905, %v1417
    %v1674 = vsel %vm1162, %v906, %v1418
    %v1675 = vsel %vm1163, %v907, %v1419
    %v1676 = vsel %vm1164, %v908, %v1420
    %v1677 = vsel %vm1165, %v909, %v1421
    %v1678 = vsel %vm1166, %v910, %v1422
    %v1679 = vsel %vm1167, %v911, %v1423
    %v1680 = vsel %vm1168, %v912, %v1424
    %v1681 = vsel %vm1169, %v913, %v1425
    %v1682 = vsel %vm1170, %v914, %v1426
    %v1683 = vsel %vm1171, %v915, %v1427
    %v1684 = vsel %vm1172, %v916, %v1428
    %v1685 = vsel %vm1173, %v917, %v1429
    %v1686 = vsel %vm1174, %v918, %v1430
    %v1687 = vsel %vm1175, %v919, %v1431
    %v1688 = vsel %vm1176, %v920, %v1432
    %v1689 = vsel %vm1177, %v921, %v1433
    %v1690 = vsel %vm1178, %v922, %v1434
    %v1691 = vsel %vm1179, %v923, %v1435
    %v1692 = vsel %vm1180, %v924, %v1436
    %v1693 = vsel %vm1181, %v925, %v1437
    %v1694 = vsel %vm1182, %v926, %v1438
    %v1695 = vsel %vm1183, %v927, %v1439
    %v1696 = vsel %vm1184, %v928, %v1440
    %v1697 = vsel %vm1185, %v929, %v1441
    %v1698 = vsel %vm1186, %v930, %v1442
    %v1699 = vsel %vm1187, %v931, %v1443
    %v1700 = vsel %vm1188, %v932, %v1444
    %v1701 = vsel %vm1189, %v933, %v1445
    %v1702 = vsel %vm1190, %v934, %v1446
    %v1703 = vsel %vm1191, %v935, %v1447
    %v1704 = vsel %vm1192, %v936, %v1448
    %v1705 = vsel %vm1193, %v937, %v1449
    %v1706 = vsel %vm1194, %v938, %v1450
    %v1707 = vsel %vm1195, %v939, %v1451
    %v1708 = vsel %vm1196, %v940, %v1452
    %v1709 = vsel %vm1197, %v941, %v1453
    %v1710 = vsel %vm1198, %v942, %v1454
    %v1711 = vsel %vm1199, %v943, %v1455
    %v1712 = vsel %vm1200, %v944, %v1456
    %v1713 = vsel %vm1201, %v945, %v1457
    %v1714 = vsel %vm1202, %v946, %v1458
    %v1715 = vsel %vm1203, %v947, %v1459
    %v1716 = vsel %vm1204, %v948, %v1460
    %v1717 = vsel %vm1205, %v949, %v1461
    %v1718 = vsel %vm1206, %v950, %v1462
    %v1719 = vsel %vm1207, %v951, %v1463
    %v1720 = vsel %vm1208, %v952, %v1464
    %v1721 = vsel %vm1209, %v953, %v1465
    %v1722 = vsel %vm1210, %v954, %v1466
    %v1723 = vsel %vm1211, %v955, %v1467
    %v1724 = vsel %vm1212, %v956, %v1468
    %v1725 = vsel %vm1213, %v957, %v1469
    %v1726 = vsel %vm1214, %v958, %v1470
    %v1727 = vsel %vm1215, %v959, %v1471
    %v1728 = vsel %vm1216, %v960, %v1472
    %v1729 = vsel %vm1217, %v961, %v1473
    %v1730 = vsel %vm1218, %v962, %v1474
    %v1731 = vsel %vm1219, %v963, %v1475
    %v1732 = vsel %vm1220, %v964, %v1476
    %v1733 = vsel %vm1221, %v965, %v1477
    %v1734 = vsel %vm1222, %v966, %v1478
    %v1735 = vsel %vm1223, %v967, %v1479
    %v1736 = vsel %vm1224, %v968, %v1480
    %v1737 = vsel %vm1225, %v969, %v1481
    %v1738 = vsel %vm1226, %v970, %v1482
    %v1739 = vsel %vm1227, %v971, %v1483
    %v1740 = vsel %vm1228, %v972, %v1484
    %v1741 = vsel %vm1229, %v973, %v1485
    %v1742 = vsel %vm1230, %v974, %v1486
    %v1743 = vsel %vm1231, %v975, %v1487
    %v1744 = vsel %vm1232, %v976, %v1488
    %v1745 = vsel %vm1233, %v977, %v1489
    %v1746 = vsel %vm1234, %v978, %v1490
    %v1747 = vsel %vm1235, %v979, %v1491
    %v1748 = vsel %vm1236, %v980, %v1492
    %v1749 = vsel %vm1237, %v981, %v1493
    %v1750 = vsel %vm1238, %v982, %v1494
    %v1751 = vsel %vm1239, %v983, %v1495
    %v1752 = vsel %vm1240, %v984, %v1496
    %v1753 = vsel %vm1241, %v985, %v1497
    %v1754 = vsel %vm1242, %v986, %v1498
    %v1755 = vsel %vm1243, %v987, %v1499
    %v1756 = vsel %vm1244, %v988, %v1500
    %v1757 = vsel %vm1245, %v989, %v1501
    %v1758 = vsel %vm1246, %v990, %v1502
    %v1759 = vsel %vm1247, %v991, %v1503
    %v1760 = vsel %vm1248, %v992, %v1504
    %v1761 = vsel %vm1249, %v993, %v1505
    %v1762 = vsel %vm1250, %v994, %v1506
    %v1763 = vsel %vm1251, %v995, %v1507
    %v1764 = vsel %vm1252, %v996, %v1508
    %v1765 = vsel %vm1253, %v997, %v1509
    %v1766 = vsel %vm1254, %v998, %v1510
    %v1767 = vsel %vm1255, %v999, %v1511
    %v1768 = vsel %vm1256, %v1000, %v1512
    %v1769 = vsel %vm1257, %v1001, %v1513
    %v1770 = vsel %vm1258, %v1002, %v1514
    %v1771 = vsel %vm1259, %v1003, %v1515
    %v1772 = vsel %vm1260, %v1004, %v1516
    %v1773 = vsel %vm1261, %v1005, %v1517
    %v1774 = vsel %vm1262, %v1006, %v1518
    %v1775 = vsel %vm1263, %v1007, %v1519
    %v1776 = vsel %vm1264, %v1008, %v1520
    %v1777 = vsel %vm1265, %v1009, %v1521
    %v1778 = vsel %vm1266, %v1010, %v1522
    %v1779 = vsel %vm1267, %v1011, %v1523
    %v1780 = vsel %vm1268, %v1012, %v1524
    %v1781 = vsel %vm1269, %v1013, %v1525
    %v1782 = vsel %vm1270, %v1014, %v1526
    %v1783 = vsel %vm1271, %v1015, %v1527
    %v1784 = vsel %vm1272, %v1016, %v1528
    %v1785 = vsel %vm1273, %v1017, %v1529
    %v1786 = vsel %vm1274, %v1018, %v1530
    %v1787 = vsel %vm1275, %v1019, %v1531
    %v1788 = vsel %vm1276, %v1020, %v1532
    %v1789 = vsel %vm1277, %v1021, %v1533
    %v1790 = vsel %vm1278, %v1022, %v1534
    %v1791 = vsel %vm1279, %v1023, %v1535
    %v1792 = vsel %vm1280, %v1024, %v1536
    %v1793 = vsel %vm1281, %v1025, %v1537
    %v1794 = vsel %vm1282, %v1026, %v1538
    %v1795 = vsel %vm1283, %v1027, %v1539
    %v1796 = vsel %vm1284, %v1028, %v1540
    %v1797 = vsel %vm1285, %v1029, %v1541
    %v1798 = vsel %vm1286, %v1030, %v1542
    %v1799 = vsel %vm1287, %v1031, %v1543
    %v1800 = vsel %vm1288, %v1032, %v1544
    %v1801 = vsel %vm1289, %v1033, %v1545
    %v1802 = vsel %vm1290, %v1034, %v1546
    %v1803 = vsel %vm1291, %v1035, %v1547
    %v1804 = vsel %vm1292, %v1036, %v1548
    %v1805 = vsel %vm1293, %v1037, %v1549
    %v1806 = vsel %vm1294, %v1038, %v1550
    %v1807 = vsel %vm1295, %v1039, %v1551
    %v1808 = vsel %vm1296, %v1040, %v1552
    %v1809 = vsel %vm1297, %v1041, %v1553
    %v1810 = vsel %vm1298, %v1042, %v1554
    %v1811 = vsel %vm1299, %v1043, %v1555
    %v1812 = vsel %vm1300, %v1044, %v1556
    %v1813 = vsel %vm1301, %v1045, %v1557
    %v1814 = vsel %vm1302, %v1046, %v1558
    %v1815 = vsel %vm1303, %v1047, %v1559
    %v1816 = vsel %vm1304, %v1048, %v1560
    %v1817 = vsel %vm1305, %v1049, %v1561
    %v1818 = vsel %vm1306, %v1050, %v1562
    %v1819 = vsel %vm1307, %v1051, %v1563
    %v1820 = vsel %vm1308, %v1052, %v1564
    %v1821 = vpack.c.bf16 %v1566, %v1565
    %v1822 = vpack.c.bf16 %v1568, %v1567
    %v1823 = vpack.c.bf16 %v1570, %v1569
    %v1824 = vpack.c.bf16 %v1572, %v1571
    %v1825 = vpack.c.bf16 %v1574, %v1573
    %v1826 = vpack.c.bf16 %v1576, %v1575
    %v1827 = vpack.c.bf16 %v1578, %v1577
    %v1828 = vpack.c.bf16 %v1580, %v1579
    %v1829 = vpack.c.bf16 %v1582, %v1581
    %v1830 = vpack.c.bf16 %v1584, %v1583
    %v1831 = vpack.c.bf16 %v1586, %v1585
    %v1832 = vpack.c.bf16 %v1588, %v1587
    %v1833 = vpack.c.bf16 %v1590, %v1589
    %v1834 = vpack.c.bf16 %v1592, %v1591
    %v1835 = vpack.c.bf16 %v1594, %v1593
    %v1836 = vpack.c.bf16 %v1596, %v1595
    %v1837 = vpack.c.bf16 %v1598, %v1597
    %v1838 = vpack.c.bf16 %v1600, %v1599
    %v1839 = vpack.c.bf16 %v1602, %v1601
    %v1840 = vpack.c.bf16 %v1604, %v1603
    %v1841 = vpack.c.bf16 %v1606, %v1605
    %v1842 = vpack.c.bf16 %v1608, %v1607
    %v1843 = vpack.c.bf16 %v1610, %v1609
    %v1844 = vpack.c.bf16 %v1612, %v1611
    %v1845 = vpack.c.bf16 %v1614, %v1613
    %v1846 = vpack.c.bf16 %v1616, %v1615
    %v1847 = vpack.c.bf16 %v1618, %v1617
    %v1848 = vpack.c.bf16 %v1620, %v1619
    %v1849 = vpack.c.bf16 %v1622, %v1621
    %v1850 = vpack.c.bf16 %v1624, %v1623
    %v1851 = vpack.c.bf16 %v1626, %v1625
    %v1852 = vpack.c.bf16 %v1628, %v1627
    %v1853 = vpack.c.bf16 %v1630, %v1629
    %v1854 = vpack.c.bf16 %v1632, %v1631
    %v1855 = vpack.c.bf16 %v1634, %v1633
    %v1856 = vpack.c.bf16 %v1636, %v1635
    %v1857 = vpack.c.bf16 %v1638, %v1637
    %v1858 = vpack.c.bf16 %v1640, %v1639
    %v1859 = vpack.c.bf16 %v1642, %v1641
    %v1860 = vpack.c.bf16 %v1644, %v1643
    %v1861 = vpack.c.bf16 %v1646, %v1645
    %v1862 = vpack.c.bf16 %v1648, %v1647
    %v1863 = vpack.c.bf16 %v1650, %v1649
    %v1864 = vpack.c.bf16 %v1652, %v1651
    %v1865 = vpack.c.bf16 %v1654, %v1653
    %v1866 = vpack.c.bf16 %v1656, %v1655
    %v1867 = vpack.c.bf16 %v1658, %v1657
    %v1868 = vpack.c.bf16 %v1660, %v1659
    %v1869 = vpack.c.bf16 %v1662, %v1661
    %v1870 = vpack.c.bf16 %v1664, %v1663
    %v1871 = vpack.c.bf16 %v1666, %v1665
    %v1872 = vpack.c.bf16 %v1668, %v1667
    %v1873 = vpack.c.bf16 %v1670, %v1669
    %v1874 = vpack.c.bf16 %v1672, %v1671
    %v1875 = vpack.c.bf16 %v1674, %v1673
    %v1876 = vpack.c.bf16 %v1676, %v1675
    %v1877 = vpack.c.bf16 %v1678, %v1677
    %v1878 = vpack.c.bf16 %v1680, %v1679
    %v1879 = vpack.c.bf16 %v1682, %v1681
    %v1880 = vpack.c.bf16 %v1684, %v1683
    %v1881 = vpack.c.bf16 %v1686, %v1685
    %v1882 = vpack.c.bf16 %v1688, %v1687
    %v1883 = vpack.c.bf16 %v1690, %v1689
    %v1884 = vpack.c.bf16 %v1692, %v1691
    %v1885 = vpack.c.bf16 %v1694, %v1693
    %v1886 = vpack.c.bf16 %v1696, %v1695
    %v1887 = vpack.c.bf16 %v1698, %v1697
    %v1888 = vpack.c.bf16 %v1700, %v1699
    %v1889 = vpack.c.bf16 %v1702, %v1701
    %v1890 = vpack.c.bf16 %v1704, %v1703
    %v1891 = vpack.c.bf16 %v1706, %v1705
    %v1892 = vpack.c.bf16 %v1708, %v1707
    %v1893 = vpack.c.bf16 %v1710, %v1709
    %v1894 = vpack.c.bf16 %v1712, %v1711
    %v1895 = vpack.c.bf16 %v1714, %v1713
    %v1896 = vpack.c.bf16 %v1716, %v1715
    %v1897 = vpack.c.bf16 %v1718, %v1717
    %v1898 = vpack.c.bf16 %v1720, %v1719
    %v1899 = vpack.c.bf16 %v1722, %v1721
    %v1900 = vpack.c.bf16 %v1724, %v1723
    %v1901 = vpack.c.bf16 %v1726, %v1725
    %v1902 = vpack.c.bf16 %v1728, %v1727
    %v1903 = vpack.c.bf16 %v1730, %v1729
    %v1904 = vpack.c.bf16 %v1732, %v1731
    %v1905 = vpack.c.bf16 %v1734, %v1733
    %v1906 = vpack.c.bf16 %v1736, %v1735
    %v1907 = vpack.c.bf16 %v1738, %v1737
    %v1908 = vpack.c.bf16 %v1740, %v1739
    %v1909 = vpack.c.bf16 %v1742, %v1741
    %v1910 = vpack.c.bf16 %v1744, %v1743
    %v1911 = vpack.c.bf16 %v1746, %v1745
    %v1912 = vpack.c.bf16 %v1748, %v1747
    %v1913 = vpack.c.bf16 %v1750, %v1749
    %v1914 = vpack.c.bf16 %v1752, %v1751
    %v1915 = vpack.c.bf16 %v1754, %v1753
    %v1916 = vpack.c.bf16 %v1756, %v1755
    %v1917 = vpack.c.bf16 %v1758, %v1757
    %v1918 = vpack.c.bf16 %v1760, %v1759
    %v1919 = vpack.c.bf16 %v1762, %v1761
    %v1920 = vpack.c.bf16 %v1764, %v1763
    %v1921 = vpack.c.bf16 %v1766, %v1765
    %v1922 = vpack.c.bf16 %v1768, %v1767
    %v1923 = vpack.c.bf16 %v1770, %v1769
    %v1924 = vpack.c.bf16 %v1772, %v1771
    %v1925 = vpack.c.bf16 %v1774, %v1773
    %v1926 = vpack.c.bf16 %v1776, %v1775
    %v1927 = vpack.c.bf16 %v1778, %v1777
    %v1928 = vpack.c.bf16 %v1780, %v1779
    %v1929 = vpack.c.bf16 %v1782, %v1781
    %v1930 = vpack.c.bf16 %v1784, %v1783
    %v1931 = vpack.c.bf16 %v1786, %v1785
    %v1932 = vpack.c.bf16 %v1788, %v1787
    %v1933 = vpack.c.bf16 %v1790, %v1789
    %v1934 = vpack.c.bf16 %v1792, %v1791
    %v1935 = vpack.c.bf16 %v1794, %v1793
    %v1936 = vpack.c.bf16 %v1796, %v1795
    %v1937 = vpack.c.bf16 %v1798, %v1797
    %v1938 = vpack.c.bf16 %v1800, %v1799
    %v1939 = vpack.c.bf16 %v1802, %v1801
    %v1940 = vpack.c.bf16 %v1804, %v1803
    %v1941 = vpack.c.bf16 %v1806, %v1805
    %v1942 = vpack.c.bf16 %v1808, %v1807
    %v1943 = vpack.c.bf16 %v1810, %v1809
    %v1944 = vpack.c.bf16 %v1812, %v1811
    %v1945 = vpack.c.bf16 %v1814, %v1813
    %v1946 = vpack.c.bf16 %v1816, %v1815
    %v1947 = vpack.c.bf16 %v1818, %v1817
    %v1948 = vpack.c.bf16 %v1820, %v1819
    %v2077 = vunpack.c.l.b16 %v1821
    %v2078 = vunpack.c.h.b16 %v1821
    %v2079 = vunpack.c.l.b16 %v1822
    %v2080 = vunpack.c.h.b16 %v1822
    %v2081 = vunpack.c.l.b16 %v1823
    %v2082 = vunpack.c.h.b16 %v1823
    %v2083 = vunpack.c.l.b16 %v1824
    %v2084 = vunpack.c.h.b16 %v1824
    %v2085 = vunpack.c.l.b16 %v1825
    %v2086 = vunpack.c.h.b16 %v1825
    %v2087 = vunpack.c.l.b16 %v1826
    %v2088 = vunpack.c.h.b16 %v1826
    %v2089 = vunpack.c.l.b16 %v1827
    %v2090 = vunpack.c.h.b16 %v1827
    %v2091 = vunpack.c.l.b16 %v1828
    %v2092 = vunpack.c.h.b16 %v1828
    %v2093 = vunpack.c.l.b16 %v1829
    %v2094 = vunpack.c.h.b16 %v1829
    %v2095 = vunpack.c.l.b16 %v1830
    %v2096 = vunpack.c.h.b16 %v1830
    %v2097 = vunpack.c.l.b16 %v1831
    %v2098 = vunpack.c.h.b16 %v1831
    %v2099 = vunpack.c.l.b16 %v1832
    %v2100 = vunpack.c.h.b16 %v1832
    %v2101 = vunpack.c.l.b16 %v1833
    %v2102 = vunpack.c.h.b16 %v1833
    %v2103 = vunpack.c.l.b16 %v1834
    %v2104 = vunpack.c.h.b16 %v1834
    %v2105 = vunpack.c.l.b16 %v1835
    %v2106 = vunpack.c.h.b16 %v1835
    %v2107 = vunpack.c.l.b16 %v1836
    %v2108 = vunpack.c.h.b16 %v1836
    %v2109 = vunpack.c.l.b16 %v1837
    %v2110 = vunpack.c.h.b16 %v1837
    %v2111 = vunpack.c.l.b16 %v1838
    %v2112 = vunpack.c.h.b16 %v1838
    %v2113 = vunpack.c.l.b16 %v1839
    %v2114 = vunpack.c.h.b16 %v1839
    %v2115 = vunpack.c.l.b16 %v1840
    %v2116 = vunpack.c.h.b16 %v1840
    %v2117 = vunpack.c.l.b16 %v1841
    %v2118 = vunpack.c.h.b16 %v1841
    %v2119 = vunpack.c.l.b16 %v1842
    %v2120 = vunpack.c.h.b16 %v1842
    %v2121 = vunpack.c.l.b16 %v1843
    %v2122 = vunpack.c.h.b16 %v1843
    %v2123 = vunpack.c.l.b16 %v1844
    %v2124 = vunpack.c.h.b16 %v1844
    %v2125 = vunpack.c.l.b16 %v1845
    %v2126 = vunpack.c.h.b16 %v1845
    %v2127 = vunpack.c.l.b16 %v1846
    %v2128 = vunpack.c.h.b16 %v1846
    %v2129 = vunpack.c.l.b16 %v1847
    %v2130 = vunpack.c.h.b16 %v1847
    %v2131 = vunpack.c.l.b16 %v1848
    %v2132 = vunpack.c.h.b16 %v1848
    %v2133 = vunpack.c.l.b16 %v1849
    %v2134 = vunpack.c.h.b16 %v1849
    %v2135 = vunpack.c.l.b16 %v1850
    %v2136 = vunpack.c.h.b16 %v1850
    %v2137 = vunpack.c.l.b16 %v1851
    %v2138 = vunpack.c.h.b16 %v1851
    %v2139 = vunpack.c.l.b16 %v1852
    %v2140 = vunpack.c.h.b16 %v1852
    %v2141 = vunpack.c.l.b16 %v1853
    %v2142 = vunpack.c.h.b16 %v1853
    %v2143 = vunpack.c.l.b16 %v1854
    %v2144 = vunpack.c.h.b16 %v1854
    %v2145 = vunpack.c.l.b16 %v1855
    %v2146 = vunpack.c.h.b16 %v1855
    %v2147 = vunpack.c.l.b16 %v1856
    %v2148 = vunpack.c.h.b16 %v1856
    %v2149 = vunpack.c.l.b16 %v1857
    %v2150 = vunpack.c.h.b16 %v1857
    %v2151 = vunpack.c.l.b16 %v1858
    %v2152 = vunpack.c.h.b16 %v1858
    %v2153 = vunpack.c.l.b16 %v1859
    %v2154 = vunpack.c.h.b16 %v1859
    %v2155 = vunpack.c.l.b16 %v1860
    %v2156 = vunpack.c.h.b16 %v1860
    %v2157 = vunpack.c.l.b16 %v1861
    %v2158 = vunpack.c.h.b16 %v1861
    %v2159 = vunpack.c.l.b16 %v1862
    %v2160 = vunpack.c.h.b16 %v1862
    %v2161 = vunpack.c.l.b16 %v1863
    %v2162 = vunpack.c.h.b16 %v1863
    %v2163 = vunpack.c.l.b16 %v1864
    %v2164 = vunpack.c.h.b16 %v1864
    %v2165 = vunpack.c.l.b16 %v1865
    %v2166 = vunpack.c.h.b16 %v1865
    %v2167 = vunpack.c.l.b16 %v1866
    %v2168 = vunpack.c.h.b16 %v1866
    %v2169 = vunpack.c.l.b16 %v1867
    %v2170 = vunpack.c.h.b16 %v1867
    %v2171 = vunpack.c.l.b16 %v1868
    %v2172 = vunpack.c.h.b16 %v1868
    %v2173 = vunpack.c.l.b16 %v1869
    %v2174 = vunpack.c.h.b16 %v1869
    %v2175 = vunpack.c.l.b16 %v1870
    %v2176 = vunpack.c.h.b16 %v1870
    %v2177 = vunpack.c.l.b16 %v1871
    %v2178 = vunpack.c.h.b16 %v1871
    %v2179 = vunpack.c.l.b16 %v1872
    %v2180 = vunpack.c.h.b16 %v1872
    %v2181 = vunpack.c.l.b16 %v1873
    %v2182 = vunpack.c.h.b16 %v1873
    %v2183 = vunpack.c.l.b16 %v1874
    %v2184 = vunpack.c.h.b16 %v1874
    %v2185 = vunpack.c.l.b16 %v1875
    %v2186 = vunpack.c.h.b16 %v1875
    %v2187 = vunpack.c.l.b16 %v1876
    %v2188 = vunpack.c.h.b16 %v1876
    %v2189 = vunpack.c.l.b16 %v1877
    %v2190 = vunpack.c.h.b16 %v1877
    %v2191 = vunpack.c.l.b16 %v1878
    %v2192 = vunpack.c.h.b16 %v1878
    %v2193 = vunpack.c.l.b16 %v1879
    %v2194 = vunpack.c.h.b16 %v1879
    %v2195 = vunpack.c.l.b16 %v1880
    %v2196 = vunpack.c.h.b16 %v1880
    %v2197 = vunpack.c.l.b16 %v1881
    %v2198 = vunpack.c.h.b16 %v1881
    %v2199 = vunpack.c.l.b16 %v1882
    %v2200 = vunpack.c.h.b16 %v1882
    %v2201 = vunpack.c.l.b16 %v1883
    %v2202 = vunpack.c.h.b16 %v1883
    %v2203 = vunpack.c.l.b16 %v1884
    %v2204 = vunpack.c.h.b16 %v1884
    %v2205 = vunpack.c.l.b16 %v1885
    %v2206 = vunpack.c.h.b16 %v1885
    %v2207 = vunpack.c.l.b16 %v1886
    %v2208 = vunpack.c.h.b16 %v1886
    %v2209 = vunpack.c.l.b16 %v1887
    %v2210 = vunpack.c.h.b16 %v1887
    %v2211 = vunpack.c.l.b16 %v1888
    %v2212 = vunpack.c.h.b16 %v1888
    %v2213 = vunpack.c.l.b16 %v1889
    %v2214 = vunpack.c.h.b16 %v1889
    %v2215 = vunpack.c.l.b16 %v1890
    %v2216 = vunpack.c.h.b16 %v1890
    %v2217 = vunpack.c.l.b16 %v1891
    %v2218 = vunpack.c.h.b16 %v1891
    %v2219 = vunpack.c.l.b16 %v1892
    %v2220 = vunpack.c.h.b16 %v1892
    %v2221 = vunpack.c.l.b16 %v1893
    %v2222 = vunpack.c.h.b16 %v1893
    %v2223 = vunpack.c.l.b16 %v1894
    %v2224 = vunpack.c.h.b16 %v1894
    %v2225 = vunpack.c.l.b16 %v1895
    %v2226 = vunpack.c.h.b16 %v1895
    %v2227 = vunpack.c.l.b16 %v1896
    %v2228 = vunpack.c.h.b16 %v1896
    %v2229 = vunpack.c.l.b16 %v1897
    %v2230 = vunpack.c.h.b16 %v1897
    %v2231 = vunpack.c.l.b16 %v1898
    %v2232 = vunpack.c.h.b16 %v1898
    %v2233 = vunpack.c.l.b16 %v1899
    %v2234 = vunpack.c.h.b16 %v1899
    %v2235 = vunpack.c.l.b16 %v1900
    %v2236 = vunpack.c.h.b16 %v1900
    %v2237 = vunpack.c.l.b16 %v1901
    %v2238 = vunpack.c.h.b16 %v1901
    %v2239 = vunpack.c.l.b16 %v1902
    %v2240 = vunpack.c.h.b16 %v1902
    %v2241 = vunpack.c.l.b16 %v1903
    %v2242 = vunpack.c.h.b16 %v1903
    %v2243 = vunpack.c.l.b16 %v1904
    %v2244 = vunpack.c.h.b16 %v1904
    %v2245 = vunpack.c.l.b16 %v1905
    %v2246 = vunpack.c.h.b16 %v1905
    %v2247 = vunpack.c.l.b16 %v1906
    %v2248 = vunpack.c.h.b16 %v1906
    %v2249 = vunpack.c.l.b16 %v1907
    %v2250 = vunpack.c.h.b16 %v1907
    %v2251 = vunpack.c.l.b16 %v1908
    %v2252 = vunpack.c.h.b16 %v1908
    %v2253 = vunpack.c.l.b16 %v1909
    %v2254 = vunpack.c.h.b16 %v1909
    %v2255 = vunpack.c.l.b16 %v1910
    %v2256 = vunpack.c.h.b16 %v1910
    %v2257 = vunpack.c.l.b16 %v1911
    %v2258 = vunpack.c.h.b16 %v1911
    %v2259 = vunpack.c.l.b16 %v1912
    %v2260 = vunpack.c.h.b16 %v1912
    %v2261 = vunpack.c.l.b16 %v1913
    %v2262 = vunpack.c.h.b16 %v1913
    %v2263 = vunpack.c.l.b16 %v1914
    %v2264 = vunpack.c.h.b16 %v1914
    %v2265 = vunpack.c.l.b16 %v1915
    %v2266 = vunpack.c.h.b16 %v1915
    %v2267 = vunpack.c.l.b16 %v1916
    %v2268 = vunpack.c.h.b16 %v1916
    %v2269 = vunpack.c.l.b16 %v1917
    %v2270 = vunpack.c.h.b16 %v1917
    %v2271 = vunpack.c.l.b16 %v1918
    %v2272 = vunpack.c.h.b16 %v1918
    %v2273 = vunpack.c.l.b16 %v1919
    %v2274 = vunpack.c.h.b16 %v1919
    %v2275 = vunpack.c.l.b16 %v1920
    %v2276 = vunpack.c.h.b16 %v1920
    %v2277 = vunpack.c.l.b16 %v1921
    %v2278 = vunpack.c.h.b16 %v1921
    %v2279 = vunpack.c.l.b16 %v1922
    %v2280 = vunpack.c.h.b16 %v1922
    %v2281 = vunpack.c.l.b16 %v1923
    %v2282 = vunpack.c.h.b16 %v1923
    %v2283 = vunpack.c.l.b16 %v1924
    %v2284 = vunpack.c.h.b16 %v1924
    %v2285 = vunpack.c.l.b16 %v1925
    %v2286 = vunpack.c.h.b16 %v1925
    %v2287 = vunpack.c.l.b16 %v1926
    %v2288 = vunpack.c.h.b16 %v1926
    %v2289 = vunpack.c.l.b16 %v1927
    %v2290 = vunpack.c.h.b16 %v1927
    %v2291 = vunpack.c.l.b16 %v1928
    %v2292 = vunpack.c.h.b16 %v1928
    %v2293 = vunpack.c.l.b16 %v1929
    %v2294 = vunpack.c.h.b16 %v1929
    %v2295 = vunpack.c.l.b16 %v1930
    %v2296 = vunpack.c.h.b16 %v1930
    %v2297 = vunpack.c.l.b16 %v1931
    %v2298 = vunpack.c.h.b16 %v1931
    %v2299 = vunpack.c.l.b16 %v1932
    %v2300 = vunpack.c.h.b16 %v1932
    %v2301 = vunpack.c.l.b16 %v1933
    %v2302 = vunpack.c.h.b16 %v1933
    %v2303 = vunpack.c.l.b16 %v1934
    %v2304 = vunpack.c.h.b16 %v1934
    %v2305 = vunpack.c.l.b16 %v1935
    %v2306 = vunpack.c.h.b16 %v1935
    %v2307 = vunpack.c.l.b16 %v1936
    %v2308 = vunpack.c.h.b16 %v1936
    %v2309 = vunpack.c.l.b16 %v1937
    %v2310 = vunpack.c.h.b16 %v1937
    %v2311 = vunpack.c.l.b16 %v1938
    %v2312 = vunpack.c.h.b16 %v1938
    %v2313 = vunpack.c.l.b16 %v1939
    %v2314 = vunpack.c.h.b16 %v1939
    %v2315 = vunpack.c.l.b16 %v1940
    %v2316 = vunpack.c.h.b16 %v1940
    %v2317 = vunpack.c.l.b16 %v1941
    %v2318 = vunpack.c.h.b16 %v1941
    %v2319 = vunpack.c.l.b16 %v1942
    %v2320 = vunpack.c.h.b16 %v1942
    %v2321 = vunpack.c.l.b16 %v1943
    %v2322 = vunpack.c.h.b16 %v1943
    %v2323 = vunpack.c.l.b16 %v1944
    %v2324 = vunpack.c.h.b16 %v1944
    %v2325 = vunpack.c.l.b16 %v1945
    %v2326 = vunpack.c.h.b16 %v1945
    %v2327 = vunpack.c.l.b16 %v1946
    %v2328 = vunpack.c.h.b16 %v1946
    %v2329 = vunpack.c.l.b16 %v1947
    %v2330 = vunpack.c.h.b16 %v1947
    %v2331 = vunpack.c.l.b16 %v1948
    %v2332 = vunpack.c.h.b16 %v1948
    %v2333 = vpack.c.b16 %v2077, %v2077
    %v2334 = vpack.c.b16 %v2078, %v2078
    %v2335 = vpack.c.b16 %v2079, %v2079
    %v2336 = vpack.c.b16 %v2080, %v2080
    %v2337 = vpack.c.b16 %v2081, %v2081
    %v2338 = vpack.c.b16 %v2082, %v2082
    %v2339 = vpack.c.b16 %v2083, %v2083
    %v2340 = vpack.c.b16 %v2084, %v2084
    %v2341 = vpack.c.b16 %v2085, %v2085
    %v2342 = vpack.c.b16 %v2086, %v2086
    %v2343 = vpack.c.b16 %v2087, %v2087
    %v2344 = vpack.c.b16 %v2088, %v2088
    %v2345 = vpack.c.b16 %v2089, %v2089
    %v2346 = vpack.c.b16 %v2090, %v2090
    %v2347 = vpack.c.b16 %v2091, %v2091
    %v2348 = vpack.c.b16 %v2092, %v2092
    %v2349 = vpack.c.b16 %v2093, %v2093
    %v2350 = vpack.c.b16 %v2094, %v2094
    %v2351 = vpack.c.b16 %v2095, %v2095
    %v2352 = vpack.c.b16 %v2096, %v2096
    %v2353 = vpack.c.b16 %v2097, %v2097
    %v2354 = vpack.c.b16 %v2098, %v2098
    %v2355 = vpack.c.b16 %v2099, %v2099
    %v2356 = vpack.c.b16 %v2100, %v2100
    %v2357 = vpack.c.b16 %v2101, %v2101
    %v2358 = vpack.c.b16 %v2102, %v2102
    %v2359 = vpack.c.b16 %v2103, %v2103
    %v2360 = vpack.c.b16 %v2104, %v2104
    %v2361 = vpack.c.b16 %v2105, %v2105
    %v2362 = vpack.c.b16 %v2106, %v2106
    %v2363 = vpack.c.b16 %v2107, %v2107
    %v2364 = vpack.c.b16 %v2108, %v2108
    %v2365 = vpack.c.b16 %v2109, %v2109
    %v2366 = vpack.c.b16 %v2110, %v2110
    %v2367 = vpack.c.b16 %v2111, %v2111
    %v2368 = vpack.c.b16 %v2112, %v2112
    %v2369 = vpack.c.b16 %v2113, %v2113
    %v2370 = vpack.c.b16 %v2114, %v2114
    %v2371 = vpack.c.b16 %v2115, %v2115
    %v2372 = vpack.c.b16 %v2116, %v2116
    %v2373 = vpack.c.b16 %v2117, %v2117
    %v2374 = vpack.c.b16 %v2118, %v2118
    %v2375 = vpack.c.b16 %v2119, %v2119
    %v2376 = vpack.c.b16 %v2120, %v2120
    %v2377 = vpack.c.b16 %v2121, %v2121
    %v2378 = vpack.c.b16 %v2122, %v2122
    %v2379 = vpack.c.b16 %v2123, %v2123
    %v2380 = vpack.c.b16 %v2124, %v2124
    %v2381 = vpack.c.b16 %v2125, %v2125
    %v2382 = vpack.c.b16 %v2126, %v2126
    %v2383 = vpack.c.b16 %v2127, %v2127
    %v2384 = vpack.c.b16 %v2128, %v2128
    %v2385 = vpack.c.b16 %v2129, %v2129
    %v2386 = vpack.c.b16 %v2130, %v2130
    %v2387 = vpack.c.b16 %v2131, %v2131
    %v2388 = vpack.c.b16 %v2132, %v2132
    %v2389 = vpack.c.b16 %v2133, %v2133
    %v2390 = vpack.c.b16 %v2134, %v2134
    %v2391 = vpack.c.b16 %v2135, %v2135
    %v2392 = vpack.c.b16 %v2136, %v2136
    %v2393 = vpack.c.b16 %v2137, %v2137
    %v2394 = vpack.c.b16 %v2138, %v2138
    %v2395 = vpack.c.b16 %v2139, %v2139
    %v2396 = vpack.c.b16 %v2140, %v2140
    %v2397 = vpack.c.b16 %v2141, %v2141
    %v2398 = vpack.c.b16 %v2142, %v2142
    %v2399 = vpack.c.b16 %v2143, %v2143
    %v2400 = vpack.c.b16 %v2144, %v2144
    %v2401 = vpack.c.b16 %v2145, %v2145
    %v2402 = vpack.c.b16 %v2146, %v2146
    %v2403 = vpack.c.b16 %v2147, %v2147
    %v2404 = vpack.c.b16 %v2148, %v2148
    %v2405 = vpack.c.b16 %v2149, %v2149
    %v2406 = vpack.c.b16 %v2150, %v2150
    %v2407 = vpack.c.b16 %v2151, %v2151
    %v2408 = vpack.c.b16 %v2152, %v2152
    %v2409 = vpack.c.b16 %v2153, %v2153
    %v2410 = vpack.c.b16 %v2154, %v2154
    %v2411 = vpack.c.b16 %v2155, %v2155
    %v2412 = vpack.c.b16 %v2156, %v2156
    %v2413 = vpack.c.b16 %v2157, %v2157
    %v2414 = vpack.c.b16 %v2158, %v2158
    %v2415 = vpack.c.b16 %v2159, %v2159
    %v2416 = vpack.c.b16 %v2160, %v2160
    %v2417 = vpack.c.b16 %v2161, %v2161
    %v2418 = vpack.c.b16 %v2162, %v2162
    %v2419 = vpack.c.b16 %v2163, %v2163
    %v2420 = vpack.c.b16 %v2164, %v2164
    %v2421 = vpack.c.b16 %v2165, %v2165
    %v2422 = vpack.c.b16 %v2166, %v2166
    %v2423 = vpack.c.b16 %v2167, %v2167
    %v2424 = vpack.c.b16 %v2168, %v2168
    %v2425 = vpack.c.b16 %v2169, %v2169
    %v2426 = vpack.c.b16 %v2170, %v2170
    %v2427 = vpack.c.b16 %v2171, %v2171
    %v2428 = vpack.c.b16 %v2172, %v2172
    %v2429 = vpack.c.b16 %v2173, %v2173
    %v2430 = vpack.c.b16 %v2174, %v2174
    %v2431 = vpack.c.b16 %v2175, %v2175
    %v2432 = vpack.c.b16 %v2176, %v2176
    %v2433 = vpack.c.b16 %v2177, %v2177
    %v2434 = vpack.c.b16 %v2178, %v2178
    %v2435 = vpack.c.b16 %v2179, %v2179
    %v2436 = vpack.c.b16 %v2180, %v2180
    %v2437 = vpack.c.b16 %v2181, %v2181
    %v2438 = vpack.c.b16 %v2182, %v2182
    %v2439 = vpack.c.b16 %v2183, %v2183
    %v2440 = vpack.c.b16 %v2184, %v2184
    %v2441 = vpack.c.b16 %v2185, %v2185
    %v2442 = vpack.c.b16 %v2186, %v2186
    %v2443 = vpack.c.b16 %v2187, %v2187
    %v2444 = vpack.c.b16 %v2188, %v2188
    %v2445 = vpack.c.b16 %v2189, %v2189
    %v2446 = vpack.c.b16 %v2190, %v2190
    %v2447 = vpack.c.b16 %v2191, %v2191
    %v2448 = vpack.c.b16 %v2192, %v2192
    %v2449 = vpack.c.b16 %v2193, %v2193
    %v2450 = vpack.c.b16 %v2194, %v2194
    %v2451 = vpack.c.b16 %v2195, %v2195
    %v2452 = vpack.c.b16 %v2196, %v2196
    %v2453 = vpack.c.b16 %v2197, %v2197
    %v2454 = vpack.c.b16 %v2198, %v2198
    %v2455 = vpack.c.b16 %v2199, %v2199
    %v2456 = vpack.c.b16 %v2200, %v2200
    %v2457 = vpack.c.b16 %v2201, %v2201
    %v2458 = vpack.c.b16 %v2202, %v2202
    %v2459 = vpack.c.b16 %v2203, %v2203
    %v2460 = vpack.c.b16 %v2204, %v2204
    %v2461 = vpack.c.b16 %v2205, %v2205
    %v2462 = vpack.c.b16 %v2206, %v2206
    %v2463 = vpack.c.b16 %v2207, %v2207
    %v2464 = vpack.c.b16 %v2208, %v2208
    %v2465 = vpack.c.b16 %v2209, %v2209
    %v2466 = vpack.c.b16 %v2210, %v2210
    %v2467 = vpack.c.b16 %v2211, %v2211
    %v2468 = vpack.c.b16 %v2212, %v2212
    %v2469 = vpack.c.b16 %v2213, %v2213
    %v2470 = vpack.c.b16 %v2214, %v2214
    %v2471 = vpack.c.b16 %v2215, %v2215
    %v2472 = vpack.c.b16 %v2216, %v2216
    %v2473 = vpack.c.b16 %v2217, %v2217
    %v2474 = vpack.c.b16 %v2218, %v2218
    %v2475 = vpack.c.b16 %v2219, %v2219
    %v2476 = vpack.c.b16 %v2220, %v2220
    %v2477 = vpack.c.b16 %v2221, %v2221
    %v2478 = vpack.c.b16 %v2222, %v2222
    %v2479 = vpack.c.b16 %v2223, %v2223
    %v2480 = vpack.c.b16 %v2224, %v2224
    %v2481 = vpack.c.b16 %v2225, %v2225
    %v2482 = vpack.c.b16 %v2226, %v2226
    %v2483 = vpack.c.b16 %v2227, %v2227
    %v2484 = vpack.c.b16 %v2228, %v2228
    %v2485 = vpack.c.b16 %v2229, %v2229
    %v2486 = vpack.c.b16 %v2230, %v2230
    %v2487 = vpack.c.b16 %v2231, %v2231
    %v2488 = vpack.c.b16 %v2232, %v2232
    %v2489 = vpack.c.b16 %v2233, %v2233
    %v2490 = vpack.c.b16 %v2234, %v2234
    %v2491 = vpack.c.b16 %v2235, %v2235
    %v2492 = vpack.c.b16 %v2236, %v2236
    %v2493 = vpack.c.b16 %v2237, %v2237
    %v2494 = vpack.c.b16 %v2238, %v2238
    %v2495 = vpack.c.b16 %v2239, %v2239
    %v2496 = vpack.c.b16 %v2240, %v2240
    %v2497 = vpack.c.b16 %v2241, %v2241
    %v2498 = vpack.c.b16 %v2242, %v2242
    %v2499 = vpack.c.b16 %v2243, %v2243
    %v2500 = vpack.c.b16 %v2244, %v2244
    %v2501 = vpack.c.b16 %v2245, %v2245
    %v2502 = vpack.c.b16 %v2246, %v2246
    %v2503 = vpack.c.b16 %v2247, %v2247
    %v2504 = vpack.c.b16 %v2248, %v2248
    %v2505 = vpack.c.b16 %v2249, %v2249
    %v2506 = vpack.c.b16 %v2250, %v2250
    %v2507 = vpack.c.b16 %v2251, %v2251
    %v2508 = vpack.c.b16 %v2252, %v2252
    %v2509 = vpack.c.b16 %v2253, %v2253
    %v2510 = vpack.c.b16 %v2254, %v2254
    %v2511 = vpack.c.b16 %v2255, %v2255
    %v2512 = vpack.c.b16 %v2256, %v2256
    %v2513 = vpack.c.b16 %v2257, %v2257
    %v2514 = vpack.c.b16 %v2258, %v2258
    %v2515 = vpack.c.b16 %v2259, %v2259
    %v2516 = vpack.c.b16 %v2260, %v2260
    %v2517 = vpack.c.b16 %v2261, %v2261
    %v2518 = vpack.c.b16 %v2262, %v2262
    %v2519 = vpack.c.b16 %v2263, %v2263
    %v2520 = vpack.c.b16 %v2264, %v2264
    %v2521 = vpack.c.b16 %v2265, %v2265
    %v2522 = vpack.c.b16 %v2266, %v2266
    %v2523 = vpack.c.b16 %v2267, %v2267
    %v2524 = vpack.c.b16 %v2268, %v2268
    %v2525 = vpack.c.b16 %v2269, %v2269
    %v2526 = vpack.c.b16 %v2270, %v2270
    %v2527 = vpack.c.b16 %v2271, %v2271
    %v2528 = vpack.c.b16 %v2272, %v2272
    %v2529 = vpack.c.b16 %v2273, %v2273
    %v2530 = vpack.c.b16 %v2274, %v2274
    %v2531 = vpack.c.b16 %v2275, %v2275
    %v2532 = vpack.c.b16 %v2276, %v2276
    %v2533 = vpack.c.b16 %v2277, %v2277
    %v2534 = vpack.c.b16 %v2278, %v2278
    %v2535 = vpack.c.b16 %v2279, %v2279
    %v2536 = vpack.c.b16 %v2280, %v2280
    %v2537 = vpack.c.b16 %v2281, %v2281
    %v2538 = vpack.c.b16 %v2282, %v2282
    %v2539 = vpack.c.b16 %v2283, %v2283
    %v2540 = vpack.c.b16 %v2284, %v2284
    %v2541 = vpack.c.b16 %v2285, %v2285
    %v2542 = vpack.c.b16 %v2286, %v2286
    %v2543 = vpack.c.b16 %v2287, %v2287
    %v2544 = vpack.c.b16 %v2288, %v2288
    %v2545 = vpack.c.b16 %v2289, %v2289
    %v2546 = vpack.c.b16 %v2290, %v2290
    %v2547 = vpack.c.b16 %v2291, %v2291
    %v2548 = vpack.c.b16 %v2292, %v2292
    %v2549 = vpack.c.b16 %v2293, %v2293
    %v2550 = vpack.c.b16 %v2294, %v2294
    %v2551 = vpack.c.b16 %v2295, %v2295
    %v2552 = vpack.c.b16 %v2296, %v2296
    %v2553 = vpack.c.b16 %v2297, %v2297
    %v2554 = vpack.c.b16 %v2298, %v2298
    %v2555 = vpack.c.b16 %v2299, %v2299
    %v2556 = vpack.c.b16 %v2300, %v2300
    %v2557 = vpack.c.b16 %v2301, %v2301
    %v2558 = vpack.c.b16 %v2302, %v2302
    %v2559 = vpack.c.b16 %v2303, %v2303
    %v2560 = vpack.c.b16 %v2304, %v2304
    %v2561 = vpack.c.b16 %v2305, %v2305
    %v2562 = vpack.c.b16 %v2306, %v2306
    %v2563 = vpack.c.b16 %v2307, %v2307
    %v2564 = vpack.c.b16 %v2308, %v2308
    %v2565 = vpack.c.b16 %v2309, %v2309
    %v2566 = vpack.c.b16 %v2310, %v2310
    %v2567 = vpack.c.b16 %v2311, %v2311
    %v2568 = vpack.c.b16 %v2312, %v2312
    %v2569 = vpack.c.b16 %v2313, %v2313
    %v2570 = vpack.c.b16 %v2314, %v2314
    %v2571 = vpack.c.b16 %v2315, %v2315
    %v2572 = vpack.c.b16 %v2316, %v2316
    %v2573 = vpack.c.b16 %v2317, %v2317
    %v2574 = vpack.c.b16 %v2318, %v2318
    %v2575 = vpack.c.b16 %v2319, %v2319
    %v2576 = vpack.c.b16 %v2320, %v2320
    %v2577 = vpack.c.b16 %v2321, %v2321
    %v2578 = vpack.c.b16 %v2322, %v2322
    %v2579 = vpack.c.b16 %v2323, %v2323
    %v2580 = vpack.c.b16 %v2324, %v2324
    %v2581 = vpack.c.b16 %v2325, %v2325
    %v2582 = vpack.c.b16 %v2326, %v2326
    %v2583 = vpack.c.b16 %v2327, %v2327
    %v2584 = vpack.c.b16 %v2328, %v2328
    %v2585 = vpack.c.b16 %v2329, %v2329
    %v2586 = vpack.c.b16 %v2330, %v2330
    %v2587 = vpack.c.b16 %v2331, %v2331
    %v2588 = vpack.c.b16 %v2332, %v2332
    %2845 = vst [vmem:[#allocation2] sm:$0xf] %v2333
    %2846 = vst [vmem:[#allocation2 + $0x4] sm:$0xf] %v2334
    %2847 = vst [vmem:[#allocation2 + $0x8] sm:$0xf] %v2335
    %2848 = vst [vmem:[#allocation2 + $0xc] sm:$0xf] %v2336
    %2849 = vst [vmem:[#allocation2 + $0x10] sm:$0xf] %v2337
    %2850 = vst [vmem:[#allocation2 + $0x14] sm:$0xf] %v2338
    %2851 = vst [vmem:[#allocation2 + $0x18] sm:$0xf] %v2339
    %2852 = vst [vmem:[#allocation2 + $0x1c] sm:$0xf] %v2340
    %2853 = vst [vmem:[#allocation2 + $0x20] sm:$0xf] %v2341
    %2854 = vst [vmem:[#allocation2 + $0x24] sm:$0xf] %v2342
    %2855 = vst [vmem:[#allocation2 + $0x28] sm:$0xf] %v2343
    %2856 = vst [vmem:[#allocation2 + $0x2c] sm:$0xf] %v2344
    %2857 = vst [vmem:[#allocation2 + $0x30] sm:$0xf] %v2345
    %2858 = vst [vmem:[#allocation2 + $0x34] sm:$0xf] %v2346
    %2859 = vst [vmem:[#allocation2 + $0x38] sm:$0xf] %v2347
    %2860 = vst [vmem:[#allocation2 + $0x3c] sm:$0xf] %v2348
    %2861 = vst [vmem:[#allocation2 + $0x40] sm:$0xf] %v2349
    %2862 = vst [vmem:[#allocation2 + $0x44] sm:$0xf] %v2350
    %2863 = vst [vmem:[#allocation2 + $0x48] sm:$0xf] %v2351
    %2864 = vst [vmem:[#allocation2 + $0x4c] sm:$0xf] %v2352
    %2865 = vst [vmem:[#allocation2 + $0x50] sm:$0xf] %v2353
    %2866 = vst [vmem:[#allocation2 + $0x54] sm:$0xf] %v2354
    %2867 = vst [vmem:[#allocation2 + $0x58] sm:$0xf] %v2355
    %2868 = vst [vmem:[#allocation2 + $0x5c] sm:$0xf] %v2356
    %2869 = vst [vmem:[#allocation2 + $0x60] sm:$0xf] %v2357
    %2870 = vst [vmem:[#allocation2 + $0x64] sm:$0xf] %v2358
    %2871 = vst [vmem:[#allocation2 + $0x68] sm:$0xf] %v2359
    %2872 = vst [vmem:[#allocation2 + $0x6c] sm:$0xf] %v2360
    %2873 = vst [vmem:[#allocation2 + $0x70] sm:$0xf] %v2361
    %2874 = vst [vmem:[#allocation2 + $0x74] sm:$0xf] %v2362
    %2875 = vst [vmem:[#allocation2 + $0x78] sm:$0xf] %v2363
    %2876 = vst [vmem:[#allocation2 + $0x7c] sm:$0xf] %v2364
    %2877 = vst [vmem:[#allocation2 + $0x80] sm:$0xf] %v2365
    %2878 = vst [vmem:[#allocation2 + $0x84] sm:$0xf] %v2366
    %2879 = vst [vmem:[#allocation2 + $0x88] sm:$0xf] %v2367
    %2880 = vst [vmem:[#allocation2 + $0x8c] sm:$0xf] %v2368
    %2881 = vst [vmem:[#allocation2 + $0x90] sm:$0xf] %v2369
    %2882 = vst [vmem:[#allocation2 + $0x94] sm:$0xf] %v2370
    %2883 = vst [vmem:[#allocation2 + $0x98] sm:$0xf] %v2371
    %2884 = vst [vmem:[#allocation2 + $0x9c] sm:$0xf] %v2372
    %2885 = vst [vmem:[#allocation2 + $0xa0] sm:$0xf] %v2373
    %2886 = vst [vmem:[#allocation2 + $0xa4] sm:$0xf] %v2374
    %2887 = vst [vmem:[#allocation2 + $0xa8] sm:$0xf] %v2375
    %2888 = vst [vmem:[#allocation2 + $0xac] sm:$0xf] %v2376
    %2889 = vst [vmem:[#allocation2 + $0xb0] sm:$0xf] %v2377
    %2890 = vst [vmem:[#allocation2 + $0xb4] sm:$0xf] %v2378
    %2891 = vst [vmem:[#allocation2 + $0xb8] sm:$0xf] %v2379
    %2892 = vst [vmem:[#allocation2 + $0xbc] sm:$0xf] %v2380
    %2893 = vst [vmem:[#allocation2 + $0xc0] sm:$0xf] %v2381
    %2894 = vst [vmem:[#allocation2 + $0xc4] sm:$0xf] %v2382
    %2895 = vst [vmem:[#allocation2 + $0xc8] sm:$0xf] %v2383
    %2896 = vst [vmem:[#allocation2 + $0xcc] sm:$0xf] %v2384
    %2897 = vst [vmem:[#allocation2 + $0xd0] sm:$0xf] %v2385
    %2898 = vst [vmem:[#allocation2 + $0xd4] sm:$0xf] %v2386
    %2899 = vst [vmem:[#allocation2 + $0xd8] sm:$0xf] %v2387
    %2900 = vst [vmem:[#allocation2 + $0xdc] sm:$0xf] %v2388
    %2901 = vst [vmem:[#allocation2 + $0xe0] sm:$0xf] %v2389
    %2902 = vst [vmem:[#allocation2 + $0xe4] sm:$0xf] %v2390
    %2903 = vst [vmem:[#allocation2 + $0xe8] sm:$0xf] %v2391
    %2904 = vst [vmem:[#allocation2 + $0xec] sm:$0xf] %v2392
    %2905 = vst [vmem:[#allocation2 + $0xf0] sm:$0xf] %v2393
    %2906 = vst [vmem:[#allocation2 + $0xf4] sm:$0xf] %v2394
    %2907 = vst [vmem:[#allocation2 + $0xf8] sm:$0xf] %v2395
    %2908 = vst [vmem:[#allocation2 + $0xfc] sm:$0xf] %v2396
    %2909 = vst [vmem:[#allocation2 + $0x100] sm:$0xf] %v2397
    %2910 = vst [vmem:[#allocation2 + $0x104] sm:$0xf] %v2398
    %2911 = vst [vmem:[#allocation2 + $0x108] sm:$0xf] %v2399
    %2912 = vst [vmem:[#allocation2 + $0x10c] sm:$0xf] %v2400
    %2913 = vst [vmem:[#allocation2 + $0x110] sm:$0xf] %v2401
    %2914 = vst [vmem:[#allocation2 + $0x114] sm:$0xf] %v2402
    %2915 = vst [vmem:[#allocation2 + $0x118] sm:$0xf] %v2403
    %2916 = vst [vmem:[#allocation2 + $0x11c] sm:$0xf] %v2404
    %2917 = vst [vmem:[#allocation2 + $0x120] sm:$0xf] %v2405
    %2918 = vst [vmem:[#allocation2 + $0x124] sm:$0xf] %v2406
    %2919 = vst [vmem:[#allocation2 + $0x128] sm:$0xf] %v2407
    %2920 = vst [vmem:[#allocation2 + $0x12c] sm:$0xf] %v2408
    %2921 = vst [vmem:[#allocation2 + $0x130] sm:$0xf] %v2409
    %2922 = vst [vmem:[#allocation2 + $0x134] sm:$0xf] %v2410
    %2923 = vst [vmem:[#allocation2 + $0x138] sm:$0xf] %v2411
    %2924 = vst [vmem:[#allocation2 + $0x13c] sm:$0xf] %v2412
    %2925 = vst [vmem:[#allocation2 + $0x140] sm:$0xf] %v2413
    %2926 = vst [vmem:[#allocation2 + $0x144] sm:$0xf] %v2414
    %2927 = vst [vmem:[#allocation2 + $0x148] sm:$0xf] %v2415
    %2928 = vst [vmem:[#allocation2 + $0x14c] sm:$0xf] %v2416
    %2929 = vst [vmem:[#allocation2 + $0x150] sm:$0xf] %v2417
    %2930 = vst [vmem:[#allocation2 + $0x154] sm:$0xf] %v2418
    %2931 = vst [vmem:[#allocation2 + $0x158] sm:$0xf] %v2419
    %2932 = vst [vmem:[#allocation2 + $0x15c] sm:$0xf] %v2420
    %2933 = vst [vmem:[#allocation2 + $0x160] sm:$0xf] %v2421
    %2934 = vst [vmem:[#allocation2 + $0x164] sm:$0xf] %v2422
    %2935 = vst [vmem:[#allocation2 + $0x168] sm:$0xf] %v2423
    %2936 = vst [vmem:[#allocation2 + $0x16c] sm:$0xf] %v2424
    %2937 = vst [vmem:[#allocation2 + $0x170] sm:$0xf] %v2425
    %2938 = vst [vmem:[#allocation2 + $0x174] sm:$0xf] %v2426
    %2939 = vst [vmem:[#allocation2 + $0x178] sm:$0xf] %v2427
    %2940 = vst [vmem:[#allocation2 + $0x17c] sm:$0xf] %v2428
    %2941 = vst [vmem:[#allocation2 + $0x180] sm:$0xf] %v2429
    %2942 = vst [vmem:[#allocation2 + $0x184] sm:$0xf] %v2430
    %2943 = vst [vmem:[#allocation2 + $0x188] sm:$0xf] %v2431
    %2944 = vst [vmem:[#allocation2 + $0x18c] sm:$0xf] %v2432
    %2945 = vst [vmem:[#allocation2 + $0x190] sm:$0xf] %v2433
    %2946 = vst [vmem:[#allocation2 + $0x194] sm:$0xf] %v2434
    %2947 = vst [vmem:[#allocation2 + $0x198] sm:$0xf] %v2435
    %2948 = vst [vmem:[#allocation2 + $0x19c] sm:$0xf] %v2436
    %2949 = vst [vmem:[#allocation2 + $0x1a0] sm:$0xf] %v2437
    %2950 = vst [vmem:[#allocation2 + $0x1a4] sm:$0xf] %v2438
    %2951 = vst [vmem:[#allocation2 + $0x1a8] sm:$0xf] %v2439
    %2952 = vst [vmem:[#allocation2 + $0x1ac] sm:$0xf] %v2440
    %2953 = vst [vmem:[#allocation2 + $0x1b0] sm:$0xf] %v2441
    %2954 = vst [vmem:[#allocation2 + $0x1b4] sm:$0xf] %v2442
    %2955 = vst [vmem:[#allocation2 + $0x1b8] sm:$0xf] %v2443
    %2956 = vst [vmem:[#allocation2 + $0x1bc] sm:$0xf] %v2444
    %2957 = vst [vmem:[#allocation2 + $0x1c0] sm:$0xf] %v2445
    %2958 = vst [vmem:[#allocation2 + $0x1c4] sm:$0xf] %v2446
    %2959 = vst [vmem:[#allocation2 + $0x1c8] sm:$0xf] %v2447
    %2960 = vst [vmem:[#allocation2 + $0x1cc] sm:$0xf] %v2448
    %2961 = vst [vmem:[#allocation2 + $0x1d0] sm:$0xf] %v2449
    %2962 = vst [vmem:[#allocation2 + $0x1d4] sm:$0xf] %v2450
    %2963 = vst [vmem:[#allocation2 + $0x1d8] sm:$0xf] %v2451
    %2964 = vst [vmem:[#allocation2 + $0x1dc] sm:$0xf] %v2452
    %2965 = vst [vmem:[#allocation2 + $0x1e0] sm:$0xf] %v2453
    %2966 = vst [vmem:[#allocation2 + $0x1e4] sm:$0xf] %v2454
    %2967 = vst [vmem:[#allocation2 + $0x1e8] sm:$0xf] %v2455
    %2968 = vst [vmem:[#allocation2 + $0x1ec] sm:$0xf] %v2456
    %2969 = vst [vmem:[#allocation2 + $0x1f0] sm:$0xf] %v2457
    %2970 = vst [vmem:[#allocation2 + $0x1f4] sm:$0xf] %v2458
    %2971 = vst [vmem:[#allocation2 + $0x1f8] sm:$0xf] %v2459
    %2972 = vst [vmem:[#allocation2 + $0x1fc] sm:$0xf] %v2460
    %2973 = vst [vmem:[#allocation2 + $0x200] sm:$0xf] %v2461
    %2974 = vst [vmem:[#allocation2 + $0x204] sm:$0xf] %v2462
    %2975 = vst [vmem:[#allocation2 + $0x208] sm:$0xf] %v2463
    %2976 = vst [vmem:[#allocation2 + $0x20c] sm:$0xf] %v2464
    %2977 = vst [vmem:[#allocation2 + $0x210] sm:$0xf] %v2465
    %2978 = vst [vmem:[#allocation2 + $0x214] sm:$0xf] %v2466
    %2979 = vst [vmem:[#allocation2 + $0x218] sm:$0xf] %v2467
    %2980 = vst [vmem:[#allocation2 + $0x21c] sm:$0xf] %v2468
    %2981 = vst [vmem:[#allocation2 + $0x220] sm:$0xf] %v2469
    %2982 = vst [vmem:[#allocation2 + $0x224] sm:$0xf] %v2470
    %2983 = vst [vmem:[#allocation2 + $0x228] sm:$0xf] %v2471
    %2984 = vst [vmem:[#allocation2 + $0x22c] sm:$0xf] %v2472
    %2985 = vst [vmem:[#allocation2 + $0x230] sm:$0xf] %v2473
    %2986 = vst [vmem:[#allocation2 + $0x234] sm:$0xf] %v2474
    %2987 = vst [vmem:[#allocation2 + $0x238] sm:$0xf] %v2475
    %2988 = vst [vmem:[#allocation2 + $0x23c] sm:$0xf] %v2476
    %2989 = vst [vmem:[#allocation2 + $0x240] sm:$0xf] %v2477
    %2990 = vst [vmem:[#allocation2 + $0x244] sm:$0xf] %v2478
    %2991 = vst [vmem:[#allocation2 + $0x248] sm:$0xf] %v2479
    %2992 = vst [vmem:[#allocation2 + $0x24c] sm:$0xf] %v2480
    %2993 = vst [vmem:[#allocation2 + $0x250] sm:$0xf] %v2481
    %2994 = vst [vmem:[#allocation2 + $0x254] sm:$0xf] %v2482
    %2995 = vst [vmem:[#allocation2 + $0x258] sm:$0xf] %v2483
    %2996 = vst [vmem:[#allocation2 + $0x25c] sm:$0xf] %v2484
    %2997 = vst [vmem:[#allocation2 + $0x260] sm:$0xf] %v2485
    %2998 = vst [vmem:[#allocation2 + $0x264] sm:$0xf] %v2486
    %2999 = vst [vmem:[#allocation2 + $0x268] sm:$0xf] %v2487
    %3000 = vst [vmem:[#allocation2 + $0x26c] sm:$0xf] %v2488
    %3001 = vst [vmem:[#allocation2 + $0x270] sm:$0xf] %v2489
    %3002 = vst [vmem:[#allocation2 + $0x274] sm:$0xf] %v2490
    %3003 = vst [vmem:[#allocation2 + $0x278] sm:$0xf] %v2491
    %3004 = vst [vmem:[#allocation2 + $0x27c] sm:$0xf] %v2492
    %3005 = vst [vmem:[#allocation2 + $0x280] sm:$0xf] %v2493
    %3006 = vst [vmem:[#allocation2 + $0x284] sm:$0xf] %v2494
    %3007 = vst [vmem:[#allocation2 + $0x288] sm:$0xf] %v2495
    %3008 = vst [vmem:[#allocation2 + $0x28c] sm:$0xf] %v2496
    %3009 = vst [vmem:[#allocation2 + $0x290] sm:$0xf] %v2497
    %3010 = vst [vmem:[#allocation2 + $0x294] sm:$0xf] %v2498
    %3011 = vst [vmem:[#allocation2 + $0x298] sm:$0xf] %v2499
    %3012 = vst [vmem:[#allocation2 + $0x29c] sm:$0xf] %v2500
    %3013 = vst [vmem:[#allocation2 + $0x2a0] sm:$0xf] %v2501
    %3014 = vst [vmem:[#allocation2 + $0x2a4] sm:$0xf] %v2502
    %3015 = vst [vmem:[#allocation2 + $0x2a8] sm:$0xf] %v2503
    %3016 = vst [vmem:[#allocation2 + $0x2ac] sm:$0xf] %v2504
    %3017 = vst [vmem:[#allocation2 + $0x2b0] sm:$0xf] %v2505
    %3018 = vst [vmem:[#allocation2 + $0x2b4] sm:$0xf] %v2506
    %3019 = vst [vmem:[#allocation2 + $0x2b8] sm:$0xf] %v2507
    %3020 = vst [vmem:[#allocation2 + $0x2bc] sm:$0xf] %v2508
    %3021 = vst [vmem:[#allocation2 + $0x2c0] sm:$0xf] %v2509
    %3022 = vst [vmem:[#allocation2 + $0x2c4] sm:$0xf] %v2510
    %3023 = vst [vmem:[#allocation2 + $0x2c8] sm:$0xf] %v2511
    %3024 = vst [vmem:[#allocation2 + $0x2cc] sm:$0xf] %v2512
    %3025 = vst [vmem:[#allocation2 + $0x2d0] sm:$0xf] %v2513
    %3026 = vst [vmem:[#allocation2 + $0x2d4] sm:$0xf] %v2514
    %3027 = vst [vmem:[#allocation2 + $0x2d8] sm:$0xf] %v2515
    %3028 = vst [vmem:[#allocation2 + $0x2dc] sm:$0xf] %v2516
    %3029 = vst [vmem:[#allocation2 + $0x2e0] sm:$0xf] %v2517
    %3030 = vst [vmem:[#allocation2 + $0x2e4] sm:$0xf] %v2518
    %3031 = vst [vmem:[#allocation2 + $0x2e8] sm:$0xf] %v2519
    %3032 = vst [vmem:[#allocation2 + $0x2ec] sm:$0xf] %v2520
    %3033 = vst [vmem:[#allocation2 + $0x2f0] sm:$0xf] %v2521
    %3034 = vst [vmem:[#allocation2 + $0x2f4] sm:$0xf] %v2522
    %3035 = vst [vmem:[#allocation2 + $0x2f8] sm:$0xf] %v2523
    %3036 = vst [vmem:[#allocation2 + $0x2fc] sm:$0xf] %v2524
    %3037 = vst [vmem:[#allocation2 + $0x300] sm:$0xf] %v2525
    %3038 = vst [vmem:[#allocation2 + $0x304] sm:$0xf] %v2526
    %3039 = vst [vmem:[#allocation2 + $0x308] sm:$0xf] %v2527
    %3040 = vst [vmem:[#allocation2 + $0x30c] sm:$0xf] %v2528
    %3041 = vst [vmem:[#allocation2 + $0x310] sm:$0xf] %v2529
    %3042 = vst [vmem:[#allocation2 + $0x314] sm:$0xf] %v2530
    %3043 = vst [vmem:[#allocation2 + $0x318] sm:$0xf] %v2531
    %3044 = vst [vmem:[#allocation2 + $0x31c] sm:$0xf] %v2532
    %3045 = vst [vmem:[#allocation2 + $0x320] sm:$0xf] %v2533
    %3046 = vst [vmem:[#allocation2 + $0x324] sm:$0xf] %v2534
    %3047 = vst [vmem:[#allocation2 + $0x328] sm:$0xf] %v2535
    %3048 = vst [vmem:[#allocation2 + $0x32c] sm:$0xf] %v2536
    %3049 = vst [vmem:[#allocation2 + $0x330] sm:$0xf] %v2537
    %3050 = vst [vmem:[#allocation2 + $0x334] sm:$0xf] %v2538
    %3051 = vst [vmem:[#allocation2 + $0x338] sm:$0xf] %v2539
    %3052 = vst [vmem:[#allocation2 + $0x33c] sm:$0xf] %v2540
    %3053 = vst [vmem:[#allocation2 + $0x340] sm:$0xf] %v2541
    %3054 = vst [vmem:[#allocation2 + $0x344] sm:$0xf] %v2542
    %3055 = vst [vmem:[#allocation2 + $0x348] sm:$0xf] %v2543
    %3056 = vst [vmem:[#allocation2 + $0x34c] sm:$0xf] %v2544
    %3057 = vst [vmem:[#allocation2 + $0x350] sm:$0xf] %v2545
    %3058 = vst [vmem:[#allocation2 + $0x354] sm:$0xf] %v2546
    %3059 = vst [vmem:[#allocation2 + $0x358] sm:$0xf] %v2547
    %3060 = vst [vmem:[#allocation2 + $0x35c] sm:$0xf] %v2548
    %3061 = vst [vmem:[#allocation2 + $0x360] sm:$0xf] %v2549
    %3062 = vst [vmem:[#allocation2 + $0x364] sm:$0xf] %v2550
    %3063 = vst [vmem:[#allocation2 + $0x368] sm:$0xf] %v2551
    %3064 = vst [vmem:[#allocation2 + $0x36c] sm:$0xf] %v2552
    %3065 = vst [vmem:[#allocation2 + $0x370] sm:$0xf] %v2553
    %3066 = vst [vmem:[#allocation2 + $0x374] sm:$0xf] %v2554
    %3067 = vst [vmem:[#allocation2 + $0x378] sm:$0xf] %v2555
    %3068 = vst [vmem:[#allocation2 + $0x37c] sm:$0xf] %v2556
    %3069 = vst [vmem:[#allocation2 + $0x380] sm:$0xf] %v2557
    %3070 = vst [vmem:[#allocation2 + $0x384] sm:$0xf] %v2558
    %3071 = vst [vmem:[#allocation2 + $0x388] sm:$0xf] %v2559
    %3072 = vst [vmem:[#allocation2 + $0x38c] sm:$0xf] %v2560
    %3073 = vst [vmem:[#allocation2 + $0x390] sm:$0xf] %v2561
    %3074 = vst [vmem:[#allocation2 + $0x394] sm:$0xf] %v2562
    %3075 = vst [vmem:[#allocation2 + $0x398] sm:$0xf] %v2563
    %3076 = vst [vmem:[#allocation2 + $0x39c] sm:$0xf] %v2564
    %3077 = vst [vmem:[#allocation2 + $0x3a0] sm:$0xf] %v2565
    %3078 = vst [vmem:[#allocation2 + $0x3a4] sm:$0xf] %v2566
    %3079 = vst [vmem:[#allocation2 + $0x3a8] sm:$0xf] %v2567
    %3080 = vst [vmem:[#allocation2 + $0x3ac] sm:$0xf] %v2568
    %3081 = vst [vmem:[#allocation2 + $0x3b0] sm:$0xf] %v2569
    %3082 = vst [vmem:[#allocation2 + $0x3b4] sm:$0xf] %v2570
    %3083 = vst [vmem:[#allocation2 + $0x3b8] sm:$0xf] %v2571
    %3084 = vst [vmem:[#allocation2 + $0x3bc] sm:$0xf] %v2572
    %3085 = vst [vmem:[#allocation2 + $0x3c0] sm:$0xf] %v2573
    %3086 = vst [vmem:[#allocation2 + $0x3c4] sm:$0xf] %v2574
    %3087 = vst [vmem:[#allocation2 + $0x3c8] sm:$0xf] %v2575
    %3088 = vst [vmem:[#allocation2 + $0x3cc] sm:$0xf] %v2576
    %3089 = vst [vmem:[#allocation2 + $0x3d0] sm:$0xf] %v2577
    %3090 = vst [vmem:[#allocation2 + $0x3d4] sm:$0xf] %v2578
    %3091 = vst [vmem:[#allocation2 + $0x3d8] sm:$0xf] %v2579
    %3092 = vst [vmem:[#allocation2 + $0x3dc] sm:$0xf] %v2580
    %3093 = vst [vmem:[#allocation2 + $0x3e0] sm:$0xf] %v2581
    %3094 = vst [vmem:[#allocation2 + $0x3e4] sm:$0xf] %v2582
    %3095 = vst [vmem:[#allocation2 + $0x3e8] sm:$0xf] %v2583
    %3096 = vst [vmem:[#allocation2 + $0x3ec] sm:$0xf] %v2584
    %3097 = vst [vmem:[#allocation2 + $0x3f0] sm:$0xf] %v2585
    %3098 = vst [vmem:[#allocation2 + $0x3f4] sm:$0xf] %v2586
    %3099 = vst [vmem:[#allocation2 + $0x3f8] sm:$0xf] %v2587
    %3100 = vst [vmem:[#allocation2 + $0x3fc] sm:$0xf] %v2588
    // Predicated region
    $region14: #{conv_bn_leaky.3} parent=1 // pred_check
      _
    $region15: #{conv_bn_leaky.3} parent=1 // pred_check_branch
      %3102 = sbr.rel (0) target = $region17
    $region16: #{conv_bn_leaky.3} parent=1 // pred_region
      %s3104 = ssub.s32 16384, 16384
      %3105 = vsyncadd [#allocation3], %s3104
      %s3106 = sshll.u32 [#allocation2], 4
      %s3107 = int_to_ptr.vmem [resolvable:$true] %s3106
      %3112 = dma.vmem_to_hbm [thread:$0]  %s3107, 16384, %s3, [#allocation3], 64, 64, 4
    $region17: #{conv_bn_leaky.3} parent=1 // pred_fallthru
      _
    // Predicated region
    $region18: #{conv_bn_leaky.3} parent=1 // pred_check
      _
    $region19: #{conv_bn_leaky.3} parent=1 // pred_check_branch
      %3114 = sbr.rel (0) target = $region21
    $region20: #{conv_bn_leaky.3} parent=1 // pred_region
      %3115 = dma.done [#allocation3], 16384
    $region21: #{conv_bn_leaky.3} parent=1 // pred_fallthru
      _
    %3116 = vsyncpa [#allocation3], 1

</llo_original>
